<compile_context>
chip_gen: v7x
topology: tpu7x:2x2x1
jax: 0.10.0
libtpu: 0.0.40
codegen_flags: <defaults>
</compile_context>

<pallas_src>
import math
from functools import partial

import numpy as np
import jax
import jax.numpy as jnp
from jax.experimental import pallas as pl
from jax.experimental.pallas import tpu as pltpu


# ----------------------------- host-side constant helpers -----------------------------
def _moving_avg_matrix(seq_len, kernel_size):
    """(L, L) matrix A so that A @ x == avg_pool1d(reflect_pad(x, pad), kernel_size, stride=1)."""
    pad = (kernel_size - 1) // 2
    assert pad < seq_len, "reflect padding requires pad < sequence length"
    A = np.zeros((seq_len, seq_len), dtype=np.float32)
    for t in range(seq_len):
        for w in range(-pad, pad + 1):
            s = t + w
            if s < 0:
                s = -s                                  # 'reflect' (edge not repeated), as in F.pad
            elif s > seq_len - 1:
                s = 2 * (seq_len - 1) - s
            A[t, s] += 1.0 / kernel_size
    return jnp.asarray(A)


# ----------------------------- in-kernel building blocks -----------------------------
def _layernorm(z, g, b, eps):
    mean = jnp.mean(z, axis=-1, keepdims=True)
    zc = z - mean
    var = jnp.mean(zc * zc, axis=-1, keepdims=True)
    return zc * jax.lax.rsqrt(var + eps) * g + b


def _group_allreduce(x, lane_local, hd, op):
    """All-reduce `op` within aligned groups of hd consecutive lanes; result broadcast to the group.

    Uses a log2(hd) recursive-doubling butterfly of XLU lane rolls when hd is a power of two
    (2*log2(hd) rolls), otherwise a linear gather of the other hd-1 lanes.
    """
    if hd == 1:
        return x
    D = x.shape[-1]
    if hd & (hd - 1) == 0:                              # power-of-two butterfly
        y = x
        s = 1
        while s < hd:
            up = pltpu.roll(y, D - s, 1)                # lane j sees y[..., (j + s) % D]
            dn = pltpu.roll(y, s, 1)                    # lane j sees y[..., (j - s) % D]
            y = op(y, jnp.where((lane_local & s) == 0, up, dn))
            s *= 2
        return y
    acc = x                                             # general hd: gather originals from the group
    for sft in range(1, hd):
        from_hi = pltpu.roll(x, D - sft, 1)
        from_lo = pltpu.roll(x, sft, 1)
        acc = jnp.where(lane_local < hd - sft, op(acc, from_hi), acc)
        acc = jnp.where(lane_local >= sft, op(acc, from_lo), acc)
    return acc


def _auto_correlation(q, k, v, lane_local, *, head_dim, top_k):
    """AutoCorrelation on one (L, D) tile with all heads packed along the lane axis.

    Per head h, channel c (global lane g = h*hd + c), matching the reference module:
      corr[t, g] = sum_s q[s, g] * k[(s - t) % L, g]        (== irfft(rfft(q) * conj(rfft(k))))
      (w, delay) = topk(corr, top_k) over the hd channels of head h  (torch.topk dim=-1 semantics)
      out[t, lanes of h] = sum_j softmax(w)[t, j] * v[(t - delay_j) % L, lanes of h]
    """
    L, D = q.shape
    hd = head_dim
    q = q.astype(jnp.float32)
    k = k.astype(jnp.float32)
    v = v.astype(jnp.float32)

    # --- circular cross-correlation, reformulated to avoid sublane reductions & row scatters:
    #     corr[t, g] = sum_u k[u, g] * q[(t + u) % L, g]
    #     -> L independent sublane rolls of q (all derived from the loop index) + row-broadcast FMAs.
    corr = k[0:1, :] * q
    for u in range(1, L):
        q_shift = pltpu.roll(q, L - u, 0)               # q_shift[t] == q[(t + u) % L]
        corr = corr + k[u:u + 1, :] * q_shift

    # --- per-head top-k over channels (contiguous groups of hd lanes) via butterfly group-max ---
    cur = corr
    gmax = thresh = None
    for i in range(top_k):                              # top_k = int(log L): tiny static unroll
        thresh = _group_allreduce(cur, lane_local, hd, jnp.maximum)
        if i == 0:
            gmax = thresh
        if i < top_k - 1:
            cur = jnp.where(cur >= thresh, -jnp.inf, cur)
    # NOTE: ties at the k-th value may select >top_k entries (measure-zero for float inputs);
    # torch.topk would break ties by index.
    mask = corr >= thresh

    # --- softmax over the selected correlations (per head), reciprocal on the EUP ---
    e = jnp.where(mask, jnp.exp(corr - gmax), 0.0)
    denom = _group_allreduce(e, lane_local, hd, jnp.add)
    w = e * pl.reciprocal(denom, approx=True)           # zero off the top-k

    # --- time-delay aggregation: out[t] += w[t, h*hd + d] * v[(t - d) % L]  (delay d = channel idx) ---
    out = jnp.zeros((L, D), jnp.float32)
    for d in range(hd):
        # per-head weight of delay d, broadcast to all lanes of the head
        wd = _group_allreduce(jnp.where(lane_local == d, w, 0.0), lane_local, hd, jnp.add)
        v_shift = v if d == 0 else pltpu.roll(v, d, 0)  # v_shift[t] == v[(t - d) % L]
        out = out + wd * v_shift
    return out


# ----------------------------- fused decoder-layer kernel -----------------------------
def _decoder_layer_kernel(x_ref, kv_ref, A_ref, w1_ref, fb1_ref, w2_ref, fb2_ref, ln_ref, o_ref,
                          *, head_dim, top_k, eps):
    L, D = x_ref.shape[1], x_ref.shape[2]
    lane_local = jax.lax.broadcasted_iota(jnp.int32, (1, D), 1) % head_dim   # channel-within-head

    ln = ln_ref[...].astype(jnp.float32)                                      # (8, D) stacked norms
    g1, b1 = ln[0:1, :], ln[1:2, :]
    g2, b2 = ln[2:3, :], ln[3:4, :]
    g3, b3 = ln[4:5, :], ln[5:6, :]
    g4, b4 = ln[6:7, :], ln[7:8, :]

    x = x_ref[0].astype(jnp.float32)                                          # (L, D)
    A = A_ref[...]                                                            # (L, L) moving-average map

    # 1) series decomposition + self-AutoCorrelation + norm1
    trend = jnp.dot(A, x, preferred_element_type=jnp.float32)
    seasonal = x - trend
    attn = _auto_correlation(seasonal, seasonal, seasonal, lane_local,
                             head_dim=head_dim, top_k=top_k)
    x1 = _layernorm(seasonal + attn, g1, b1, eps)

    # 2) cross-AutoCorrelation + norm2
    kv = kv_ref[0].astype(jnp.float32)
    attn = _auto_correlation(x1, kv, kv, lane_local, head_dim=head_dim, top_k=top_k)
    x2 = _layernorm(x1 + attn, g2, b2, eps)

    # 3) FFN (fc1 -> ReLU -> fc2) + residual + norm3
    h = jnp.dot(x2, w1_ref[...], preferred_element_type=jnp.float32) + fb1_ref[...]
    h = jnp.maximum(h, 0.0)
    y = jnp.dot(h, w2_ref[...], preferred_element_type=jnp.float32) + fb2_ref[...]
    x3 = _layernorm(x2 + y, g3, b3, eps)

    # 4) residual_trend = moving_mean(trend + x3); out = norm4(x3 + residual_trend)
    residual_trend = jnp.dot(A, trend + x3, preferred_element_type=jnp.float32)
    o_ref[0] = _layernorm(x3 + residual_trend, g4, b4, eps).astype(o_ref.dtype)


# ----------------------------- wrapper -----------------------------
def autoformer_decoder_layer(x, cross, params, *, n_heads, moving_avg, factor=1):
    B, L, D = x.shape
    S = cross.shape[1]
    assert D % n_heads == 0
    hd = D // n_heads
    top_k = min(hd, max(1, int(factor * math.log(L))))

    A = _moving_avg_matrix(L, moving_avg)               # reflect-pad moving average as one matmul

    # cross keys/values: pad with zeros / truncate along time to length L (as in the reference)
    if L > S:
        kv = jnp.concatenate([cross, jnp.zeros((B, L - S, D), cross.dtype)], axis=1)
    else:
        kv = cross[:, :L, :]

    # stack the 4 LayerNorm (gamma, beta) pairs into one resident (8, D) tile
    ln = jnp.concatenate([params["g1"], params["beta1"], params["g2"], params["beta2"],
                          params["g3"], params["beta3"], params["g4"], params["beta4"]], axis=0)

    Fd = params["w1"].shape[1]
    xspec = pl.BlockSpec((1, L, D), lambda b: (b, 0, 0))
    const = lambda s: pl.BlockSpec(s, lambda b: (0, 0))

    return pl.pallas_call(
        partial(_decoder_layer_kernel, head_dim=hd, top_k=top_k, eps=1e-5),
        grid=(B,),
        in_specs=[xspec, xspec,
                  const((L, L)),
                  const((D, Fd)), const((1, Fd)),
                  const((Fd, D)), const((1, D)),
                  const((8, D))],
        out_specs=xspec,
        out_shape=jax.ShapeDtypeStruct((B, L, D), x.dtype),
        compiler_params=pltpu.CompilerParams(dimension_semantics=("parallel",)),
    )(x, kv, A, params["w1"], params["b1"], params["w2"], params["b2"], ln)


if __name__ == "__main__":
    d_model, n_heads, moving_avg = 32, 8, 5
    d_ff = 4 * d_model
    B, L, S = 2, 16, 12                                 # decoder length L, encoder length S

    key = jax.random.PRNGKey(0)
    kx, kc, kw1, kb1, kw2, kb2 = jax.random.split(key, 6)
    x = jax.random.normal(kx, (B, L, d_model), dtype=jnp.float32)
    cross = jax.random.normal(kc, (B, S, d_model), dtype=jnp.float32)

    params = {
        # Linear layers: deterministic random init (PyTorch weight is (out, in); stored transposed)
        "w1": jax.random.normal(kw1, (d_model, d_ff), dtype=jnp.float32) * 0.05,
        "b1": jax.random.normal(kb1, (1, d_ff), dtype=jnp.float32) * 0.05,
        "w2": jax.random.normal(kw2, (d_ff, d_model), dtype=jnp.float32) * 0.05,
        "b2": jax.random.normal(kb2, (1, d_model), dtype=jnp.float32) * 0.05,
        # LayerNorms: PyTorch default init (weight=1, bias=0)
        "g1": jnp.ones((1, d_model), jnp.float32), "beta1": jnp.zeros((1, d_model), jnp.float32),
        "g2": jnp.ones((1, d_model), jnp.float32), "beta2": jnp.zeros((1, d_model), jnp.float32),
        "g3": jnp.ones((1, d_model), jnp.float32), "beta3": jnp.zeros((1, d_model), jnp.float32),
        "g4": jnp.ones((1, d_model), jnp.float32), "beta4": jnp.zeros((1, d_model), jnp.float32),
    }

    out = autoformer_decoder_layer(x, cross, params, n_heads=n_heads, moving_avg=moving_avg)
    out = jax.block_until_ready(out)
    assert out.shape == (B, L, d_model), out.shape
    assert bool(jnp.all(jnp.isfinite(out)))
    print("KERNEL_OK")
</pallas_src>

<mosaic_0001>
module attributes {stable_mosaic.version = 11 : i64} {
  func.func @_decoder_layer_kernel(%arg0: i32, %arg1: memref<1x16x32xf32, #tpu.memory_space<vmem>>, %arg2: memref<1x16x32xf32, #tpu.memory_space<vmem>>, %arg3: memref<16x16xf32, #tpu.memory_space<vmem>>, %arg4: memref<32x128xf32, #tpu.memory_space<vmem>>, %arg5: memref<1x128xf32, #tpu.memory_space<vmem>>, %arg6: memref<128x32xf32, #tpu.memory_space<vmem>>, %arg7: memref<1x32xf32, #tpu.memory_space<vmem>>, %arg8: memref<8x32xf32, #tpu.memory_space<vmem>>, %arg9: memref<1x16x32xf32, #tpu.memory_space<vmem>>) attributes {dimension_semantics = [#tpu.dimension_semantics<parallel>], iteration_bounds = array<i64: 2>, scalar_prefetch = 0 : i64, scratch_operands = 0 : i64, tpu.core_type = #tpu.core_type<tc>, window_params = [{transform_indices = @transform_0, window_bounds = array<i64: 1, 16, 32>}, {transform_indices = @transform_1, window_bounds = array<i64: 1, 16, 32>}, {pipeline_mode = #tpu.pipeline_mode<synchronous>, transform_indices = @transform_2, window_bounds = array<i64: 16, 16>}, {pipeline_mode = #tpu.pipeline_mode<synchronous>, transform_indices = @transform_3, window_bounds = array<i64: 32, 128>}, {pipeline_mode = #tpu.pipeline_mode<synchronous>, transform_indices = @transform_4, window_bounds = array<i64: 1, 128>}, {pipeline_mode = #tpu.pipeline_mode<synchronous>, transform_indices = @transform_5, window_bounds = array<i64: 128, 32>}, {pipeline_mode = #tpu.pipeline_mode<synchronous>, transform_indices = @transform_6, window_bounds = array<i64: 1, 32>}, {pipeline_mode = #tpu.pipeline_mode<synchronous>, transform_indices = @transform_7, window_bounds = array<i64: 8, 32>}, {transform_indices = @transform_8, window_bounds = array<i64: 1, 16, 32>}]} {
    %0 = tpu.iota {dimensions = array<i32: 1>} : vector<1x32xi32>
    %c4_i32 = arith.constant 4 : i32
    %c0_i32 = arith.constant 0 : i32
    %1 = arith.cmpi eq, %c4_i32, %c0_i32 : i32
    %c1_i32 = arith.constant 1 : i32
    %2 = arith.select %1, %c1_i32, %c4_i32 : i32
    %3 = vector.broadcast %2 : i32 to vector<1x32xi32>
    %4 = arith.remsi %0, %3 : vector<1x32xi32>
    %c0_i32_0 = arith.constant 0 : i32
    %5 = vector.broadcast %c0_i32_0 : i32 to vector<1x32xi32>
    %6 = arith.cmpi ne, %4, %5 : vector<1x32xi32>
    %c0_i32_1 = arith.constant 0 : i32
    %7 = vector.broadcast %c0_i32_1 : i32 to vector<1x32xi32>
    %8 = arith.cmpi slt, %4, %7 : vector<1x32xi32>
    %c0_i32_2 = arith.constant 0 : i32
    %9 = arith.cmpi slt, %2, %c0_i32_2 : i32
    %10 = vector.broadcast %9 : i1 to vector<1x32xi1>
    %11 = vector.broadcast %10 : vector<1x32xi1> to vector<1x32xi1>
    %12 = arith.xori %8, %11 : vector<1x32xi1>
    %13 = arith.andi %12, %6 : vector<1x32xi1>
    %14 = vector.broadcast %2 : i32 to vector<1x32xi32>
    %15 = arith.addi %4, %14 : vector<1x32xi32>
    %16 = arith.select %13, %15, %4 : vector<1x32xi1>, vector<1x32xi32>
    %c0 = arith.constant 0 : index
    %c0_3 = arith.constant 0 : index
    %17 = vector.load %arg8[%c0, %c0_3] : memref<8x32xf32, #tpu.memory_space<vmem>>, vector<8x32xf32>
    %18 = vector.extract_strided_slice %17 {offsets = [0, 0], sizes = [1, 32], strides = [1, 1]} : vector<8x32xf32> to vector<1x32xf32>
    %19 = vector.extract_strided_slice %17 {offsets = [1, 0], sizes = [1, 32], strides = [1, 1]} : vector<8x32xf32> to vector<1x32xf32>
    %20 = vector.extract_strided_slice %17 {offsets = [2, 0], sizes = [1, 32], strides = [1, 1]} : vector<8x32xf32> to vector<1x32xf32>
    %21 = vector.extract_strided_slice %17 {offsets = [3, 0], sizes = [1, 32], strides = [1, 1]} : vector<8x32xf32> to vector<1x32xf32>
    %22 = vector.extract_strided_slice %17 {offsets = [4, 0], sizes = [1, 32], strides = [1, 1]} : vector<8x32xf32> to vector<1x32xf32>
    %23 = vector.extract_strided_slice %17 {offsets = [5, 0], sizes = [1, 32], strides = [1, 1]} : vector<8x32xf32> to vector<1x32xf32>
    %24 = vector.extract_strided_slice %17 {offsets = [6, 0], sizes = [1, 32], strides = [1, 1]} : vector<8x32xf32> to vector<1x32xf32>
    %25 = vector.extract_strided_slice %17 {offsets = [7, 0], sizes = [1, 32], strides = [1, 1]} : vector<8x32xf32> to vector<1x32xf32>
    %c0_4 = arith.constant 0 : index
    %c0_5 = arith.constant 0 : index
    %c0_6 = arith.constant 0 : index
    %26 = vector.load %arg1[%c0_4, %c0_5, %c0_6] : memref<1x16x32xf32, #tpu.memory_space<vmem>>, vector<1x16x32xf32>
    %27 = vector.shape_cast %26 : vector<1x16x32xf32> to vector<16x32xf32>
    %c0_7 = arith.constant 0 : index
    %c0_8 = arith.constant 0 : index
    %28 = vector.load %arg3[%c0_7, %c0_8] : memref<16x16xf32, #tpu.memory_space<vmem>>, vector<16x16xf32>
    %cst = arith.constant dense<0.000000e+00> : vector<16x32xf32>
    %29 = tpu.matmul %28, %27, %cst {dimension_numbers = #tpu.dot_dimension_numbers<[1], [0], [0], [1], [0, 0, 1, 1], [], []>} : vector<16x16xf32>, vector<16x32xf32>, vector<16x32xf32> -> vector<16x32xf32>
    %30 = arith.subf %27, %29 : vector<16x32xf32>
    %31 = vector.extract_strided_slice %30 {offsets = [0, 0], sizes = [1, 32], strides = [1, 1]} : vector<16x32xf32> to vector<1x32xf32>
    %32 = vector.broadcast %31 : vector<1x32xf32> to vector<16x32xf32>
    %33 = arith.mulf %32, %30 : vector<16x32xf32>
    %c15_i32 = arith.constant 15 : i32
    %34 = tpu.dynamic_rotate %30 by %c15_i32 dim 0 : vector<16x32xf32>, i32 -> vector<16x32xf32>
    %35 = vector.extract_strided_slice %30 {offsets = [1, 0], sizes = [1, 32], strides = [1, 1]} : vector<16x32xf32> to vector<1x32xf32>
    %36 = vector.broadcast %35 : vector<1x32xf32> to vector<16x32xf32>
    %37 = arith.mulf %36, %34 : vector<16x32xf32>
    %38 = arith.addf %33, %37 : vector<16x32xf32>
    %c14_i32 = arith.constant 14 : i32
    %39 = tpu.dynamic_rotate %30 by %c14_i32 dim 0 : vector<16x32xf32>, i32 -> vector<16x32xf32>
    %40 = vector.extract_strided_slice %30 {offsets = [2, 0], sizes = [1, 32], strides = [1, 1]} : vector<16x32xf32> to vector<1x32xf32>
    %41 = vector.broadcast %40 : vector<1x32xf32> to vector<16x32xf32>
    %42 = arith.mulf %41, %39 : vector<16x32xf32>
    %43 = arith.addf %38, %42 : vector<16x32xf32>
    %c13_i32 = arith.constant 13 : i32
    %44 = tpu.dynamic_rotate %30 by %c13_i32 dim 0 : vector<16x32xf32>, i32 -> vector<16x32xf32>
    %45 = vector.extract_strided_slice %30 {offsets = [3, 0], sizes = [1, 32], strides = [1, 1]} : vector<16x32xf32> to vector<1x32xf32>
    %46 = vector.broadcast %45 : vector<1x32xf32> to vector<16x32xf32>
    %47 = arith.mulf %46, %44 : vector<16x32xf32>
    %48 = arith.addf %43, %47 : vector<16x32xf32>
    %c12_i32 = arith.constant 12 : i32
    %49 = tpu.dynamic_rotate %30 by %c12_i32 dim 0 : vector<16x32xf32>, i32 -> vector<16x32xf32>
    %50 = vector.extract_strided_slice %30 {offsets = [4, 0], sizes = [1, 32], strides = [1, 1]} : vector<16x32xf32> to vector<1x32xf32>
    %51 = vector.broadcast %50 : vector<1x32xf32> to vector<16x32xf32>
    %52 = arith.mulf %51, %49 : vector<16x32xf32>
    %53 = arith.addf %48, %52 : vector<16x32xf32>
    %c11_i32 = arith.constant 11 : i32
    %54 = tpu.dynamic_rotate %30 by %c11_i32 dim 0 : vector<16x32xf32>, i32 -> vector<16x32xf32>
    %55 = vector.extract_strided_slice %30 {offsets = [5, 0], sizes = [1, 32], strides = [1, 1]} : vector<16x32xf32> to vector<1x32xf32>
    %56 = vector.broadcast %55 : vector<1x32xf32> to vector<16x32xf32>
    %57 = arith.mulf %56, %54 : vector<16x32xf32>
    %58 = arith.addf %53, %57 : vector<16x32xf32>
    %c10_i32 = arith.constant 10 : i32
    %59 = tpu.dynamic_rotate %30 by %c10_i32 dim 0 : vector<16x32xf32>, i32 -> vector<16x32xf32>
    %60 = vector.extract_strided_slice %30 {offsets = [6, 0], sizes = [1, 32], strides = [1, 1]} : vector<16x32xf32> to vector<1x32xf32>
    %61 = vector.broadcast %60 : vector<1x32xf32> to vector<16x32xf32>
    %62 = arith.mulf %61, %59 : vector<16x32xf32>
    %63 = arith.addf %58, %62 : vector<16x32xf32>
    %c9_i32 = arith.constant 9 : i32
    %64 = tpu.dynamic_rotate %30 by %c9_i32 dim 0 : vector<16x32xf32>, i32 -> vector<16x32xf32>
    %65 = vector.extract_strided_slice %30 {offsets = [7, 0], sizes = [1, 32], strides = [1, 1]} : vector<16x32xf32> to vector<1x32xf32>
    %66 = vector.broadcast %65 : vector<1x32xf32> to vector<16x32xf32>
    %67 = arith.mulf %66, %64 : vector<16x32xf32>
    %68 = arith.addf %63, %67 : vector<16x32xf32>
    %c8_i32 = arith.constant 8 : i32
    %69 = tpu.dynamic_rotate %30 by %c8_i32 dim 0 : vector<16x32xf32>, i32 -> vector<16x32xf32>
    %70 = vector.extract_strided_slice %30 {offsets = [8, 0], sizes = [1, 32], strides = [1, 1]} : vector<16x32xf32> to vector<1x32xf32>
    %71 = vector.broadcast %70 : vector<1x32xf32> to vector<16x32xf32>
    %72 = arith.mulf %71, %69 : vector<16x32xf32>
    %73 = arith.addf %68, %72 : vector<16x32xf32>
    %c7_i32 = arith.constant 7 : i32
    %74 = tpu.dynamic_rotate %30 by %c7_i32 dim 0 : vector<16x32xf32>, i32 -> vector<16x32xf32>
    %75 = vector.extract_strided_slice %30 {offsets = [9, 0], sizes = [1, 32], strides = [1, 1]} : vector<16x32xf32> to vector<1x32xf32>
    %76 = vector.broadcast %75 : vector<1x32xf32> to vector<16x32xf32>
    %77 = arith.mulf %76, %74 : vector<16x32xf32>
    %78 = arith.addf %73, %77 : vector<16x32xf32>
    %c6_i32 = arith.constant 6 : i32
    %79 = tpu.dynamic_rotate %30 by %c6_i32 dim 0 : vector<16x32xf32>, i32 -> vector<16x32xf32>
    %80 = vector.extract_strided_slice %30 {offsets = [10, 0], sizes = [1, 32], strides = [1, 1]} : vector<16x32xf32> to vector<1x32xf32>
    %81 = vector.broadcast %80 : vector<1x32xf32> to vector<16x32xf32>
    %82 = arith.mulf %81, %79 : vector<16x32xf32>
    %83 = arith.addf %78, %82 : vector<16x32xf32>
    %c5_i32 = arith.constant 5 : i32
    %84 = tpu.dynamic_rotate %30 by %c5_i32 dim 0 : vector<16x32xf32>, i32 -> vector<16x32xf32>
    %85 = vector.extract_strided_slice %30 {offsets = [11, 0], sizes = [1, 32], strides = [1, 1]} : vector<16x32xf32> to vector<1x32xf32>
    %86 = vector.broadcast %85 : vector<1x32xf32> to vector<16x32xf32>
    %87 = arith.mulf %86, %84 : vector<16x32xf32>
    %88 = arith.addf %83, %87 : vector<16x32xf32>
    %c4_i32_9 = arith.constant 4 : i32
    %89 = tpu.dynamic_rotate %30 by %c4_i32_9 dim 0 : vector<16x32xf32>, i32 -> vector<16x32xf32>
    %90 = vector.extract_strided_slice %30 {offsets = [12, 0], sizes = [1, 32], strides = [1, 1]} : vector<16x32xf32> to vector<1x32xf32>
    %91 = vector.broadcast %90 : vector<1x32xf32> to vector<16x32xf32>
    %92 = arith.mulf %91, %89 : vector<16x32xf32>
    %93 = arith.addf %88, %92 : vector<16x32xf32>
    %c3_i32 = arith.constant 3 : i32
    %94 = tpu.dynamic_rotate %30 by %c3_i32 dim 0 : vector<16x32xf32>, i32 -> vector<16x32xf32>
    %95 = vector.extract_strided_slice %30 {offsets = [13, 0], sizes = [1, 32], strides = [1, 1]} : vector<16x32xf32> to vector<1x32xf32>
    %96 = vector.broadcast %95 : vector<1x32xf32> to vector<16x32xf32>
    %97 = arith.mulf %96, %94 : vector<16x32xf32>
    %98 = arith.addf %93, %97 : vector<16x32xf32>
    %c2_i32 = arith.constant 2 : i32
    %99 = tpu.dynamic_rotate %30 by %c2_i32 dim 0 : vector<16x32xf32>, i32 -> vector<16x32xf32>
    %100 = vector.extract_strided_slice %30 {offsets = [14, 0], sizes = [1, 32], strides = [1, 1]} : vector<16x32xf32> to vector<1x32xf32>
    %101 = vector.broadcast %100 : vector<1x32xf32> to vector<16x32xf32>
    %102 = arith.mulf %101, %99 : vector<16x32xf32>
    %103 = arith.addf %98, %102 : vector<16x32xf32>
    %c1_i32_10 = arith.constant 1 : i32
    %104 = tpu.dynamic_rotate %30 by %c1_i32_10 dim 0 : vector<16x32xf32>, i32 -> vector<16x32xf32>
    %105 = vector.extract_strided_slice %30 {offsets = [15, 0], sizes = [1, 32], strides = [1, 1]} : vector<16x32xf32> to vector<1x32xf32>
    %106 = vector.broadcast %105 : vector<1x32xf32> to vector<16x32xf32>
    %107 = arith.mulf %106, %104 : vector<16x32xf32>
    %108 = arith.addf %103, %107 : vector<16x32xf32>
    %c31_i32 = arith.constant 31 : i32
    %109 = tpu.dynamic_rotate %108 by %c31_i32 dim 1 : vector<16x32xf32>, i32 -> vector<16x32xf32>
    %c1_i32_11 = arith.constant 1 : i32
    %110 = tpu.dynamic_rotate %108 by %c1_i32_11 dim 1 : vector<16x32xf32>, i32 -> vector<16x32xf32>
    %c1_i32_12 = arith.constant 1 : i32
    %111 = vector.broadcast %c1_i32_12 : i32 to vector<1x32xi32>
    %112 = arith.andi %16, %111 : vector<1x32xi32>
    %c0_i32_13 = arith.constant 0 : i32
    %113 = vector.broadcast %c0_i32_13 : i32 to vector<1x32xi32>
    %114 = arith.cmpi eq, %112, %113 : vector<1x32xi32>
    %115 = vector.shape_cast %114 : vector<1x32xi1> to vector<1x32xi1>
    %116 = vector.broadcast %115 : vector<1x32xi1> to vector<16x32xi1>
    %117 = arith.select %116, %109, %110 : vector<16x32xi1>, vector<16x32xf32>
    %118 = arith.maximumf %108, %117 : vector<16x32xf32>
    %c30_i32 = arith.constant 30 : i32
    %119 = tpu.dynamic_rotate %118 by %c30_i32 dim 1 : vector<16x32xf32>, i32 -> vector<16x32xf32>
    %c2_i32_14 = arith.constant 2 : i32
    %120 = tpu.dynamic_rotate %118 by %c2_i32_14 dim 1 : vector<16x32xf32>, i32 -> vector<16x32xf32>
    %c2_i32_15 = arith.constant 2 : i32
    %121 = vector.broadcast %c2_i32_15 : i32 to vector<1x32xi32>
    %122 = arith.andi %16, %121 : vector<1x32xi32>
    %c0_i32_16 = arith.constant 0 : i32
    %123 = vector.broadcast %c0_i32_16 : i32 to vector<1x32xi32>
    %124 = arith.cmpi eq, %122, %123 : vector<1x32xi32>
    %125 = vector.shape_cast %124 : vector<1x32xi1> to vector<1x32xi1>
    %126 = vector.broadcast %125 : vector<1x32xi1> to vector<16x32xi1>
    %127 = arith.select %126, %119, %120 : vector<16x32xi1>, vector<16x32xf32>
    %128 = arith.maximumf %118, %127 : vector<16x32xf32>
    %129 = arith.cmpf oge, %108, %128 : vector<16x32xf32>
    %cst_17 = arith.constant 0xFF800000 : f32
    %130 = vector.broadcast %cst_17 : f32 to vector<16x32xf32>
    %131 = arith.select %129, %130, %108 : vector<16x32xi1>, vector<16x32xf32>
    %c31_i32_18 = arith.constant 31 : i32
    %132 = tpu.dynamic_rotate %131 by %c31_i32_18 dim 1 : vector<16x32xf32>, i32 -> vector<16x32xf32>
    %c1_i32_19 = arith.constant 1 : i32
    %133 = tpu.dynamic_rotate %131 by %c1_i32_19 dim 1 : vector<16x32xf32>, i32 -> vector<16x32xf32>
    %c1_i32_20 = arith.constant 1 : i32
    %134 = vector.broadcast %c1_i32_20 : i32 to vector<1x32xi32>
    %135 = arith.andi %16, %134 : vector<1x32xi32>
    %c0_i32_21 = arith.constant 0 : i32
    %136 = vector.broadcast %c0_i32_21 : i32 to vector<1x32xi32>
    %137 = arith.cmpi eq, %135, %136 : vector<1x32xi32>
    %138 = vector.shape_cast %137 : vector<1x32xi1> to vector<1x32xi1>
    %139 = vector.broadcast %138 : vector<1x32xi1> to vector<16x32xi1>
    %140 = arith.select %139, %132, %133 : vector<16x32xi1>, vector<16x32xf32>
    %141 = arith.maximumf %131, %140 : vector<16x32xf32>
    %c30_i32_22 = arith.constant 30 : i32
    %142 = tpu.dynamic_rotate %141 by %c30_i32_22 dim 1 : vector<16x32xf32>, i32 -> vector<16x32xf32>
    %c2_i32_23 = arith.constant 2 : i32
    %143 = tpu.dynamic_rotate %141 by %c2_i32_23 dim 1 : vector<16x32xf32>, i32 -> vector<16x32xf32>
    %c2_i32_24 = arith.constant 2 : i32
    %144 = vector.broadcast %c2_i32_24 : i32 to vector<1x32xi32>
    %145 = arith.andi %16, %144 : vector<1x32xi32>
    %c0_i32_25 = arith.constant 0 : i32
    %146 = vector.broadcast %c0_i32_25 : i32 to vector<1x32xi32>
    %147 = arith.cmpi eq, %145, %146 : vector<1x32xi32>
    %148 = vector.shape_cast %147 : vector<1x32xi1> to vector<1x32xi1>
    %149 = vector.broadcast %148 : vector<1x32xi1> to vector<16x32xi1>
    %150 = arith.select %149, %142, %143 : vector<16x32xi1>, vector<16x32xf32>
    %151 = arith.maximumf %141, %150 : vector<16x32xf32>
    %152 = arith.cmpf oge, %108, %151 : vector<16x32xf32>
    %153 = arith.subf %108, %128 : vector<16x32xf32>
    %154 = math.exp %153 : vector<16x32xf32>
    %cst_26 = arith.constant 0.000000e+00 : f32
    %155 = vector.broadcast %cst_26 : f32 to vector<16x32xf32>
    %156 = arith.select %152, %154, %155 : vector<16x32xi1>, vector<16x32xf32>
    %c31_i32_27 = arith.constant 31 : i32
    %157 = tpu.dynamic_rotate %156 by %c31_i32_27 dim 1 : vector<16x32xf32>, i32 -> vector<16x32xf32>
    %c1_i32_28 = arith.constant 1 : i32
    %158 = tpu.dynamic_rotate %156 by %c1_i32_28 dim 1 : vector<16x32xf32>, i32 -> vector<16x32xf32>
    %c1_i32_29 = arith.constant 1 : i32
    %159 = vector.broadcast %c1_i32_29 : i32 to vector<1x32xi32>
    %160 = arith.andi %16, %159 : vector<1x32xi32>
    %c0_i32_30 = arith.constant 0 : i32
    %161 = vector.broadcast %c0_i32_30 : i32 to vector<1x32xi32>
    %162 = arith.cmpi eq, %160, %161 : vector<1x32xi32>
    %163 = vector.shape_cast %162 : vector<1x32xi1> to vector<1x32xi1>
    %164 = vector.broadcast %163 : vector<1x32xi1> to vector<16x32xi1>
    %165 = arith.select %164, %157, %158 : vector<16x32xi1>, vector<16x32xf32>
    %166 = arith.addf %156, %165 : vector<16x32xf32>
    %c30_i32_31 = arith.constant 30 : i32
    %167 = tpu.dynamic_rotate %166 by %c30_i32_31 dim 1 : vector<16x32xf32>, i32 -> vector<16x32xf32>
    %c2_i32_32 = arith.constant 2 : i32
    %168 = tpu.dynamic_rotate %166 by %c2_i32_32 dim 1 : vector<16x32xf32>, i32 -> vector<16x32xf32>
    %c2_i32_33 = arith.constant 2 : i32
    %169 = vector.broadcast %c2_i32_33 : i32 to vector<1x32xi32>
    %170 = arith.andi %16, %169 : vector<1x32xi32>
    %c0_i32_34 = arith.constant 0 : i32
    %171 = vector.broadcast %c0_i32_34 : i32 to vector<1x32xi32>
    %172 = arith.cmpi eq, %170, %171 : vector<1x32xi32>
    %173 = vector.shape_cast %172 : vector<1x32xi1> to vector<1x32xi1>
    %174 = vector.broadcast %173 : vector<1x32xi1> to vector<16x32xi1>
    %175 = arith.select %174, %167, %168 : vector<16x32xi1>, vector<16x32xf32>
    %176 = arith.addf %166, %175 : vector<16x32xf32>
    %177 = tpu.reciprocal %176 {approx = true} : vector<16x32xf32> -> vector<16x32xf32>
    %178 = arith.mulf %156, %177 : vector<16x32xf32>
    %cst_35 = arith.constant 0.000000e+00 : f32
    %179 = vector.broadcast %cst_35 : f32 to vector<16x32xf32>
    %c0_i32_36 = arith.constant 0 : i32
    %180 = vector.broadcast %c0_i32_36 : i32 to vector<1x32xi32>
    %181 = arith.cmpi eq, %16, %180 : vector<1x32xi32>
    %cst_37 = arith.constant 0.000000e+00 : f32
    %182 = vector.shape_cast %181 : vector<1x32xi1> to vector<1x32xi1>
    %183 = vector.broadcast %182 : vector<1x32xi1> to vector<16x32xi1>
    %184 = vector.broadcast %cst_37 : f32 to vector<16x32xf32>
    %185 = arith.select %183, %178, %184 : vector<16x32xi1>, vector<16x32xf32>
    %c31_i32_38 = arith.constant 31 : i32
    %186 = tpu.dynamic_rotate %185 by %c31_i32_38 dim 1 : vector<16x32xf32>, i32 -> vector<16x32xf32>
    %c1_i32_39 = arith.constant 1 : i32
    %187 = tpu.dynamic_rotate %185 by %c1_i32_39 dim 1 : vector<16x32xf32>, i32 -> vector<16x32xf32>
    %c1_i32_40 = arith.constant 1 : i32
    %188 = vector.broadcast %c1_i32_40 : i32 to vector<1x32xi32>
    %189 = arith.andi %16, %188 : vector<1x32xi32>
    %c0_i32_41 = arith.constant 0 : i32
    %190 = vector.broadcast %c0_i32_41 : i32 to vector<1x32xi32>
    %191 = arith.cmpi eq, %189, %190 : vector<1x32xi32>
    %192 = vector.shape_cast %191 : vector<1x32xi1> to vector<1x32xi1>
    %193 = vector.broadcast %192 : vector<1x32xi1> to vector<16x32xi1>
    %194 = arith.select %193, %186, %187 : vector<16x32xi1>, vector<16x32xf32>
    %195 = arith.addf %185, %194 : vector<16x32xf32>
    %c30_i32_42 = arith.constant 30 : i32
    %196 = tpu.dynamic_rotate %195 by %c30_i32_42 dim 1 : vector<16x32xf32>, i32 -> vector<16x32xf32>
    %c2_i32_43 = arith.constant 2 : i32
    %197 = tpu.dynamic_rotate %195 by %c2_i32_43 dim 1 : vector<16x32xf32>, i32 -> vector<16x32xf32>
    %c2_i32_44 = arith.constant 2 : i32
    %198 = vector.broadcast %c2_i32_44 : i32 to vector<1x32xi32>
    %199 = arith.andi %16, %198 : vector<1x32xi32>
    %c0_i32_45 = arith.constant 0 : i32
    %200 = vector.broadcast %c0_i32_45 : i32 to vector<1x32xi32>
    %201 = arith.cmpi eq, %199, %200 : vector<1x32xi32>
    %202 = vector.shape_cast %201 : vector<1x32xi1> to vector<1x32xi1>
    %203 = vector.broadcast %202 : vector<1x32xi1> to vector<16x32xi1>
    %204 = arith.select %203, %196, %197 : vector<16x32xi1>, vector<16x32xf32>
    %205 = arith.addf %195, %204 : vector<16x32xf32>
    %206 = arith.mulf %205, %30 : vector<16x32xf32>
    %207 = arith.addf %179, %206 : vector<16x32xf32>
    %c1_i32_46 = arith.constant 1 : i32
    %208 = vector.broadcast %c1_i32_46 : i32 to vector<1x32xi32>
    %209 = arith.cmpi eq, %16, %208 : vector<1x32xi32>
    %cst_47 = arith.constant 0.000000e+00 : f32
    %210 = vector.shape_cast %209 : vector<1x32xi1> to vector<1x32xi1>
    %211 = vector.broadcast %210 : vector<1x32xi1> to vector<16x32xi1>
    %212 = vector.broadcast %cst_47 : f32 to vector<16x32xf32>
    %213 = arith.select %211, %178, %212 : vector<16x32xi1>, vector<16x32xf32>
    %c31_i32_48 = arith.constant 31 : i32
    %214 = tpu.dynamic_rotate %213 by %c31_i32_48 dim 1 : vector<16x32xf32>, i32 -> vector<16x32xf32>
    %c1_i32_49 = arith.constant 1 : i32
    %215 = tpu.dynamic_rotate %213 by %c1_i32_49 dim 1 : vector<16x32xf32>, i32 -> vector<16x32xf32>
    %c1_i32_50 = arith.constant 1 : i32
    %216 = vector.broadcast %c1_i32_50 : i32 to vector<1x32xi32>
    %217 = arith.andi %16, %216 : vector<1x32xi32>
    %c0_i32_51 = arith.constant 0 : i32
    %218 = vector.broadcast %c0_i32_51 : i32 to vector<1x32xi32>
    %219 = arith.cmpi eq, %217, %218 : vector<1x32xi32>
    %220 = vector.shape_cast %219 : vector<1x32xi1> to vector<1x32xi1>
    %221 = vector.broadcast %220 : vector<1x32xi1> to vector<16x32xi1>
    %222 = arith.select %221, %214, %215 : vector<16x32xi1>, vector<16x32xf32>
    %223 = arith.addf %213, %222 : vector<16x32xf32>
    %c30_i32_52 = arith.constant 30 : i32
    %224 = tpu.dynamic_rotate %223 by %c30_i32_52 dim 1 : vector<16x32xf32>, i32 -> vector<16x32xf32>
    %c2_i32_53 = arith.constant 2 : i32
    %225 = tpu.dynamic_rotate %223 by %c2_i32_53 dim 1 : vector<16x32xf32>, i32 -> vector<16x32xf32>
    %c2_i32_54 = arith.constant 2 : i32
    %226 = vector.broadcast %c2_i32_54 : i32 to vector<1x32xi32>
    %227 = arith.andi %16, %226 : vector<1x32xi32>
    %c0_i32_55 = arith.constant 0 : i32
    %228 = vector.broadcast %c0_i32_55 : i32 to vector<1x32xi32>
    %229 = arith.cmpi eq, %227, %228 : vector<1x32xi32>
    %230 = vector.shape_cast %229 : vector<1x32xi1> to vector<1x32xi1>
    %231 = vector.broadcast %230 : vector<1x32xi1> to vector<16x32xi1>
    %232 = arith.select %231, %224, %225 : vector<16x32xi1>, vector<16x32xf32>
    %233 = arith.addf %223, %232 : vector<16x32xf32>
    %c1_i32_56 = arith.constant 1 : i32
    %234 = tpu.dynamic_rotate %30 by %c1_i32_56 dim 0 : vector<16x32xf32>, i32 -> vector<16x32xf32>
    %235 = arith.mulf %233, %234 : vector<16x32xf32>
    %236 = arith.addf %207, %235 : vector<16x32xf32>
    %c2_i32_57 = arith.constant 2 : i32
    %237 = vector.broadcast %c2_i32_57 : i32 to vector<1x32xi32>
    %238 = arith.cmpi eq, %16, %237 : vector<1x32xi32>
    %cst_58 = arith.constant 0.000000e+00 : f32
    %239 = vector.shape_cast %238 : vector<1x32xi1> to vector<1x32xi1>
    %240 = vector.broadcast %239 : vector<1x32xi1> to vector<16x32xi1>
    %241 = vector.broadcast %cst_58 : f32 to vector<16x32xf32>
    %242 = arith.select %240, %178, %241 : vector<16x32xi1>, vector<16x32xf32>
    %c31_i32_59 = arith.constant 31 : i32
    %243 = tpu.dynamic_rotate %242 by %c31_i32_59 dim 1 : vector<16x32xf32>, i32 -> vector<16x32xf32>
    %c1_i32_60 = arith.constant 1 : i32
    %244 = tpu.dynamic_rotate %242 by %c1_i32_60 dim 1 : vector<16x32xf32>, i32 -> vector<16x32xf32>
    %c1_i32_61 = arith.constant 1 : i32
    %245 = vector.broadcast %c1_i32_61 : i32 to vector<1x32xi32>
    %246 = arith.andi %16, %245 : vector<1x32xi32>
    %c0_i32_62 = arith.constant 0 : i32
    %247 = vector.broadcast %c0_i32_62 : i32 to vector<1x32xi32>
    %248 = arith.cmpi eq, %246, %247 : vector<1x32xi32>
    %249 = vector.shape_cast %248 : vector<1x32xi1> to vector<1x32xi1>
    %250 = vector.broadcast %249 : vector<1x32xi1> to vector<16x32xi1>
    %251 = arith.select %250, %243, %244 : vector<16x32xi1>, vector<16x32xf32>
    %252 = arith.addf %242, %251 : vector<16x32xf32>
    %c30_i32_63 = arith.constant 30 : i32
    %253 = tpu.dynamic_rotate %252 by %c30_i32_63 dim 1 : vector<16x32xf32>, i32 -> vector<16x32xf32>
    %c2_i32_64 = arith.constant 2 : i32
    %254 = tpu.dynamic_rotate %252 by %c2_i32_64 dim 1 : vector<16x32xf32>, i32 -> vector<16x32xf32>
    %c2_i32_65 = arith.constant 2 : i32
    %255 = vector.broadcast %c2_i32_65 : i32 to vector<1x32xi32>
    %256 = arith.andi %16, %255 : vector<1x32xi32>
    %c0_i32_66 = arith.constant 0 : i32
    %257 = vector.broadcast %c0_i32_66 : i32 to vector<1x32xi32>
    %258 = arith.cmpi eq, %256, %257 : vector<1x32xi32>
    %259 = vector.shape_cast %258 : vector<1x32xi1> to vector<1x32xi1>
    %260 = vector.broadcast %259 : vector<1x32xi1> to vector<16x32xi1>
    %261 = arith.select %260, %253, %254 : vector<16x32xi1>, vector<16x32xf32>
    %262 = arith.addf %252, %261 : vector<16x32xf32>
    %c2_i32_67 = arith.constant 2 : i32
    %263 = tpu.dynamic_rotate %30 by %c2_i32_67 dim 0 : vector<16x32xf32>, i32 -> vector<16x32xf32>
    %264 = arith.mulf %262, %263 : vector<16x32xf32>
    %265 = arith.addf %236, %264 : vector<16x32xf32>
    %c3_i32_68 = arith.constant 3 : i32
    %266 = vector.broadcast %c3_i32_68 : i32 to vector<1x32xi32>
    %267 = arith.cmpi eq, %16, %266 : vector<1x32xi32>
    %cst_69 = arith.constant 0.000000e+00 : f32
    %268 = vector.shape_cast %267 : vector<1x32xi1> to vector<1x32xi1>
    %269 = vector.broadcast %268 : vector<1x32xi1> to vector<16x32xi1>
    %270 = vector.broadcast %cst_69 : f32 to vector<16x32xf32>
    %271 = arith.select %269, %178, %270 : vector<16x32xi1>, vector<16x32xf32>
    %c31_i32_70 = arith.constant 31 : i32
    %272 = tpu.dynamic_rotate %271 by %c31_i32_70 dim 1 : vector<16x32xf32>, i32 -> vector<16x32xf32>
    %c1_i32_71 = arith.constant 1 : i32
    %273 = tpu.dynamic_rotate %271 by %c1_i32_71 dim 1 : vector<16x32xf32>, i32 -> vector<16x32xf32>
    %c1_i32_72 = arith.constant 1 : i32
    %274 = vector.broadcast %c1_i32_72 : i32 to vector<1x32xi32>
    %275 = arith.andi %16, %274 : vector<1x32xi32>
    %c0_i32_73 = arith.constant 0 : i32
    %276 = vector.broadcast %c0_i32_73 : i32 to vector<1x32xi32>
    %277 = arith.cmpi eq, %275, %276 : vector<1x32xi32>
    %278 = vector.shape_cast %277 : vector<1x32xi1> to vector<1x32xi1>
    %279 = vector.broadcast %278 : vector<1x32xi1> to vector<16x32xi1>
    %280 = arith.select %279, %272, %273 : vector<16x32xi1>, vector<16x32xf32>
    %281 = arith.addf %271, %280 : vector<16x32xf32>
    %c30_i32_74 = arith.constant 30 : i32
    %282 = tpu.dynamic_rotate %281 by %c30_i32_74 dim 1 : vector<16x32xf32>, i32 -> vector<16x32xf32>
    %c2_i32_75 = arith.constant 2 : i32
    %283 = tpu.dynamic_rotate %281 by %c2_i32_75 dim 1 : vector<16x32xf32>, i32 -> vector<16x32xf32>
    %c2_i32_76 = arith.constant 2 : i32
    %284 = vector.broadcast %c2_i32_76 : i32 to vector<1x32xi32>
    %285 = arith.andi %16, %284 : vector<1x32xi32>
    %c0_i32_77 = arith.constant 0 : i32
    %286 = vector.broadcast %c0_i32_77 : i32 to vector<1x32xi32>
    %287 = arith.cmpi eq, %285, %286 : vector<1x32xi32>
    %288 = vector.shape_cast %287 : vector<1x32xi1> to vector<1x32xi1>
    %289 = vector.broadcast %288 : vector<1x32xi1> to vector<16x32xi1>
    %290 = arith.select %289, %282, %283 : vector<16x32xi1>, vector<16x32xf32>
    %291 = arith.addf %281, %290 : vector<16x32xf32>
    %c3_i32_78 = arith.constant 3 : i32
    %292 = tpu.dynamic_rotate %30 by %c3_i32_78 dim 0 : vector<16x32xf32>, i32 -> vector<16x32xf32>
    %293 = arith.mulf %291, %292 : vector<16x32xf32>
    %294 = arith.addf %265, %293 : vector<16x32xf32>
    %295 = arith.addf %30, %294 : vector<16x32xf32>
    %cst_79 = arith.constant dense<0.000000e+00> : vector<16xf32>
    %296 = vector.multi_reduction <add>, %295, %cst_79 [1] : vector<16x32xf32> to vector<16xf32>
    %297 = vector.shape_cast %296 : vector<16xf32> to vector<16x1xf32>
    %cst_80 = arith.constant 3.200000e+01 : f32
    %298 = vector.broadcast %cst_80 : f32 to vector<16x1xf32>
    %299 = arith.divf %297, %298 : vector<16x1xf32>
    %300 = vector.broadcast %299 : vector<16x1xf32> to vector<16x32xf32>
    %301 = arith.subf %295, %300 : vector<16x32xf32>
    %302 = arith.mulf %301, %301 : vector<16x32xf32>
    %cst_81 = arith.constant dense<0.000000e+00> : vector<16xf32>
    %303 = vector.multi_reduction <add>, %302, %cst_81 [1] : vector<16x32xf32> to vector<16xf32>
    %304 = vector.shape_cast %303 : vector<16xf32> to vector<16x1xf32>
    %cst_82 = arith.constant 3.200000e+01 : f32
    %305 = vector.broadcast %cst_82 : f32 to vector<16x1xf32>
    %306 = arith.divf %304, %305 : vector<16x1xf32>
    %cst_83 = arith.constant 9.99999974E-6 : f32
    %307 = vector.broadcast %cst_83 : f32 to vector<16x1xf32>
    %308 = arith.addf %306, %307 : vector<16x1xf32>
    %309 = math.rsqrt %308 : vector<16x1xf32>
    %310 = vector.broadcast %309 : vector<16x1xf32> to vector<16x32xf32>
    %311 = arith.mulf %301, %310 : vector<16x32xf32>
    %312 = vector.broadcast %18 : vector<1x32xf32> to vector<16x32xf32>
    %313 = arith.mulf %311, %312 : vector<16x32xf32>
    %314 = vector.broadcast %19 : vector<1x32xf32> to vector<16x32xf32>
    %315 = arith.addf %313, %314 : vector<16x32xf32>
    %c0_84 = arith.constant 0 : index
    %c0_85 = arith.constant 0 : index
    %c0_86 = arith.constant 0 : index
    %316 = vector.load %arg2[%c0_84, %c0_85, %c0_86] : memref<1x16x32xf32, #tpu.memory_space<vmem>>, vector<1x16x32xf32>
    %317 = vector.shape_cast %316 : vector<1x16x32xf32> to vector<16x32xf32>
    %318 = vector.extract_strided_slice %317 {offsets = [0, 0], sizes = [1, 32], strides = [1, 1]} : vector<16x32xf32> to vector<1x32xf32>
    %319 = vector.broadcast %318 : vector<1x32xf32> to vector<16x32xf32>
    %320 = arith.mulf %319, %315 : vector<16x32xf32>
    %c15_i32_87 = arith.constant 15 : i32
    %321 = tpu.dynamic_rotate %315 by %c15_i32_87 dim 0 : vector<16x32xf32>, i32 -> vector<16x32xf32>
    %322 = vector.extract_strided_slice %317 {offsets = [1, 0], sizes = [1, 32], strides = [1, 1]} : vector<16x32xf32> to vector<1x32xf32>
    %323 = vector.broadcast %322 : vector<1x32xf32> to vector<16x32xf32>
    %324 = arith.mulf %323, %321 : vector<16x32xf32>
    %325 = arith.addf %320, %324 : vector<16x32xf32>
    %c14_i32_88 = arith.constant 14 : i32
    %326 = tpu.dynamic_rotate %315 by %c14_i32_88 dim 0 : vector<16x32xf32>, i32 -> vector<16x32xf32>
    %327 = vector.extract_strided_slice %317 {offsets = [2, 0], sizes = [1, 32], strides = [1, 1]} : vector<16x32xf32> to vector<1x32xf32>
    %328 = vector.broadcast %327 : vector<1x32xf32> to vector<16x32xf32>
    %329 = arith.mulf %328, %326 : vector<16x32xf32>
    %330 = arith.addf %325, %329 : vector<16x32xf32>
    %c13_i32_89 = arith.constant 13 : i32
    %331 = tpu.dynamic_rotate %315 by %c13_i32_89 dim 0 : vector<16x32xf32>, i32 -> vector<16x32xf32>
    %332 = vector.extract_strided_slice %317 {offsets = [3, 0], sizes = [1, 32], strides = [1, 1]} : vector<16x32xf32> to vector<1x32xf32>
    %333 = vector.broadcast %332 : vector<1x32xf32> to vector<16x32xf32>
    %334 = arith.mulf %333, %331 : vector<16x32xf32>
    %335 = arith.addf %330, %334 : vector<16x32xf32>
    %c12_i32_90 = arith.constant 12 : i32
    %336 = tpu.dynamic_rotate %315 by %c12_i32_90 dim 0 : vector<16x32xf32>, i32 -> vector<16x32xf32>
    %337 = vector.extract_strided_slice %317 {offsets = [4, 0], sizes = [1, 32], strides = [1, 1]} : vector<16x32xf32> to vector<1x32xf32>
    %338 = vector.broadcast %337 : vector<1x32xf32> to vector<16x32xf32>
    %339 = arith.mulf %338, %336 : vector<16x32xf32>
    %340 = arith.addf %335, %339 : vector<16x32xf32>
    %c11_i32_91 = arith.constant 11 : i32
    %341 = tpu.dynamic_rotate %315 by %c11_i32_91 dim 0 : vector<16x32xf32>, i32 -> vector<16x32xf32>
    %342 = vector.extract_strided_slice %317 {offsets = [5, 0], sizes = [1, 32], strides = [1, 1]} : vector<16x32xf32> to vector<1x32xf32>
    %343 = vector.broadcast %342 : vector<1x32xf32> to vector<16x32xf32>
    %344 = arith.mulf %343, %341 : vector<16x32xf32>
    %345 = arith.addf %340, %344 : vector<16x32xf32>
    %c10_i32_92 = arith.constant 10 : i32
    %346 = tpu.dynamic_rotate %315 by %c10_i32_92 dim 0 : vector<16x32xf32>, i32 -> vector<16x32xf32>
    %347 = vector.extract_strided_slice %317 {offsets = [6, 0], sizes = [1, 32], strides = [1, 1]} : vector<16x32xf32> to vector<1x32xf32>
    %348 = vector.broadcast %347 : vector<1x32xf32> to vector<16x32xf32>
    %349 = arith.mulf %348, %346 : vector<16x32xf32>
    %350 = arith.addf %345, %349 : vector<16x32xf32>
    %c9_i32_93 = arith.constant 9 : i32
    %351 = tpu.dynamic_rotate %315 by %c9_i32_93 dim 0 : vector<16x32xf32>, i32 -> vector<16x32xf32>
    %352 = vector.extract_strided_slice %317 {offsets = [7, 0], sizes = [1, 32], strides = [1, 1]} : vector<16x32xf32> to vector<1x32xf32>
    %353 = vector.broadcast %352 : vector<1x32xf32> to vector<16x32xf32>
    %354 = arith.mulf %353, %351 : vector<16x32xf32>
    %355 = arith.addf %350, %354 : vector<16x32xf32>
    %c8_i32_94 = arith.constant 8 : i32
    %356 = tpu.dynamic_rotate %315 by %c8_i32_94 dim 0 : vector<16x32xf32>, i32 -> vector<16x32xf32>
    %357 = vector.extract_strided_slice %317 {offsets = [8, 0], sizes = [1, 32], strides = [1, 1]} : vector<16x32xf32> to vector<1x32xf32>
    %358 = vector.broadcast %357 : vector<1x32xf32> to vector<16x32xf32>
    %359 = arith.mulf %358, %356 : vector<16x32xf32>
    %360 = arith.addf %355, %359 : vector<16x32xf32>
    %c7_i32_95 = arith.constant 7 : i32
    %361 = tpu.dynamic_rotate %315 by %c7_i32_95 dim 0 : vector<16x32xf32>, i32 -> vector<16x32xf32>
    %362 = vector.extract_strided_slice %317 {offsets = [9, 0], sizes = [1, 32], strides = [1, 1]} : vector<16x32xf32> to vector<1x32xf32>
    %363 = vector.broadcast %362 : vector<1x32xf32> to vector<16x32xf32>
    %364 = arith.mulf %363, %361 : vector<16x32xf32>
    %365 = arith.addf %360, %364 : vector<16x32xf32>
    %c6_i32_96 = arith.constant 6 : i32
    %366 = tpu.dynamic_rotate %315 by %c6_i32_96 dim 0 : vector<16x32xf32>, i32 -> vector<16x32xf32>
    %367 = vector.extract_strided_slice %317 {offsets = [10, 0], sizes = [1, 32], strides = [1, 1]} : vector<16x32xf32> to vector<1x32xf32>
    %368 = vector.broadcast %367 : vector<1x32xf32> to vector<16x32xf32>
    %369 = arith.mulf %368, %366 : vector<16x32xf32>
    %370 = arith.addf %365, %369 : vector<16x32xf32>
    %c5_i32_97 = arith.constant 5 : i32
    %371 = tpu.dynamic_rotate %315 by %c5_i32_97 dim 0 : vector<16x32xf32>, i32 -> vector<16x32xf32>
    %372 = vector.extract_strided_slice %317 {offsets = [11, 0], sizes = [1, 32], strides = [1, 1]} : vector<16x32xf32> to vector<1x32xf32>
    %373 = vector.broadcast %372 : vector<1x32xf32> to vector<16x32xf32>
    %374 = arith.mulf %373, %371 : vector<16x32xf32>
    %375 = arith.addf %370, %374 : vector<16x32xf32>
    %c4_i32_98 = arith.constant 4 : i32
    %376 = tpu.dynamic_rotate %315 by %c4_i32_98 dim 0 : vector<16x32xf32>, i32 -> vector<16x32xf32>
    %377 = vector.extract_strided_slice %317 {offsets = [12, 0], sizes = [1, 32], strides = [1, 1]} : vector<16x32xf32> to vector<1x32xf32>
    %378 = vector.broadcast %377 : vector<1x32xf32> to vector<16x32xf32>
    %379 = arith.mulf %378, %376 : vector<16x32xf32>
    %380 = arith.addf %375, %379 : vector<16x32xf32>
    %c3_i32_99 = arith.constant 3 : i32
    %381 = tpu.dynamic_rotate %315 by %c3_i32_99 dim 0 : vector<16x32xf32>, i32 -> vector<16x32xf32>
    %382 = vector.extract_strided_slice %317 {offsets = [13, 0], sizes = [1, 32], strides = [1, 1]} : vector<16x32xf32> to vector<1x32xf32>
    %383 = vector.broadcast %382 : vector<1x32xf32> to vector<16x32xf32>
    %384 = arith.mulf %383, %381 : vector<16x32xf32>
    %385 = arith.addf %380, %384 : vector<16x32xf32>
    %c2_i32_100 = arith.constant 2 : i32
    %386 = tpu.dynamic_rotate %315 by %c2_i32_100 dim 0 : vector<16x32xf32>, i32 -> vector<16x32xf32>
    %387 = vector.extract_strided_slice %317 {offsets = [14, 0], sizes = [1, 32], strides = [1, 1]} : vector<16x32xf32> to vector<1x32xf32>
    %388 = vector.broadcast %387 : vector<1x32xf32> to vector<16x32xf32>
    %389 = arith.mulf %388, %386 : vector<16x32xf32>
    %390 = arith.addf %385, %389 : vector<16x32xf32>
    %c1_i32_101 = arith.constant 1 : i32
    %391 = tpu.dynamic_rotate %315 by %c1_i32_101 dim 0 : vector<16x32xf32>, i32 -> vector<16x32xf32>
    %392 = vector.extract_strided_slice %317 {offsets = [15, 0], sizes = [1, 32], strides = [1, 1]} : vector<16x32xf32> to vector<1x32xf32>
    %393 = vector.broadcast %392 : vector<1x32xf32> to vector<16x32xf32>
    %394 = arith.mulf %393, %391 : vector<16x32xf32>
    %395 = arith.addf %390, %394 : vector<16x32xf32>
    %c31_i32_102 = arith.constant 31 : i32
    %396 = tpu.dynamic_rotate %395 by %c31_i32_102 dim 1 : vector<16x32xf32>, i32 -> vector<16x32xf32>
    %c1_i32_103 = arith.constant 1 : i32
    %397 = tpu.dynamic_rotate %395 by %c1_i32_103 dim 1 : vector<16x32xf32>, i32 -> vector<16x32xf32>
    %c1_i32_104 = arith.constant 1 : i32
    %398 = vector.broadcast %c1_i32_104 : i32 to vector<1x32xi32>
    %399 = arith.andi %16, %398 : vector<1x32xi32>
    %c0_i32_105 = arith.constant 0 : i32
    %400 = vector.broadcast %c0_i32_105 : i32 to vector<1x32xi32>
    %401 = arith.cmpi eq, %399, %400 : vector<1x32xi32>
    %402 = vector.shape_cast %401 : vector<1x32xi1> to vector<1x32xi1>
    %403 = vector.broadcast %402 : vector<1x32xi1> to vector<16x32xi1>
    %404 = arith.select %403, %396, %397 : vector<16x32xi1>, vector<16x32xf32>
    %405 = arith.maximumf %395, %404 : vector<16x32xf32>
    %c30_i32_106 = arith.constant 30 : i32
    %406 = tpu.dynamic_rotate %405 by %c30_i32_106 dim 1 : vector<16x32xf32>, i32 -> vector<16x32xf32>
    %c2_i32_107 = arith.constant 2 : i32
    %407 = tpu.dynamic_rotate %405 by %c2_i32_107 dim 1 : vector<16x32xf32>, i32 -> vector<16x32xf32>
    %c2_i32_108 = arith.constant 2 : i32
    %408 = vector.broadcast %c2_i32_108 : i32 to vector<1x32xi32>
    %409 = arith.andi %16, %408 : vector<1x32xi32>
    %c0_i32_109 = arith.constant 0 : i32
    %410 = vector.broadcast %c0_i32_109 : i32 to vector<1x32xi32>
    %411 = arith.cmpi eq, %409, %410 : vector<1x32xi32>
    %412 = vector.shape_cast %411 : vector<1x32xi1> to vector<1x32xi1>
    %413 = vector.broadcast %412 : vector<1x32xi1> to vector<16x32xi1>
    %414 = arith.select %413, %406, %407 : vector<16x32xi1>, vector<16x32xf32>
    %415 = arith.maximumf %405, %414 : vector<16x32xf32>
    %416 = arith.cmpf oge, %395, %415 : vector<16x32xf32>
    %cst_110 = arith.constant 0xFF800000 : f32
    %417 = vector.broadcast %cst_110 : f32 to vector<16x32xf32>
    %418 = arith.select %416, %417, %395 : vector<16x32xi1>, vector<16x32xf32>
    %c31_i32_111 = arith.constant 31 : i32
    %419 = tpu.dynamic_rotate %418 by %c31_i32_111 dim 1 : vector<16x32xf32>, i32 -> vector<16x32xf32>
    %c1_i32_112 = arith.constant 1 : i32
    %420 = tpu.dynamic_rotate %418 by %c1_i32_112 dim 1 : vector<16x32xf32>, i32 -> vector<16x32xf32>
    %c1_i32_113 = arith.constant 1 : i32
    %421 = vector.broadcast %c1_i32_113 : i32 to vector<1x32xi32>
    %422 = arith.andi %16, %421 : vector<1x32xi32>
    %c0_i32_114 = arith.constant 0 : i32
    %423 = vector.broadcast %c0_i32_114 : i32 to vector<1x32xi32>
    %424 = arith.cmpi eq, %422, %423 : vector<1x32xi32>
    %425 = vector.shape_cast %424 : vector<1x32xi1> to vector<1x32xi1>
    %426 = vector.broadcast %425 : vector<1x32xi1> to vector<16x32xi1>
    %427 = arith.select %426, %419, %420 : vector<16x32xi1>, vector<16x32xf32>
    %428 = arith.maximumf %418, %427 : vector<16x32xf32>
    %c30_i32_115 = arith.constant 30 : i32
    %429 = tpu.dynamic_rotate %428 by %c30_i32_115 dim 1 : vector<16x32xf32>, i32 -> vector<16x32xf32>
    %c2_i32_116 = arith.constant 2 : i32
    %430 = tpu.dynamic_rotate %428 by %c2_i32_116 dim 1 : vector<16x32xf32>, i32 -> vector<16x32xf32>
    %c2_i32_117 = arith.constant 2 : i32
    %431 = vector.broadcast %c2_i32_117 : i32 to vector<1x32xi32>
    %432 = arith.andi %16, %431 : vector<1x32xi32>
    %c0_i32_118 = arith.constant 0 : i32
    %433 = vector.broadcast %c0_i32_118 : i32 to vector<1x32xi32>
    %434 = arith.cmpi eq, %432, %433 : vector<1x32xi32>
    %435 = vector.shape_cast %434 : vector<1x32xi1> to vector<1x32xi1>
    %436 = vector.broadcast %435 : vector<1x32xi1> to vector<16x32xi1>
    %437 = arith.select %436, %429, %430 : vector<16x32xi1>, vector<16x32xf32>
    %438 = arith.maximumf %428, %437 : vector<16x32xf32>
    %439 = arith.cmpf oge, %395, %438 : vector<16x32xf32>
    %440 = arith.subf %395, %415 : vector<16x32xf32>
    %441 = math.exp %440 : vector<16x32xf32>
    %cst_119 = arith.constant 0.000000e+00 : f32
    %442 = vector.broadcast %cst_119 : f32 to vector<16x32xf32>
    %443 = arith.select %439, %441, %442 : vector<16x32xi1>, vector<16x32xf32>
    %c31_i32_120 = arith.constant 31 : i32
    %444 = tpu.dynamic_rotate %443 by %c31_i32_120 dim 1 : vector<16x32xf32>, i32 -> vector<16x32xf32>
    %c1_i32_121 = arith.constant 1 : i32
    %445 = tpu.dynamic_rotate %443 by %c1_i32_121 dim 1 : vector<16x32xf32>, i32 -> vector<16x32xf32>
    %c1_i32_122 = arith.constant 1 : i32
    %446 = vector.broadcast %c1_i32_122 : i32 to vector<1x32xi32>
    %447 = arith.andi %16, %446 : vector<1x32xi32>
    %c0_i32_123 = arith.constant 0 : i32
    %448 = vector.broadcast %c0_i32_123 : i32 to vector<1x32xi32>
    %449 = arith.cmpi eq, %447, %448 : vector<1x32xi32>
    %450 = vector.shape_cast %449 : vector<1x32xi1> to vector<1x32xi1>
    %451 = vector.broadcast %450 : vector<1x32xi1> to vector<16x32xi1>
    %452 = arith.select %451, %444, %445 : vector<16x32xi1>, vector<16x32xf32>
    %453 = arith.addf %443, %452 : vector<16x32xf32>
    %c30_i32_124 = arith.constant 30 : i32
    %454 = tpu.dynamic_rotate %453 by %c30_i32_124 dim 1 : vector<16x32xf32>, i32 -> vector<16x32xf32>
    %c2_i32_125 = arith.constant 2 : i32
    %455 = tpu.dynamic_rotate %453 by %c2_i32_125 dim 1 : vector<16x32xf32>, i32 -> vector<16x32xf32>
    %c2_i32_126 = arith.constant 2 : i32
    %456 = vector.broadcast %c2_i32_126 : i32 to vector<1x32xi32>
    %457 = arith.andi %16, %456 : vector<1x32xi32>
    %c0_i32_127 = arith.constant 0 : i32
    %458 = vector.broadcast %c0_i32_127 : i32 to vector<1x32xi32>
    %459 = arith.cmpi eq, %457, %458 : vector<1x32xi32>
    %460 = vector.shape_cast %459 : vector<1x32xi1> to vector<1x32xi1>
    %461 = vector.broadcast %460 : vector<1x32xi1> to vector<16x32xi1>
    %462 = arith.select %461, %454, %455 : vector<16x32xi1>, vector<16x32xf32>
    %463 = arith.addf %453, %462 : vector<16x32xf32>
    %464 = tpu.reciprocal %463 {approx = true} : vector<16x32xf32> -> vector<16x32xf32>
    %465 = arith.mulf %443, %464 : vector<16x32xf32>
    %cst_128 = arith.constant 0.000000e+00 : f32
    %466 = vector.broadcast %cst_128 : f32 to vector<16x32xf32>
    %c0_i32_129 = arith.constant 0 : i32
    %467 = vector.broadcast %c0_i32_129 : i32 to vector<1x32xi32>
    %468 = arith.cmpi eq, %16, %467 : vector<1x32xi32>
    %cst_130 = arith.constant 0.000000e+00 : f32
    %469 = vector.shape_cast %468 : vector<1x32xi1> to vector<1x32xi1>
    %470 = vector.broadcast %469 : vector<1x32xi1> to vector<16x32xi1>
    %471 = vector.broadcast %cst_130 : f32 to vector<16x32xf32>
    %472 = arith.select %470, %465, %471 : vector<16x32xi1>, vector<16x32xf32>
    %c31_i32_131 = arith.constant 31 : i32
    %473 = tpu.dynamic_rotate %472 by %c31_i32_131 dim 1 : vector<16x32xf32>, i32 -> vector<16x32xf32>
    %c1_i32_132 = arith.constant 1 : i32
    %474 = tpu.dynamic_rotate %472 by %c1_i32_132 dim 1 : vector<16x32xf32>, i32 -> vector<16x32xf32>
    %c1_i32_133 = arith.constant 1 : i32
    %475 = vector.broadcast %c1_i32_133 : i32 to vector<1x32xi32>
    %476 = arith.andi %16, %475 : vector<1x32xi32>
    %c0_i32_134 = arith.constant 0 : i32
    %477 = vector.broadcast %c0_i32_134 : i32 to vector<1x32xi32>
    %478 = arith.cmpi eq, %476, %477 : vector<1x32xi32>
    %479 = vector.shape_cast %478 : vector<1x32xi1> to vector<1x32xi1>
    %480 = vector.broadcast %479 : vector<1x32xi1> to vector<16x32xi1>
    %481 = arith.select %480, %473, %474 : vector<16x32xi1>, vector<16x32xf32>
    %482 = arith.addf %472, %481 : vector<16x32xf32>
    %c30_i32_135 = arith.constant 30 : i32
    %483 = tpu.dynamic_rotate %482 by %c30_i32_135 dim 1 : vector<16x32xf32>, i32 -> vector<16x32xf32>
    %c2_i32_136 = arith.constant 2 : i32
    %484 = tpu.dynamic_rotate %482 by %c2_i32_136 dim 1 : vector<16x32xf32>, i32 -> vector<16x32xf32>
    %c2_i32_137 = arith.constant 2 : i32
    %485 = vector.broadcast %c2_i32_137 : i32 to vector<1x32xi32>
    %486 = arith.andi %16, %485 : vector<1x32xi32>
    %c0_i32_138 = arith.constant 0 : i32
    %487 = vector.broadcast %c0_i32_138 : i32 to vector<1x32xi32>
    %488 = arith.cmpi eq, %486, %487 : vector<1x32xi32>
    %489 = vector.shape_cast %488 : vector<1x32xi1> to vector<1x32xi1>
    %490 = vector.broadcast %489 : vector<1x32xi1> to vector<16x32xi1>
    %491 = arith.select %490, %483, %484 : vector<16x32xi1>, vector<16x32xf32>
    %492 = arith.addf %482, %491 : vector<16x32xf32>
    %493 = arith.mulf %492, %317 : vector<16x32xf32>
    %494 = arith.addf %466, %493 : vector<16x32xf32>
    %c1_i32_139 = arith.constant 1 : i32
    %495 = vector.broadcast %c1_i32_139 : i32 to vector<1x32xi32>
    %496 = arith.cmpi eq, %16, %495 : vector<1x32xi32>
    %cst_140 = arith.constant 0.000000e+00 : f32
    %497 = vector.shape_cast %496 : vector<1x32xi1> to vector<1x32xi1>
    %498 = vector.broadcast %497 : vector<1x32xi1> to vector<16x32xi1>
    %499 = vector.broadcast %cst_140 : f32 to vector<16x32xf32>
    %500 = arith.select %498, %465, %499 : vector<16x32xi1>, vector<16x32xf32>
    %c31_i32_141 = arith.constant 31 : i32
    %501 = tpu.dynamic_rotate %500 by %c31_i32_141 dim 1 : vector<16x32xf32>, i32 -> vector<16x32xf32>
    %c1_i32_142 = arith.constant 1 : i32
    %502 = tpu.dynamic_rotate %500 by %c1_i32_142 dim 1 : vector<16x32xf32>, i32 -> vector<16x32xf32>
    %c1_i32_143 = arith.constant 1 : i32
    %503 = vector.broadcast %c1_i32_143 : i32 to vector<1x32xi32>
    %504 = arith.andi %16, %503 : vector<1x32xi32>
    %c0_i32_144 = arith.constant 0 : i32
    %505 = vector.broadcast %c0_i32_144 : i32 to vector<1x32xi32>
    %506 = arith.cmpi eq, %504, %505 : vector<1x32xi32>
    %507 = vector.shape_cast %506 : vector<1x32xi1> to vector<1x32xi1>
    %508 = vector.broadcast %507 : vector<1x32xi1> to vector<16x32xi1>
    %509 = arith.select %508, %501, %502 : vector<16x32xi1>, vector<16x32xf32>
    %510 = arith.addf %500, %509 : vector<16x32xf32>
    %c30_i32_145 = arith.constant 30 : i32
    %511 = tpu.dynamic_rotate %510 by %c30_i32_145 dim 1 : vector<16x32xf32>, i32 -> vector<16x32xf32>
    %c2_i32_146 = arith.constant 2 : i32
    %512 = tpu.dynamic_rotate %510 by %c2_i32_146 dim 1 : vector<16x32xf32>, i32 -> vector<16x32xf32>
    %c2_i32_147 = arith.constant 2 : i32
    %513 = vector.broadcast %c2_i32_147 : i32 to vector<1x32xi32>
    %514 = arith.andi %16, %513 : vector<1x32xi32>
    %c0_i32_148 = arith.constant 0 : i32
    %515 = vector.broadcast %c0_i32_148 : i32 to vector<1x32xi32>
    %516 = arith.cmpi eq, %514, %515 : vector<1x32xi32>
    %517 = vector.shape_cast %516 : vector<1x32xi1> to vector<1x32xi1>
    %518 = vector.broadcast %517 : vector<1x32xi1> to vector<16x32xi1>
    %519 = arith.select %518, %511, %512 : vector<16x32xi1>, vector<16x32xf32>
    %520 = arith.addf %510, %519 : vector<16x32xf32>
    %c1_i32_149 = arith.constant 1 : i32
    %521 = tpu.dynamic_rotate %317 by %c1_i32_149 dim 0 : vector<16x32xf32>, i32 -> vector<16x32xf32>
    %522 = arith.mulf %520, %521 : vector<16x32xf32>
    %523 = arith.addf %494, %522 : vector<16x32xf32>
    %c2_i32_150 = arith.constant 2 : i32
    %524 = vector.broadcast %c2_i32_150 : i32 to vector<1x32xi32>
    %525 = arith.cmpi eq, %16, %524 : vector<1x32xi32>
    %cst_151 = arith.constant 0.000000e+00 : f32
    %526 = vector.shape_cast %525 : vector<1x32xi1> to vector<1x32xi1>
    %527 = vector.broadcast %526 : vector<1x32xi1> to vector<16x32xi1>
    %528 = vector.broadcast %cst_151 : f32 to vector<16x32xf32>
    %529 = arith.select %527, %465, %528 : vector<16x32xi1>, vector<16x32xf32>
    %c31_i32_152 = arith.constant 31 : i32
    %530 = tpu.dynamic_rotate %529 by %c31_i32_152 dim 1 : vector<16x32xf32>, i32 -> vector<16x32xf32>
    %c1_i32_153 = arith.constant 1 : i32
    %531 = tpu.dynamic_rotate %529 by %c1_i32_153 dim 1 : vector<16x32xf32>, i32 -> vector<16x32xf32>
    %c1_i32_154 = arith.constant 1 : i32
    %532 = vector.broadcast %c1_i32_154 : i32 to vector<1x32xi32>
    %533 = arith.andi %16, %532 : vector<1x32xi32>
    %c0_i32_155 = arith.constant 0 : i32
    %534 = vector.broadcast %c0_i32_155 : i32 to vector<1x32xi32>
    %535 = arith.cmpi eq, %533, %534 : vector<1x32xi32>
    %536 = vector.shape_cast %535 : vector<1x32xi1> to vector<1x32xi1>
    %537 = vector.broadcast %536 : vector<1x32xi1> to vector<16x32xi1>
    %538 = arith.select %537, %530, %531 : vector<16x32xi1>, vector<16x32xf32>
    %539 = arith.addf %529, %538 : vector<16x32xf32>
    %c30_i32_156 = arith.constant 30 : i32
    %540 = tpu.dynamic_rotate %539 by %c30_i32_156 dim 1 : vector<16x32xf32>, i32 -> vector<16x32xf32>
    %c2_i32_157 = arith.constant 2 : i32
    %541 = tpu.dynamic_rotate %539 by %c2_i32_157 dim 1 : vector<16x32xf32>, i32 -> vector<16x32xf32>
    %c2_i32_158 = arith.constant 2 : i32
    %542 = vector.broadcast %c2_i32_158 : i32 to vector<1x32xi32>
    %543 = arith.andi %16, %542 : vector<1x32xi32>
    %c0_i32_159 = arith.constant 0 : i32
    %544 = vector.broadcast %c0_i32_159 : i32 to vector<1x32xi32>
    %545 = arith.cmpi eq, %543, %544 : vector<1x32xi32>
    %546 = vector.shape_cast %545 : vector<1x32xi1> to vector<1x32xi1>
    %547 = vector.broadcast %546 : vector<1x32xi1> to vector<16x32xi1>
    %548 = arith.select %547, %540, %541 : vector<16x32xi1>, vector<16x32xf32>
    %549 = arith.addf %539, %548 : vector<16x32xf32>
    %c2_i32_160 = arith.constant 2 : i32
    %550 = tpu.dynamic_rotate %317 by %c2_i32_160 dim 0 : vector<16x32xf32>, i32 -> vector<16x32xf32>
    %551 = arith.mulf %549, %550 : vector<16x32xf32>
    %552 = arith.addf %523, %551 : vector<16x32xf32>
    %c3_i32_161 = arith.constant 3 : i32
    %553 = vector.broadcast %c3_i32_161 : i32 to vector<1x32xi32>
    %554 = arith.cmpi eq, %16, %553 : vector<1x32xi32>
    %cst_162 = arith.constant 0.000000e+00 : f32
    %555 = vector.shape_cast %554 : vector<1x32xi1> to vector<1x32xi1>
    %556 = vector.broadcast %555 : vector<1x32xi1> to vector<16x32xi1>
    %557 = vector.broadcast %cst_162 : f32 to vector<16x32xf32>
    %558 = arith.select %556, %465, %557 : vector<16x32xi1>, vector<16x32xf32>
    %c31_i32_163 = arith.constant 31 : i32
    %559 = tpu.dynamic_rotate %558 by %c31_i32_163 dim 1 : vector<16x32xf32>, i32 -> vector<16x32xf32>
    %c1_i32_164 = arith.constant 1 : i32
    %560 = tpu.dynamic_rotate %558 by %c1_i32_164 dim 1 : vector<16x32xf32>, i32 -> vector<16x32xf32>
    %c1_i32_165 = arith.constant 1 : i32
    %561 = vector.broadcast %c1_i32_165 : i32 to vector<1x32xi32>
    %562 = arith.andi %16, %561 : vector<1x32xi32>
    %c0_i32_166 = arith.constant 0 : i32
    %563 = vector.broadcast %c0_i32_166 : i32 to vector<1x32xi32>
    %564 = arith.cmpi eq, %562, %563 : vector<1x32xi32>
    %565 = vector.shape_cast %564 : vector<1x32xi1> to vector<1x32xi1>
    %566 = vector.broadcast %565 : vector<1x32xi1> to vector<16x32xi1>
    %567 = arith.select %566, %559, %560 : vector<16x32xi1>, vector<16x32xf32>
    %568 = arith.addf %558, %567 : vector<16x32xf32>
    %c30_i32_167 = arith.constant 30 : i32
    %569 = tpu.dynamic_rotate %568 by %c30_i32_167 dim 1 : vector<16x32xf32>, i32 -> vector<16x32xf32>
    %c2_i32_168 = arith.constant 2 : i32
    %570 = tpu.dynamic_rotate %568 by %c2_i32_168 dim 1 : vector<16x32xf32>, i32 -> vector<16x32xf32>
    %c2_i32_169 = arith.constant 2 : i32
    %571 = vector.broadcast %c2_i32_169 : i32 to vector<1x32xi32>
    %572 = arith.andi %16, %571 : vector<1x32xi32>
    %c0_i32_170 = arith.constant 0 : i32
    %573 = vector.broadcast %c0_i32_170 : i32 to vector<1x32xi32>
    %574 = arith.cmpi eq, %572, %573 : vector<1x32xi32>
    %575 = vector.shape_cast %574 : vector<1x32xi1> to vector<1x32xi1>
    %576 = vector.broadcast %575 : vector<1x32xi1> to vector<16x32xi1>
    %577 = arith.select %576, %569, %570 : vector<16x32xi1>, vector<16x32xf32>
    %578 = arith.addf %568, %577 : vector<16x32xf32>
    %c3_i32_171 = arith.constant 3 : i32
    %579 = tpu.dynamic_rotate %317 by %c3_i32_171 dim 0 : vector<16x32xf32>, i32 -> vector<16x32xf32>
    %580 = arith.mulf %578, %579 : vector<16x32xf32>
    %581 = arith.addf %552, %580 : vector<16x32xf32>
    %582 = arith.addf %315, %581 : vector<16x32xf32>
    %cst_172 = arith.constant dense<0.000000e+00> : vector<16xf32>
    %583 = vector.multi_reduction <add>, %582, %cst_172 [1] : vector<16x32xf32> to vector<16xf32>
    %584 = vector.shape_cast %583 : vector<16xf32> to vector<16x1xf32>
    %cst_173 = arith.constant 3.200000e+01 : f32
    %585 = vector.broadcast %cst_173 : f32 to vector<16x1xf32>
    %586 = arith.divf %584, %585 : vector<16x1xf32>
    %587 = vector.broadcast %586 : vector<16x1xf32> to vector<16x32xf32>
    %588 = arith.subf %582, %587 : vector<16x32xf32>
    %589 = arith.mulf %588, %588 : vector<16x32xf32>
    %cst_174 = arith.constant dense<0.000000e+00> : vector<16xf32>
    %590 = vector.multi_reduction <add>, %589, %cst_174 [1] : vector<16x32xf32> to vector<16xf32>
    %591 = vector.shape_cast %590 : vector<16xf32> to vector<16x1xf32>
    %cst_175 = arith.constant 3.200000e+01 : f32
    %592 = vector.broadcast %cst_175 : f32 to vector<16x1xf32>
    %593 = arith.divf %591, %592 : vector<16x1xf32>
    %cst_176 = arith.constant 9.99999974E-6 : f32
    %594 = vector.broadcast %cst_176 : f32 to vector<16x1xf32>
    %595 = arith.addf %593, %594 : vector<16x1xf32>
    %596 = math.rsqrt %595 : vector<16x1xf32>
    %597 = vector.broadcast %596 : vector<16x1xf32> to vector<16x32xf32>
    %598 = arith.mulf %588, %597 : vector<16x32xf32>
    %599 = vector.broadcast %20 : vector<1x32xf32> to vector<16x32xf32>
    %600 = arith.mulf %598, %599 : vector<16x32xf32>
    %601 = vector.broadcast %21 : vector<1x32xf32> to vector<16x32xf32>
    %602 = arith.addf %600, %601 : vector<16x32xf32>
    %c0_177 = arith.constant 0 : index
    %c0_178 = arith.constant 0 : index
    %603 = vector.load %arg4[%c0_177, %c0_178] : memref<32x128xf32, #tpu.memory_space<vmem>>, vector<32x128xf32>
    %cst_179 = arith.constant dense<0.000000e+00> : vector<16x128xf32>
    %604 = tpu.matmul %602, %603, %cst_179 {dimension_numbers = #tpu.dot_dimension_numbers<[1], [0], [0], [1], [0, 0, 1, 1], [], []>} : vector<16x32xf32>, vector<32x128xf32>, vector<16x128xf32> -> vector<16x128xf32>
    %c0_180 = arith.constant 0 : index
    %c0_181 = arith.constant 0 : index
    %605 = vector.load %arg5[%c0_180, %c0_181] : memref<1x128xf32, #tpu.memory_space<vmem>>, vector<1x128xf32>
    %606 = vector.broadcast %605 : vector<1x128xf32> to vector<16x128xf32>
    %607 = arith.addf %604, %606 : vector<16x128xf32>
    %cst_182 = arith.constant 0.000000e+00 : f32
    %608 = vector.broadcast %cst_182 : f32 to vector<16x128xf32>
    %609 = arith.maximumf %607, %608 : vector<16x128xf32>
    %c0_183 = arith.constant 0 : index
    %c0_184 = arith.constant 0 : index
    %610 = vector.load %arg6[%c0_183, %c0_184] : memref<128x32xf32, #tpu.memory_space<vmem>>, vector<128x32xf32>
    %cst_185 = arith.constant dense<0.000000e+00> : vector<16x32xf32>
    %611 = tpu.matmul %609, %610, %cst_185 {dimension_numbers = #tpu.dot_dimension_numbers<[1], [0], [0], [1], [0, 0, 1, 1], [], []>} : vector<16x128xf32>, vector<128x32xf32>, vector<16x32xf32> -> vector<16x32xf32>
    %c0_186 = arith.constant 0 : index
    %c0_187 = arith.constant 0 : index
    %612 = vector.load %arg7[%c0_186, %c0_187] : memref<1x32xf32, #tpu.memory_space<vmem>>, vector<1x32xf32>
    %613 = vector.broadcast %612 : vector<1x32xf32> to vector<16x32xf32>
    %614 = arith.addf %611, %613 : vector<16x32xf32>
    %615 = arith.addf %602, %614 : vector<16x32xf32>
    %cst_188 = arith.constant dense<0.000000e+00> : vector<16xf32>
    %616 = vector.multi_reduction <add>, %615, %cst_188 [1] : vector<16x32xf32> to vector<16xf32>
    %617 = vector.shape_cast %616 : vector<16xf32> to vector<16x1xf32>
    %cst_189 = arith.constant 3.200000e+01 : f32
    %618 = vector.broadcast %cst_189 : f32 to vector<16x1xf32>
    %619 = arith.divf %617, %618 : vector<16x1xf32>
    %620 = vector.broadcast %619 : vector<16x1xf32> to vector<16x32xf32>
    %621 = arith.subf %615, %620 : vector<16x32xf32>
    %622 = arith.mulf %621, %621 : vector<16x32xf32>
    %cst_190 = arith.constant dense<0.000000e+00> : vector<16xf32>
    %623 = vector.multi_reduction <add>, %622, %cst_190 [1] : vector<16x32xf32> to vector<16xf32>
    %624 = vector.shape_cast %623 : vector<16xf32> to vector<16x1xf32>
    %cst_191 = arith.constant 3.200000e+01 : f32
    %625 = vector.broadcast %cst_191 : f32 to vector<16x1xf32>
    %626 = arith.divf %624, %625 : vector<16x1xf32>
    %cst_192 = arith.constant 9.99999974E-6 : f32
    %627 = vector.broadcast %cst_192 : f32 to vector<16x1xf32>
    %628 = arith.addf %626, %627 : vector<16x1xf32>
    %629 = math.rsqrt %628 : vector<16x1xf32>
    %630 = vector.broadcast %629 : vector<16x1xf32> to vector<16x32xf32>
    %631 = arith.mulf %621, %630 : vector<16x32xf32>
    %632 = vector.broadcast %22 : vector<1x32xf32> to vector<16x32xf32>
    %633 = arith.mulf %631, %632 : vector<16x32xf32>
    %634 = vector.broadcast %23 : vector<1x32xf32> to vector<16x32xf32>
    %635 = arith.addf %633, %634 : vector<16x32xf32>
    %636 = arith.addf %29, %635 : vector<16x32xf32>
    %cst_193 = arith.constant dense<0.000000e+00> : vector<16x32xf32>
    %637 = tpu.matmul %28, %636, %cst_193 {dimension_numbers = #tpu.dot_dimension_numbers<[1], [0], [0], [1], [0, 0, 1, 1], [], []>} : vector<16x16xf32>, vector<16x32xf32>, vector<16x32xf32> -> vector<16x32xf32>
    %638 = arith.addf %635, %637 : vector<16x32xf32>
    %cst_194 = arith.constant dense<0.000000e+00> : vector<16xf32>
    %639 = vector.multi_reduction <add>, %638, %cst_194 [1] : vector<16x32xf32> to vector<16xf32>
    %640 = vector.shape_cast %639 : vector<16xf32> to vector<16x1xf32>
    %cst_195 = arith.constant 3.200000e+01 : f32
    %641 = vector.broadcast %cst_195 : f32 to vector<16x1xf32>
    %642 = arith.divf %640, %641 : vector<16x1xf32>
    %643 = vector.broadcast %642 : vector<16x1xf32> to vector<16x32xf32>
    %644 = arith.subf %638, %643 : vector<16x32xf32>
    %645 = arith.mulf %644, %644 : vector<16x32xf32>
    %cst_196 = arith.constant dense<0.000000e+00> : vector<16xf32>
    %646 = vector.multi_reduction <add>, %645, %cst_196 [1] : vector<16x32xf32> to vector<16xf32>
    %647 = vector.shape_cast %646 : vector<16xf32> to vector<16x1xf32>
    %cst_197 = arith.constant 3.200000e+01 : f32
    %648 = vector.broadcast %cst_197 : f32 to vector<16x1xf32>
    %649 = arith.divf %647, %648 : vector<16x1xf32>
    %cst_198 = arith.constant 9.99999974E-6 : f32
    %650 = vector.broadcast %cst_198 : f32 to vector<16x1xf32>
    %651 = arith.addf %649, %650 : vector<16x1xf32>
    %652 = math.rsqrt %651 : vector<16x1xf32>
    %653 = vector.broadcast %652 : vector<16x1xf32> to vector<16x32xf32>
    %654 = arith.mulf %644, %653 : vector<16x32xf32>
    %655 = vector.broadcast %24 : vector<1x32xf32> to vector<16x32xf32>
    %656 = arith.mulf %654, %655 : vector<16x32xf32>
    %657 = vector.broadcast %25 : vector<1x32xf32> to vector<16x32xf32>
    %658 = arith.addf %656, %657 : vector<16x32xf32>
    %c0_199 = arith.constant 0 : index
    %c0_200 = arith.constant 0 : index
    %c0_201 = arith.constant 0 : index
    %659 = vector.load %arg9[%c0_199, %c0_200, %c0_201] : memref<1x16x32xf32, #tpu.memory_space<vmem>>, vector<1x16x32xf32>
    %660 = vector.shape_cast %659 : vector<1x16x32xf32> to vector<16x32xf32>
    %661 = vector.shape_cast %658 : vector<16x32xf32> to vector<1x16x32xf32>
    tpu.vector_store %arg9[%c0_199, %c0_200, %c0_201], %661 {strides = array<i32>} : memref<1x16x32xf32, #tpu.memory_space<vmem>>, vector<1x16x32xf32>,
    return
  }
  func.func @transform_0(%arg0: i32) -> (i32, i32, i32) {
    %c0_i32 = arith.constant 0 : i32
    %c0_i32_0 = arith.constant 0 : i32
    %c0_i32_1 = arith.constant 0 : i32
    return %arg0, %c0_i32, %c0_i32_0 : i32, i32, i32
  }
  func.func @transform_1(%arg0: i32) -> (i32, i32, i32) {
    %c0_i32 = arith.constant 0 : i32
    %c0_i32_0 = arith.constant 0 : i32
    %c0_i32_1 = arith.constant 0 : i32
    return %arg0, %c0_i32, %c0_i32_0 : i32, i32, i32
  }
  func.func @transform_2(%arg0: i32) -> (i32, i32) {
    %c0_i32 = arith.constant 0 : i32
    %c0_i32_0 = arith.constant 0 : i32
    %c0_i32_1 = arith.constant 0 : i32
    return %c0_i32, %c0_i32_0 : i32, i32
  }
  func.func @transform_3(%arg0: i32) -> (i32, i32) {
    %c0_i32 = arith.constant 0 : i32
    %c0_i32_0 = arith.constant 0 : i32
    %c0_i32_1 = arith.constant 0 : i32
    return %c0_i32, %c0_i32_0 : i32, i32
  }
  func.func @transform_4(%arg0: i32) -> (i32, i32) {
    %c0_i32 = arith.constant 0 : i32
    %c0_i32_0 = arith.constant 0 : i32
    %c0_i32_1 = arith.constant 0 : i32
    return %c0_i32, %c0_i32_0 : i32, i32
  }
  func.func @transform_5(%arg0: i32) -> (i32, i32) {
    %c0_i32 = arith.constant 0 : i32
    %c0_i32_0 = arith.constant 0 : i32
    %c0_i32_1 = arith.constant 0 : i32
    return %c0_i32, %c0_i32_0 : i32, i32
  }
  func.func @transform_6(%arg0: i32) -> (i32, i32) {
    %c0_i32 = arith.constant 0 : i32
    %c0_i32_0 = arith.constant 0 : i32
    %c0_i32_1 = arith.constant 0 : i32
    return %c0_i32, %c0_i32_0 : i32, i32
  }
  func.func @transform_7(%arg0: i32) -> (i32, i32) {
    %c0_i32 = arith.constant 0 : i32
    %c0_i32_0 = arith.constant 0 : i32
    %c0_i32_1 = arith.constant 0 : i32
    return %c0_i32, %c0_i32_0 : i32, i32
  }
  func.func @transform_8(%arg0: i32) -> (i32, i32, i32) {
    %c0_i32 = arith.constant 0 : i32
    %c0_i32_0 = arith.constant 0 : i32
    %c0_i32_1 = arith.constant 0 : i32
    return %arg0, %c0_i32, %c0_i32_0 : i32, i32, i32
  }
}

</mosaic_0001>

<llo_original>
// kernel: tpu_custom_call.1
$region0: #{tpu_custom_call.1}
  #allocation0 [shape = 'u32[]', space=smem, size = 0x4, offset = 0x4, fixed_abs, tag = 'smem constant byte address 0x4 - core index']
  #allocation1 [shape = 'u32[144,128]{1,0:T(1,128)}', space=vmem, size = 0x12000, scoped, tag = 'internal scratch']
  %s0 = inlined_call_operand.vmem [shape: f32[2,16,32], index: 0, kind: input, shape index: {}]
  %s1 = inlined_call_operand.vmem [shape: f32[2,16,32], index: 1, kind: input, shape index: {}]
  %s2 = inlined_call_operand.vmem [shape: f32[16,16], index: 2, kind: input, shape index: {}]
  %s3 = inlined_call_operand.vmem [shape: f32[32,128], index: 3, kind: input, shape index: {}]
  %s4 = inlined_call_operand.vmem [shape: f32[1,128], index: 4, kind: input, shape index: {}]
  %s5 = inlined_call_operand.vmem [shape: f32[128,32], index: 5, kind: input, shape index: {}]
  %s6 = inlined_call_operand.vmem [shape: f32[1,32], index: 6, kind: input, shape index: {}]
  %s7 = inlined_call_operand.vmem [shape: f32[8,32], index: 7, kind: input, shape index: {}]
  %s8 = inlined_call_operand.hbm [shape: f32[2,16,32], index: 8, kind: output, shape index: {}]
  %s9 = sld [smem:[#allocation0]]
  $region65: #{tpu_custom_call.1} parent=0
    _
  %s11 = ssub.s32 1, %s9
  %s12 = scalar_select 0, %s11, %s9
  $region1: #{tpu_custom_call.1} parent=0
    #allocation2 [shape = 'u8[16384]{0}', space=vmem, size = 0x4000, scoped, tag = 'output window, operand 0']
    #allocation3 [shape = 's32[2]{0}', space=sflag, size = 0x8, scoped, tag = 'scoped memory for tpu_custom_call.1']
    %13 = vsyncpa [#allocation3], 0
    %s14 = scalar_lea.sflag [#allocation3], 1
    %15 = vsyncpa %s14, 0
    loop: start=0, step=1, limit=4
    $region2: #{tpu_custom_call.1} parent=1 // loop_pre_header
      _
    $region3: #{tpu_custom_call.1} parent=1 // loop_header
      %s17 = sphi 0, %s21
      %p18 = scmp.ge.s32.totalorder %s17, 4
      %s27 = sphi 0, %s29
      %s30 = sphi 0, %s27
      %s31 = sphi 0, %s30
      %s47 = sphi 0, %s31
      %s53 = sphi 0, %s55
      %s56 = sphi 0, %s53
      %s57 = sphi 0, %s56
      %s73 = sphi 0, %s57
      %s77 = sphi 0, %s77
      %s79 = sphi 0, %s77
      %s80 = sphi 0, %s79
      %s94 = sphi 0, %s80
      %s98 = sphi 0, %s98
      %s100 = sphi 0, %s98
      %s101 = sphi 0, %s100
      %s115 = sphi 0, %s101
      %s119 = sphi 0, %s119
      %s121 = sphi 0, %s119
      %s122 = sphi 0, %s121
      %s136 = sphi 0, %s122
      %s140 = sphi 0, %s140
      %s142 = sphi 0, %s140
      %s143 = sphi 0, %s142
      %s157 = sphi 0, %s143
      %s161 = sphi 0, %s161
      %s163 = sphi 0, %s161
      %s164 = sphi 0, %s163
      %s178 = sphi 0, %s164
      %s182 = sphi 0, %s182
      %s184 = sphi 0, %s182
      %s185 = sphi 0, %s184
      %s199 = sphi 0, %s185
      %s205 = sphi 0, %s207
      %s208 = sphi 0, %s205
      %s209 = sphi 0, %s208
      %s225 = sphi 0, %s209
    $region4: #{tpu_custom_call.1} parent=1 // loop_header_branch
      %20 = sbr.rel (%p18) target = $region8
    $region5: #{tpu_custom_call.1} parent=1 // loop_body
      %s22 = ssub.s32 %s17, 1
      %s23 = ssub.s32 %s17, 2
      %s24 = sadd.s32 %s17, 1
      %s25 = ssub.s32 %s17, %s24
      %p26 = scmp.eq.s32.totalorder %s25, 0
      %s28 = sadd.s32 %s27, 1
      %s29 = scalar_select %p26, %s27, %s28
      %p32 = pneg %p26
      %p33 = scmp.eq.s32.totalorder %s17, 1
      %p34 = por %p32, %p33
      %p35 = scmp.ne.s32.totalorder %s27, %s30
      %p36 = scmp.eq.s32.totalorder %s17, 0
      %p37 = por %p35, %p36
      %p38 = scmp.ne.s32.totalorder %s27, %s30
      %p39 = scmp.eq.s32.totalorder %s22, 1
      %p40 = por %p38, %p39
      %p41 = scmp.ne.s32.totalorder %s30, %s31
      %p42 = scmp.eq.s32.totalorder %s22, 0
      %p43 = por %p41, %p42
      %p44 = scmp.ne.s32.totalorder %s30, %s31
      %p45 = scmp.eq.s32.totalorder %s23, 1
      %p46 = por %p44, %p45
      %p48 = scmp.ne.s32.totalorder %s31, %s47
      %p49 = scmp.eq.s32.totalorder %s23, 0
      %p50 = por %p48, %p49
      %s51 = ssub.s32 %s17, %s24
      %p52 = scmp.eq.s32.totalorder %s51, 0
      %s54 = sadd.s32 %s53, 1
      %s55 = scalar_select %p52, %s53, %s54
      %p58 = pneg %p52
      %p59 = scmp.eq.s32.totalorder %s17, 1
      %p60 = por %p58, %p59
      %p61 = scmp.ne.s32.totalorder %s53, %s56
      %p62 = scmp.eq.s32.totalorder %s17, 0
      %p63 = por %p61, %p62
      %p64 = scmp.ne.s32.totalorder %s53, %s56
      %p65 = scmp.eq.s32.totalorder %s22, 1
      %p66 = por %p64, %p65
      %p67 = scmp.ne.s32.totalorder %s56, %s57
      %p68 = scmp.eq.s32.totalorder %s22, 0
      %p69 = por %p67, %p68
      %p70 = scmp.ne.s32.totalorder %s56, %s57
      %p71 = scmp.eq.s32.totalorder %s23, 1
      %p72 = por %p70, %p71
      %p74 = scmp.ne.s32.totalorder %s57, %s73
      %p75 = scmp.eq.s32.totalorder %s23, 0
      %p76 = por %p74, %p75
      %s78 = sadd.s32 %s77, 1
      %p81 = scmp.eq.s32.totalorder %s17, 1
      %p82 = scmp.ne.s32.totalorder %s77, %s79
      %p83 = scmp.eq.s32.totalorder %s17, 0
      %p84 = por %p82, %p83
      %p85 = scmp.ne.s32.totalorder %s77, %s79
      %p86 = scmp.eq.s32.totalorder %s22, 1
      %p87 = por %p85, %p86
      %p88 = scmp.ne.s32.totalorder %s79, %s80
      %p89 = scmp.eq.s32.totalorder %s22, 0
      %p90 = por %p88, %p89
      %p91 = scmp.ne.s32.totalorder %s79, %s80
      %p92 = scmp.eq.s32.totalorder %s23, 1
      %p93 = por %p91, %p92
      %p95 = scmp.ne.s32.totalorder %s80, %s94
      %p96 = scmp.eq.s32.totalorder %s23, 0
      %p97 = por %p95, %p96
      %s99 = sadd.s32 %s98, 1
      %p102 = scmp.eq.s32.totalorder %s17, 1
      %p103 = scmp.ne.s32.totalorder %s98, %s100
      %p104 = scmp.eq.s32.totalorder %s17, 0
      %p105 = por %p103, %p104
      %p106 = scmp.ne.s32.totalorder %s98, %s100
      %p107 = scmp.eq.s32.totalorder %s22, 1
      %p108 = por %p106, %p107
      %p109 = scmp.ne.s32.totalorder %s100, %s101
      %p110 = scmp.eq.s32.totalorder %s22, 0
      %p111 = por %p109, %p110
      %p112 = scmp.ne.s32.totalorder %s100, %s101
      %p113 = scmp.eq.s32.totalorder %s23, 1
      %p114 = por %p112, %p113
      %p116 = scmp.ne.s32.totalorder %s101, %s115
      %p117 = scmp.eq.s32.totalorder %s23, 0
      %p118 = por %p116, %p117
      %s120 = sadd.s32 %s119, 1
      %p123 = scmp.eq.s32.totalorder %s17, 1
      %p124 = scmp.ne.s32.totalorder %s119, %s121
      %p125 = scmp.eq.s32.totalorder %s17, 0
      %p126 = por %p124, %p125
      %p127 = scmp.ne.s32.totalorder %s119, %s121
      %p128 = scmp.eq.s32.totalorder %s22, 1
      %p129 = por %p127, %p128
      %p130 = scmp.ne.s32.totalorder %s121, %s122
      %p131 = scmp.eq.s32.totalorder %s22, 0
      %p132 = por %p130, %p131
      %p133 = scmp.ne.s32.totalorder %s121, %s122
      %p134 = scmp.eq.s32.totalorder %s23, 1
      %p135 = por %p133, %p134
      %p137 = scmp.ne.s32.totalorder %s122, %s136
      %p138 = scmp.eq.s32.totalorder %s23, 0
      %p139 = por %p137, %p138
      %s141 = sadd.s32 %s140, 1
      %p144 = scmp.eq.s32.totalorder %s17, 1
      %p145 = scmp.ne.s32.totalorder %s140, %s142
      %p146 = scmp.eq.s32.totalorder %s17, 0
      %p147 = por %p145, %p146
      %p148 = scmp.ne.s32.totalorder %s140, %s142
      %p149 = scmp.eq.s32.totalorder %s22, 1
      %p150 = por %p148, %p149
      %p151 = scmp.ne.s32.totalorder %s142, %s143
      %p152 = scmp.eq.s32.totalorder %s22, 0
      %p153 = por %p151, %p152
      %p154 = scmp.ne.s32.totalorder %s142, %s143
      %p155 = scmp.eq.s32.totalorder %s23, 1
      %p156 = por %p154, %p155
      %p158 = scmp.ne.s32.totalorder %s143, %s157
      %p159 = scmp.eq.s32.totalorder %s23, 0
      %p160 = por %p158, %p159
      %s162 = sadd.s32 %s161, 1
      %p165 = scmp.eq.s32.totalorder %s17, 1
      %p166 = scmp.ne.s32.totalorder %s161, %s163
      %p167 = scmp.eq.s32.totalorder %s17, 0
      %p168 = por %p166, %p167
      %p169 = scmp.ne.s32.totalorder %s161, %s163
      %p170 = scmp.eq.s32.totalorder %s22, 1
      %p171 = por %p169, %p170
      %p172 = scmp.ne.s32.totalorder %s163, %s164
      %p173 = scmp.eq.s32.totalorder %s22, 0
      %p174 = por %p172, %p173
      %p175 = scmp.ne.s32.totalorder %s163, %s164
      %p176 = scmp.eq.s32.totalorder %s23, 1
      %p177 = por %p175, %p176
      %p179 = scmp.ne.s32.totalorder %s164, %s178
      %p180 = scmp.eq.s32.totalorder %s23, 0
      %p181 = por %p179, %p180
      %s183 = sadd.s32 %s182, 1
      %p186 = scmp.eq.s32.totalorder %s17, 1
      %p187 = scmp.ne.s32.totalorder %s182, %s184
      %p188 = scmp.eq.s32.totalorder %s17, 0
      %p189 = por %p187, %p188
      %p190 = scmp.ne.s32.totalorder %s182, %s184
      %p191 = scmp.eq.s32.totalorder %s22, 1
      %p192 = por %p190, %p191
      %p193 = scmp.ne.s32.totalorder %s184, %s185
      %p194 = scmp.eq.s32.totalorder %s22, 0
      %p195 = por %p193, %p194
      %p196 = scmp.ne.s32.totalorder %s184, %s185
      %p197 = scmp.eq.s32.totalorder %s23, 1
      %p198 = por %p196, %p197
      %p200 = scmp.ne.s32.totalorder %s185, %s199
      %p201 = scmp.eq.s32.totalorder %s23, 0
      %p202 = por %p200, %p201
      %s203 = ssub.s32 %s17, %s24
      %p204 = scmp.eq.s32.totalorder %s203, 0
      %s206 = sadd.s32 %s205, 1
      %s207 = scalar_select %p204, %s205, %s206
      %p210 = pneg %p204
      %p211 = scmp.eq.s32.totalorder %s17, 1
      %p212 = por %p210, %p211
      %p213 = scmp.ne.s32.totalorder %s205, %s208
      %p214 = scmp.eq.s32.totalorder %s17, 0
      %p215 = por %p213, %p214
      %p216 = scmp.ne.s32.totalorder %s205, %s208
      %p217 = scmp.eq.s32.totalorder %s22, 1
      %p218 = por %p216, %p217
      %p219 = scmp.ne.s32.totalorder %s208, %s209
      %p220 = scmp.eq.s32.totalorder %s22, 0
      %p221 = por %p219, %p220
      %p222 = scmp.ne.s32.totalorder %s208, %s209
      %p223 = scmp.eq.s32.totalorder %s23, 1
      %p224 = por %p222, %p223
      %p226 = scmp.ne.s32.totalorder %s209, %s225
      %p227 = scmp.eq.s32.totalorder %s23, 0
      %p228 = por %p226, %p227
      %p229 = scmp.le.s32.totalorder 1, %s17
      %p230 = scmp.lt.s32.totalorder %s17, 3
      %p231 = pnand %p229, %p230
      %p232 = pneg %p231
      // Predicated region
      $region9: #{tpu_custom_call.1} parent=5 // pred_check
        _
      $region10: #{tpu_custom_call.1} parent=5 // pred_check_branch
        %234 = sbr.rel (%p231) target = $region12
      $region11: #{tpu_custom_call.1} parent=5 // pred_region
        %s235 = ssub.s32 %s17, 1
        // Predicated region
        $region13: #{tpu_custom_call.1} parent=11 // pred_check
          %p236 = pneg %p90
        $region14: #{tpu_custom_call.1} parent=11 // pred_check_branch
          %238 = sbr.rel (%p236) target = $region16
        $region15: #{tpu_custom_call.1} parent=11 // pred_region
          _
        $region16: #{tpu_custom_call.1} parent=11 // pred_fallthru
          _
        // Predicated region
        $region17: #{tpu_custom_call.1} parent=11 // pred_check
          %p239 = pneg %p111
        $region18: #{tpu_custom_call.1} parent=11 // pred_check_branch
          %241 = sbr.rel (%p239) target = $region20
        $region19: #{tpu_custom_call.1} parent=11 // pred_region
          _
        $region20: #{tpu_custom_call.1} parent=11 // pred_fallthru
          _
        // Predicated region
        $region21: #{tpu_custom_call.1} parent=11 // pred_check
          %p242 = pneg %p132
        $region22: #{tpu_custom_call.1} parent=11 // pred_check_branch
          %244 = sbr.rel (%p242) target = $region24
        $region23: #{tpu_custom_call.1} parent=11 // pred_region
          _
        $region24: #{tpu_custom_call.1} parent=11 // pred_fallthru
          _
        // Predicated region
        $region25: #{tpu_custom_call.1} parent=11 // pred_check
          %p245 = pneg %p153
        $region26: #{tpu_custom_call.1} parent=11 // pred_check_branch
          %247 = sbr.rel (%p245) target = $region28
        $region27: #{tpu_custom_call.1} parent=11 // pred_region
          _
        $region28: #{tpu_custom_call.1} parent=11 // pred_fallthru
          _
        // Predicated region
        $region29: #{tpu_custom_call.1} parent=11 // pred_check
          %p248 = pneg %p174
        $region30: #{tpu_custom_call.1} parent=11 // pred_check_branch
          %250 = sbr.rel (%p248) target = $region32
        $region31: #{tpu_custom_call.1} parent=11 // pred_region
          _
        $region32: #{tpu_custom_call.1} parent=11 // pred_fallthru
          _
        // Predicated region
        $region33: #{tpu_custom_call.1} parent=11 // pred_check
          %p251 = pneg %p195
        $region34: #{tpu_custom_call.1} parent=11 // pred_check_branch
          %253 = sbr.rel (%p251) target = $region36
        $region35: #{tpu_custom_call.1} parent=11 // pred_region
          _
        $region36: #{tpu_custom_call.1} parent=11 // pred_fallthru
          _
      $region12: #{tpu_custom_call.1} parent=5 // pred_fallthru
        _
      %p254 = scmp.lt.s32.totalorder %s17, 2
      // Predicated region
      $region37: #{tpu_custom_call.1} parent=5 // pred_check
        %p255 = pneg %p254
      $region38: #{tpu_custom_call.1} parent=5 // pred_check_branch
        %257 = sbr.rel (%p255) target = $region40
      $region39: #{tpu_custom_call.1} parent=5 // pred_region
        // Predicated region
        $region41: #{tpu_custom_call.1} parent=39 // pred_check
          %p258 = pneg %p37
        $region42: #{tpu_custom_call.1} parent=39 // pred_check_branch
          %260 = sbr.rel (%p258) target = $region44
        $region43: #{tpu_custom_call.1} parent=39 // pred_region
          %p261 = scmp.lt.s32.totalorder %s17, 1
          %s262 = scalar_select %p261, %s17, 1
          %s263 = smul.addr %s262, 2
          %s264 = smul.addr %s263, 8
          %s265 = scalar_lea.vmem %s0, %s264
        $region44: #{tpu_custom_call.1} parent=39 // pred_fallthru
          _
        // Predicated region
        $region45: #{tpu_custom_call.1} parent=39 // pred_check
          %p266 = pneg %p63
        $region46: #{tpu_custom_call.1} parent=39 // pred_check_branch
          %268 = sbr.rel (%p266) target = $region48
        $region47: #{tpu_custom_call.1} parent=39 // pred_region
          %p269 = scmp.lt.s32.totalorder %s17, 1
          %s270 = scalar_select %p269, %s17, 1
          %s271 = smul.addr %s270, 2
          %s272 = smul.addr %s271, 8
          %s273 = scalar_lea.vmem %s1, %s272
        $region48: #{tpu_custom_call.1} parent=39 // pred_fallthru
          _
      $region40: #{tpu_custom_call.1} parent=5 // pred_fallthru
        _
      %p274 = scmp.le.s32.totalorder 1, %s17
      %p275 = scmp.lt.s32.totalorder %s17, 3
      %p276 = pnand %p274, %p275
      %p277 = pneg %p276
      // Predicated region
      $region49: #{tpu_custom_call.1} parent=5 // pred_check
        _
      $region50: #{tpu_custom_call.1} parent=5 // pred_check_branch
        %279 = sbr.rel (%p276) target = $region52
      $region51: #{tpu_custom_call.1} parent=5 // pred_region
        %s280 = ssub.s32 %s17, 1
        %p281 = scmp.lt.s32.totalorder %s22, 1
        %s282 = scalar_select %p281, %s22, 1
        %s283 = smul.addr %s282, 2
        %s284 = smul.addr %s283, 8
        %s285 = scalar_lea.vmem %s0, %s284
        %p286 = pneg %p43
        %p287 = pneg %p40
        %p288 = scmp.lt.s32.totalorder %s22, 1
        %s289 = scalar_select %p288, %s22, 1
        %s290 = smul.addr %s289, 2
        %s291 = smul.addr %s290, 8
        %s292 = scalar_lea.vmem %s1, %s291
        %p293 = pneg %p69
        %p294 = pneg %p66
        %p295 = pneg %p90
        %p296 = pneg %p87
        %p297 = pneg %p111
        %p298 = pneg %p108
        %p299 = pneg %p132
        %p300 = pneg %p129
        %p301 = pneg %p153
        %p302 = pneg %p150
        %p303 = pneg %p174
        %p304 = pneg %p171
        %p305 = pneg %p195
        %p306 = pneg %p192
        %p307 = pneg %p221
        %p308 = pneg %p218
        %s309 = sand.u32 %s208, 1
        %s310 = scalar_lea.sflag [#allocation3], %s309
        %s311 = sand.u32 %s208, 1
        %s312 = smul.addr %s311, 16
        %s313 = scalar_lea.vmem [#allocation2], %s312
        %p314 = scmp.lt.s32.totalorder %s22, 1
        %s315 = scalar_select %p314, %s22, 1
        %s316 = smul.addr %s315, 2
        %s317 = smul.addr %s316, 8
        %s318 = scalar_lea.vmem %s0, %s317
        %p319 = scmp.lt.s32.totalorder %s22, 1
        %s320 = scalar_select %p319, %s22, 1
        %s321 = smul.addr %s320, 2
        %s322 = smul.addr %s321, 8
        %s323 = scalar_lea.vmem %s1, %s322
        %v324 = vlaneseq
        %v325 = vand.u32 %v324, 127
        %vm326 = vcmp.lt.s32.totalorder %v325, 0
        %v327 = vsub.s32 0, %v325
        %v328 = vsel %vm326, %v327, %v325
        %v329 = vshrl.u32 %v328, 2
        %v330 = vand.u32 %v328, 3
        %v331 = vsub.s32 0, %v330
        %v332 = vsel %vm326, %v331, %v330
        %vm333 = vcmp.ne.s32.totalorder %v332, 0
        %vm334 = vcmp.lt.s32.totalorder %v332, 0
        %vm335 = vmand %vm334, %vm333
        %v336 = vadd.s32 %v332, 4
        %v337 = vsel %vm335, %v336, %v332
        %v338 = vld [vmem:[%s7] sm:$0xff]
        %v339 = vld [vmem:[%s318] sm:$0xff]
        %v340 = vld [vmem:[%s318 + $0x8] sm:$0xff]
        %v341 = vld [vmem:[%s2] sm:$0xff]
        %v342 = vld [vmem:[%s2 + $0x8] sm:$0xff]
        %vm343 = vcmask 130048
        %v345 = vsel %vm343, %v341, 0
        %v348 = vsel %vm343, %v342, 0
        %350 = vmatprep.subr.mxu0 0.0
        %351 = vmatpush1.msra.mxu0 %v339
        %352 = vmatprep.subr.mxu0 0.0
        %353 = vmatpush1.msra.mxu0 %v340
        %354 = vmatprep.subr.mxu0 0.0
        %355 = vmatpush1.msra.mxu0 0.0
        %356 = vmatprep.subr.mxu0 0.0
        %357 = vmatpush1.msra.mxu0 0.0
        %358 = vmatprep.subr.mxu0 0.0
        %359 = vmatpush1.msra.mxu0 0.0
        %360 = vmatprep.subr.mxu0 0.0
        %361 = vmatpush1.msra.mxu0 0.0
        %362 = vmatprep.subr.mxu0 0.0
        %363 = vmatpush1.msra.mxu0 0.0
        %364 = vmatprep.subr.mxu0 0.0
        %365 = vmatpush1.msra.mxu0 0.0
        %366 = vmatprep.subr.mxu0 0.0
        %367 = vmatpush1.msra.mxu0 0.0
        %368 = vmatprep.subr.mxu0 0.0
        %369 = vmatpush1.msra.mxu0 0.0
        %370 = vmatprep.subr.mxu0 0.0
        %371 = vmatpush1.msra.mxu0 0.0
        %372 = vmatprep.subr.mxu0 0.0
        %373 = vmatpush1.msra.mxu0 0.0
        %374 = vmatprep.subr.mxu0 0.0
        %375 = vmatpush1.msra.mxu0 0.0
        %376 = vmatprep.subr.mxu0 0.0
        %377 = vmatpush1.msra.mxu0 0.0
        %378 = vmatprep.subr.mxu0 0.0
        %379 = vmatpush1.msra.mxu0 0.0
        %380 = vmatprep.subr.mxu0 0.0
        %381 = vmatpush1.msra.mxu0 0.0
        %382 = vmatprep.subr.mxu0 0.0
        %383 = vmatpush1.msra.mxu0 0.0
        %384 = vmatprep.subr.mxu0 0.0
        %385 = vmatpush1.msra.mxu0 0.0
        %386 = vmatprep.subr.mxu0 0.0
        %387 = vmatpush1.msra.mxu0 0.0
        %388 = vmatprep.subr.mxu0 0.0
        %389 = vmatpush1.msra.mxu0 0.0
        %390 = vmatprep.subr.mxu0 0.0
        %391 = vmatpush1.msra.mxu0 0.0
        %392 = vmatprep.subr.mxu0 0.0
        %393 = vmatpush1.msra.mxu0 0.0
        %394 = vmatprep.subr.mxu0 0.0
        %395 = vmatpush1.msra.mxu0 0.0
        %396 = vmatprep.subr.mxu0 0.0
        %397 = vmatpush1.msra.mxu0 0.0
        %398 = vmatprep.subr.mxu0 0.0
        %399 = vmatpush1.msra.mxu0 0.0
        %400 = vmatprep.subr.mxu0 0.0
        %401 = vmatpush1.msra.mxu0 0.0
        %402 = vmatprep.subr.mxu0 0.0
        %403 = vmatpush1.msra.mxu0 0.0
        %404 = vmatprep.subr.mxu0 0.0
        %405 = vmatpush1.msra.mxu0 0.0
        %406 = vmatprep.subr.mxu0 0.0
        %407 = vmatpush1.msra.mxu0 0.0
        %408 = vmatprep.subr.mxu0 0.0
        %409 = vmatpush1.msra.mxu0 0.0
        %410 = vmatprep.subr.mxu0 0.0
        %411 = vmatpush1.msra.mxu0 0.0
        %412 = vmatprep.subr.mxu0 0.0
        %413 = vmatpush1.msra.mxu0 0.0
        %414 = vmatprep.mubr.f32.mxu0 0.0
        %415 = vmatmul.mubr.f32.gmra.mrb[0].mxu0 %v345
        %v416 = vpop.f32.mrb[0].mxu0
        %v417 = vadd.f32 0.0, %v416
        %v418 = vpop.f32.mrb[0].mxu0
        %419 = vmatprep.mubr.f32.mxu0 0.0
        %420 = vmatmul.mubr.f32.gmra.mrb[0].mxu0 %v348
        %v421 = vpop.f32.mrb[0].mxu0
        %v422 = vadd.f32 0.0, %v421
        %v423 = vpop.f32.mrb[0].mxu0
        %424 = vdwg.mxu0
        %v425 = vsub.f32 %v339, %v417
        %v426 = vsub.f32 %v340, %v422
        %v427 = vlaneseq
        %v428 = vshrl.u32 %v427, 7
        %v429 = vsub.s32 0, %v428
        %v430 = vrot.slane %v425, %v429
        %v431 = vmul.f32 %v430, %v425
        %v432 = vmul.f32 %v430, %v426
        %v433 = vrot.slane %v425, 1
        %v434 = vrot.slane %v426, 1
        %v435 = vlaneseq
        %v436 = vshrl.u32 %v435, 7
        %vm437 = vcmp.lt.s32.totalorder %v436, 7
        %v438 = vsel %vm437, %v433, %v434
        %v439 = vsel %vm437, %v434, %v433
        %v440 = vlaneseq
        %v441 = vshrl.u32 %v440, 7
        %v442 = vsub.s32 1, %v441
        %v443 = vrot.slane %v425, %v442
        %v444 = vmul.f32 %v443, %v438
        %v445 = vmul.f32 %v443, %v439
        %v446 = vadd.f32 %v431, %v444
        %v447 = vadd.f32 %v432, %v445
        %v448 = vrot.slane %v425, 2
        %v449 = vrot.slane %v426, 2
        %vm450 = vcmp.lt.s32.totalorder %v436, 6
        %v451 = vsel %vm450, %v448, %v449
        %v452 = vsel %vm450, %v449, %v448
        %v453 = vlaneseq
        %v454 = vshrl.u32 %v453, 7
        %v455 = vsub.s32 2, %v454
        %v456 = vrot.slane %v425, %v455
        %v457 = vmul.f32 %v456, %v451
        %v458 = vmul.f32 %v456, %v452
        %v459 = vadd.f32 %v446, %v457
        %v460 = vadd.f32 %v447, %v458
        %v461 = vrot.slane %v425, 3
        %v462 = vrot.slane %v426, 3
        %vm463 = vcmp.lt.s32.totalorder %v436, 5
        %v464 = vsel %vm463, %v461, %v462
        %v465 = vsel %vm463, %v462, %v461
        %v466 = vlaneseq
        %v467 = vshrl.u32 %v466, 7
        %v468 = vsub.s32 3, %v467
        %v469 = vrot.slane %v425, %v468
        %v470 = vmul.f32 %v469, %v464
        %v471 = vmul.f32 %v469, %v465
        %v472 = vadd.f32 %v459, %v470
        %v473 = vadd.f32 %v460, %v471
        %v474 = vrot.slane %v425, 4
        %v475 = vrot.slane %v426, 4
        %vm476 = vcmp.lt.s32.totalorder %v436, 4
        %v477 = vsel %vm476, %v474, %v475
        %v478 = vsel %vm476, %v475, %v474
        %v479 = vlaneseq
        %v480 = vshrl.u32 %v479, 7
        %v481 = vsub.s32 4, %v480
        %v482 = vrot.slane %v425, %v481
        %v483 = vmul.f32 %v482, %v477
        %v484 = vmul.f32 %v482, %v478
        %v485 = vadd.f32 %v472, %v483
        %v486 = vadd.f32 %v473, %v484
        %v487 = vrot.slane %v425, 5
        %v488 = vrot.slane %v426, 5
        %vm489 = vcmp.lt.s32.totalorder %v436, 3
        %v490 = vsel %vm489, %v487, %v488
        %v491 = vsel %vm489, %v488, %v487
        %v492 = vlaneseq
        %v493 = vshrl.u32 %v492, 7
        %v494 = vsub.s32 5, %v493
        %v495 = vrot.slane %v425, %v494
        %v496 = vmul.f32 %v495, %v490
        %v497 = vmul.f32 %v495, %v491
        %v498 = vadd.f32 %v485, %v496
        %v499 = vadd.f32 %v486, %v497
        %v500 = vrot.slane %v425, 6
        %v501 = vrot.slane %v426, 6
        %vm502 = vcmp.lt.s32.totalorder %v436, 2
        %v503 = vsel %vm502, %v500, %v501
        %v504 = vsel %vm502, %v501, %v500
        %v505 = vlaneseq
        %v506 = vshrl.u32 %v505, 7
        %v507 = vsub.s32 6, %v506
        %v508 = vrot.slane %v425, %v507
        %v509 = vmul.f32 %v508, %v503
        %v510 = vmul.f32 %v508, %v504
        %v511 = vadd.f32 %v498, %v509
        %v512 = vadd.f32 %v499, %v510
        %v513 = vrot.slane %v425, 7
        %v514 = vrot.slane %v426, 7
        %vm515 = vcmp.lt.s32.totalorder %v436, 1
        %v516 = vsel %vm515, %v513, %v514
        %v517 = vsel %vm515, %v514, %v513
        %v518 = vlaneseq
        %v519 = vshrl.u32 %v518, 7
        %v520 = vsub.s32 7, %v519
        %v521 = vrot.slane %v425, %v520
        %v522 = vmul.f32 %v521, %v516
        %v523 = vmul.f32 %v521, %v517
        %v524 = vadd.f32 %v511, %v522
        %v525 = vadd.f32 %v512, %v523
        %v526 = vlaneseq
        %v527 = vshrl.u32 %v526, 7
        %v528 = vsub.s32 0, %v527
        %v529 = vrot.slane %v426, %v528
        %v530 = vmul.f32 %v529, %v426
        %v531 = vmul.f32 %v529, %v425
        %v532 = vadd.f32 %v524, %v530
        %v533 = vadd.f32 %v525, %v531
        %v534 = vlaneseq
        %v535 = vshrl.u32 %v534, 7
        %v536 = vsub.s32 1, %v535
        %v537 = vrot.slane %v426, %v536
        %v538 = vmul.f32 %v537, %v439
        %v539 = vmul.f32 %v537, %v438
        %v540 = vadd.f32 %v532, %v538
        %v541 = vadd.f32 %v533, %v539
        %v542 = vlaneseq
        %v543 = vshrl.u32 %v542, 7
        %v544 = vsub.s32 2, %v543
        %v545 = vrot.slane %v426, %v544
        %v546 = vmul.f32 %v545, %v452
        %v547 = vmul.f32 %v545, %v451
        %v548 = vadd.f32 %v540, %v546
        %v549 = vadd.f32 %v541, %v547
        %v550 = vlaneseq
        %v551 = vshrl.u32 %v550, 7
        %v552 = vsub.s32 3, %v551
        %v553 = vrot.slane %v426, %v552
        %v554 = vmul.f32 %v553, %v465
        %v555 = vmul.f32 %v553, %v464
        %v556 = vadd.f32 %v548, %v554
        %v557 = vadd.f32 %v549, %v555
        %v558 = vlaneseq
        %v559 = vshrl.u32 %v558, 7
        %v560 = vsub.s32 4, %v559
        %v561 = vrot.slane %v426, %v560
        %v562 = vmul.f32 %v561, %v478
        %v563 = vmul.f32 %v561, %v477
        %v564 = vadd.f32 %v556, %v562
        %v565 = vadd.f32 %v557, %v563
        %v566 = vlaneseq
        %v567 = vshrl.u32 %v566, 7
        %v568 = vsub.s32 5, %v567
        %v569 = vrot.slane %v426, %v568
        %v570 = vmul.f32 %v569, %v491
        %v571 = vmul.f32 %v569, %v490
        %v572 = vadd.f32 %v564, %v570
        %v573 = vadd.f32 %v565, %v571
        %v574 = vlaneseq
        %v575 = vshrl.u32 %v574, 7
        %v576 = vsub.s32 6, %v575
        %v577 = vrot.slane %v426, %v576
        %v578 = vmul.f32 %v577, %v504
        %v579 = vmul.f32 %v577, %v503
        %v580 = vadd.f32 %v572, %v578
        %v581 = vadd.f32 %v573, %v579
        %v582 = vlaneseq
        %v583 = vshrl.u32 %v582, 7
        %v584 = vsub.s32 7, %v583
        %v585 = vrot.slane %v426, %v584
        %v586 = vmul.f32 %v585, %v517
        %v587 = vmul.f32 %v585, %v516
        %v588 = vadd.f32 %v580, %v586
        %v589 = vadd.f32 %v581, %v587
        %vm590 = vcmask 1047808
        %591 = vrot.lane.b32.xlu0 %v588, 32
        %v592 = vpop.permute.xlu0 %591
        %v593 = vsel %vm590, %v592, %v588
        %594 = vrot.lane.b32.xlu0 %v589, 32
        %v595 = vpop.permute.xlu0 %594
        %v596 = vsel %vm590, %v595, %v589
        %597 = vrot.lane.b32.xlu0 %v593, 32
        %v598 = vpop.permute.xlu0 %597
        %599 = vrot.lane.b32.xlu0 %v596, 32
        %v600 = vpop.permute.xlu0 %599
        %v601 = vsel %vm590, %v598, %v588
        %v602 = vsel %vm590, %v600, %v589
        %v603 = vand.u32 %v337, 1
        %vm604 = vcmp.eq.s32.totalorder %v603, 0
        %v605 = vsel %vm604, 1, 0
        %vm606 = vcmp.eq.s32.totalorder %v605, 1
        %609 = vrot.lane.b32.xlu0 %v601, 127
        %v610 = vpop.permute.xlu0 %609
        %611 = vrot.lane.b32.xlu0 %v602, 127
        %v612 = vpop.permute.xlu0 %611
        %615 = vrot.lane.b32.xlu0 %v601, 97
        %v616 = vpop.permute.xlu0 %615
        %617 = vrot.lane.b32.xlu0 %v602, 97
        %v618 = vpop.permute.xlu0 %617
        %v621 = vsel %vm606, %v610, %v616
        %v622 = vsel %vm606, %v612, %v618
        %v623 = vmax.f32 %v588, %v621
        %v624 = vmax.f32 %v589, %v622
        %625 = vrot.lane.b32.xlu0 %v623, 32
        %v626 = vpop.permute.xlu0 %625
        %v627 = vsel %vm590, %v626, %v623
        %628 = vrot.lane.b32.xlu0 %v624, 32
        %v629 = vpop.permute.xlu0 %628
        %v630 = vsel %vm590, %v629, %v624
        %631 = vrot.lane.b32.xlu0 %v627, 32
        %v632 = vpop.permute.xlu0 %631
        %633 = vrot.lane.b32.xlu0 %v630, 32
        %v634 = vpop.permute.xlu0 %633
        %v635 = vsel %vm590, %v632, %v623
        %v636 = vsel %vm590, %v634, %v624
        %v637 = vand.u32 %v337, 2
        %vm638 = vcmp.eq.s32.totalorder %v637, 0
        %v639 = vsel %vm638, 1, 0
        %vm640 = vcmp.eq.s32.totalorder %v639, 1
        %643 = vrot.lane.b32.xlu0 %v635, 126
        %v644 = vpop.permute.xlu0 %643
        %645 = vrot.lane.b32.xlu0 %v636, 126
        %v646 = vpop.permute.xlu0 %645
        %649 = vrot.lane.b32.xlu0 %v635, 98
        %v650 = vpop.permute.xlu0 %649
        %651 = vrot.lane.b32.xlu0 %v636, 98
        %v652 = vpop.permute.xlu0 %651
        %v655 = vsel %vm640, %v644, %v650
        %v656 = vsel %vm640, %v646, %v652
        %v657 = vmax.f32 %v623, %v655
        %v658 = vmax.f32 %v624, %v656
        %vm659 = vcmp.ge.f32.partialorder %v588, %v657
        %vm660 = vcmp.ge.f32.partialorder %v589, %v658
        %v661 = vsel %vm659, -inf, %v588
        %v662 = vsel %vm660, -inf, %v589
        %663 = vrot.lane.b32.xlu0 %v661, 32
        %v664 = vpop.permute.xlu0 %663
        %v665 = vsel %vm590, %v664, %v661
        %666 = vrot.lane.b32.xlu0 %v662, 32
        %v667 = vpop.permute.xlu0 %666
        %v668 = vsel %vm590, %v667, %v662
        %669 = vrot.lane.b32.xlu0 %v665, 32
        %v670 = vpop.permute.xlu0 %669
        %671 = vrot.lane.b32.xlu0 %v668, 32
        %v672 = vpop.permute.xlu0 %671
        %v673 = vsel %vm590, %v670, %v661
        %v674 = vsel %vm590, %v672, %v662
        %677 = vrot.lane.b32.xlu0 %v673, 127
        %v678 = vpop.permute.xlu0 %677
        %679 = vrot.lane.b32.xlu0 %v674, 127
        %v680 = vpop.permute.xlu0 %679
        %683 = vrot.lane.b32.xlu0 %v673, 97
        %v684 = vpop.permute.xlu0 %683
        %685 = vrot.lane.b32.xlu0 %v674, 97
        %v686 = vpop.permute.xlu0 %685
        %v689 = vsel %vm606, %v678, %v684
        %v690 = vsel %vm606, %v680, %v686
        %v691 = vmax.f32 %v661, %v689
        %v692 = vmax.f32 %v662, %v690
        %693 = vrot.lane.b32.xlu0 %v691, 32
        %v694 = vpop.permute.xlu0 %693
        %v695 = vsel %vm590, %v694, %v691
        %696 = vrot.lane.b32.xlu0 %v692, 32
        %v697 = vpop.permute.xlu0 %696
        %v698 = vsel %vm590, %v697, %v692
        %699 = vrot.lane.b32.xlu0 %v695, 32
        %v700 = vpop.permute.xlu0 %699
        %701 = vrot.lane.b32.xlu0 %v698, 32
        %v702 = vpop.permute.xlu0 %701
        %v703 = vsel %vm590, %v700, %v691
        %v704 = vsel %vm590, %v702, %v692
        %707 = vrot.lane.b32.xlu0 %v703, 126
        %v708 = vpop.permute.xlu0 %707
        %709 = vrot.lane.b32.xlu0 %v704, 126
        %v710 = vpop.permute.xlu0 %709
        %713 = vrot.lane.b32.xlu0 %v703, 98
        %v714 = vpop.permute.xlu0 %713
        %715 = vrot.lane.b32.xlu0 %v704, 98
        %v716 = vpop.permute.xlu0 %715
        %v719 = vsel %vm640, %v708, %v714
        %v720 = vsel %vm640, %v710, %v716
        %v721 = vmax.f32 %v691, %v719
        %v722 = vmax.f32 %v692, %v720
        %vm723 = vcmp.ge.f32.partialorder %v588, %v721
        %vm724 = vcmp.ge.f32.partialorder %v589, %v722
        %v725 = vsub.f32 %v588, %v657
        %v726 = vsub.f32 %v589, %v658
        %v727 = vmul.f32 %v725, 1.442695
        %v728 = vpow.pop %v727
        %v729 = vmul.f32 %v726, 1.442695
        %v730 = vpow.pop %v729
        %v731 = vsel %vm723, %v728, 0.0
        %v732 = vsel %vm724, %v730, 0.0
        %733 = vrot.lane.b32.xlu0 %v731, 32
        %v734 = vpop.permute.xlu0 %733
        %v735 = vsel %vm590, %v734, %v731
        %736 = vrot.lane.b32.xlu0 %v732, 32
        %v737 = vpop.permute.xlu0 %736
        %v738 = vsel %vm590, %v737, %v732
        %739 = vrot.lane.b32.xlu0 %v735, 32
        %v740 = vpop.permute.xlu0 %739
        %741 = vrot.lane.b32.xlu0 %v738, 32
        %v742 = vpop.permute.xlu0 %741
        %v743 = vsel %vm590, %v740, %v731
        %v744 = vsel %vm590, %v742, %v732
        %747 = vrot.lane.b32.xlu0 %v743, 127
        %v748 = vpop.permute.xlu0 %747
        %749 = vrot.lane.b32.xlu0 %v744, 127
        %v750 = vpop.permute.xlu0 %749
        %753 = vrot.lane.b32.xlu0 %v743, 97
        %v754 = vpop.permute.xlu0 %753
        %755 = vrot.lane.b32.xlu0 %v744, 97
        %v756 = vpop.permute.xlu0 %755
        %v759 = vsel %vm606, %v748, %v754
        %v760 = vsel %vm606, %v750, %v756
        %v761 = vadd.f32 %v731, %v759
        %v762 = vadd.f32 %v732, %v760
        %763 = vrot.lane.b32.xlu0 %v761, 32
        %v764 = vpop.permute.xlu0 %763
        %v765 = vsel %vm590, %v764, %v761
        %766 = vrot.lane.b32.xlu0 %v762, 32
        %v767 = vpop.permute.xlu0 %766
        %v768 = vsel %vm590, %v767, %v762
        %769 = vrot.lane.b32.xlu0 %v765, 32
        %v770 = vpop.permute.xlu0 %769
        %771 = vrot.lane.b32.xlu0 %v768, 32
        %v772 = vpop.permute.xlu0 %771
        %v773 = vsel %vm590, %v770, %v761
        %v774 = vsel %vm590, %v772, %v762
        %777 = vrot.lane.b32.xlu0 %v773, 126
        %v778 = vpop.permute.xlu0 %777
        %779 = vrot.lane.b32.xlu0 %v774, 126
        %v780 = vpop.permute.xlu0 %779
        %783 = vrot.lane.b32.xlu0 %v773, 98
        %v784 = vpop.permute.xlu0 %783
        %785 = vrot.lane.b32.xlu0 %v774, 98
        %v786 = vpop.permute.xlu0 %785
        %v789 = vsel %vm640, %v778, %v784
        %v790 = vsel %vm640, %v780, %v786
        %v791 = vadd.f32 %v761, %v789
        %v792 = vadd.f32 %v762, %v790
        %v793 = vrcp.pop %v791
        %v794 = vrcp.pop %v792
        %v795 = vmul.f32 %v731, %v793
        %v796 = vmul.f32 %v732, %v794
        %vm797 = vcmp.eq.s32.totalorder %v337, 0
        %v798 = vsel %vm797, 1, 0
        %vm799 = vcmp.eq.s32.totalorder %v798, 1
        %v800 = vsel %vm799, %v795, 0.0
        %v801 = vsel %vm799, %v796, 0.0
        %802 = vrot.lane.b32.xlu0 %v800, 32
        %v803 = vpop.permute.xlu0 %802
        %v804 = vsel %vm590, %v803, %v800
        %805 = vrot.lane.b32.xlu0 %v801, 32
        %v806 = vpop.permute.xlu0 %805
        %v807 = vsel %vm590, %v806, %v801
        %808 = vrot.lane.b32.xlu0 %v804, 32
        %v809 = vpop.permute.xlu0 %808
        %810 = vrot.lane.b32.xlu0 %v807, 32
        %v811 = vpop.permute.xlu0 %810
        %v812 = vsel %vm590, %v809, %v800
        %v813 = vsel %vm590, %v811, %v801
        %816 = vrot.lane.b32.xlu0 %v812, 127
        %v817 = vpop.permute.xlu0 %816
        %818 = vrot.lane.b32.xlu0 %v813, 127
        %v819 = vpop.permute.xlu0 %818
        %822 = vrot.lane.b32.xlu0 %v812, 97
        %v823 = vpop.permute.xlu0 %822
        %824 = vrot.lane.b32.xlu0 %v813, 97
        %v825 = vpop.permute.xlu0 %824
        %v828 = vsel %vm606, %v817, %v823
        %v829 = vsel %vm606, %v819, %v825
        %v830 = vadd.f32 %v800, %v828
        %v831 = vadd.f32 %v801, %v829
        %832 = vrot.lane.b32.xlu0 %v830, 32
        %v833 = vpop.permute.xlu0 %832
        %v834 = vsel %vm590, %v833, %v830
        %835 = vrot.lane.b32.xlu0 %v831, 32
        %v836 = vpop.permute.xlu0 %835
        %v837 = vsel %vm590, %v836, %v831
        %838 = vrot.lane.b32.xlu0 %v834, 32
        %v839 = vpop.permute.xlu0 %838
        %840 = vrot.lane.b32.xlu0 %v837, 32
        %v841 = vpop.permute.xlu0 %840
        %v842 = vsel %vm590, %v839, %v830
        %v843 = vsel %vm590, %v841, %v831
        %846 = vrot.lane.b32.xlu0 %v842, 126
        %v847 = vpop.permute.xlu0 %846
        %848 = vrot.lane.b32.xlu0 %v843, 126
        %v849 = vpop.permute.xlu0 %848
        %852 = vrot.lane.b32.xlu0 %v842, 98
        %v853 = vpop.permute.xlu0 %852
        %854 = vrot.lane.b32.xlu0 %v843, 98
        %v855 = vpop.permute.xlu0 %854
        %v858 = vsel %vm640, %v847, %v853
        %v859 = vsel %vm640, %v849, %v855
        %v860 = vadd.f32 %v830, %v858
        %v861 = vadd.f32 %v831, %v859
        %v862 = vmul.f32 %v860, %v425
        %v863 = vmul.f32 %v861, %v426
        %v864 = vadd.f32 %v862, 0.0
        %v865 = vadd.f32 %v863, 0.0
        %vm866 = vcmp.eq.s32.totalorder %v337, 1
        %v867 = vsel %vm866, 1, 0
        %vm868 = vcmp.eq.s32.totalorder %v867, 1
        %v869 = vsel %vm868, %v795, 0.0
        %v870 = vsel %vm868, %v796, 0.0
        %871 = vrot.lane.b32.xlu0 %v869, 32
        %v872 = vpop.permute.xlu0 %871
        %v873 = vsel %vm590, %v872, %v869
        %874 = vrot.lane.b32.xlu0 %v870, 32
        %v875 = vpop.permute.xlu0 %874
        %v876 = vsel %vm590, %v875, %v870
        %877 = vrot.lane.b32.xlu0 %v873, 32
        %v878 = vpop.permute.xlu0 %877
        %879 = vrot.lane.b32.xlu0 %v876, 32
        %v880 = vpop.permute.xlu0 %879
        %v881 = vsel %vm590, %v878, %v869
        %v882 = vsel %vm590, %v880, %v870
        %885 = vrot.lane.b32.xlu0 %v881, 127
        %v886 = vpop.permute.xlu0 %885
        %887 = vrot.lane.b32.xlu0 %v882, 127
        %v888 = vpop.permute.xlu0 %887
        %891 = vrot.lane.b32.xlu0 %v881, 97
        %v892 = vpop.permute.xlu0 %891
        %893 = vrot.lane.b32.xlu0 %v882, 97
        %v894 = vpop.permute.xlu0 %893
        %v897 = vsel %vm606, %v886, %v892
        %v898 = vsel %vm606, %v888, %v894
        %v899 = vadd.f32 %v869, %v897
        %v900 = vadd.f32 %v870, %v898
        %901 = vrot.lane.b32.xlu0 %v899, 32
        %v902 = vpop.permute.xlu0 %901
        %v903 = vsel %vm590, %v902, %v899
        %904 = vrot.lane.b32.xlu0 %v900, 32
        %v905 = vpop.permute.xlu0 %904
        %v906 = vsel %vm590, %v905, %v900
        %907 = vrot.lane.b32.xlu0 %v903, 32
        %v908 = vpop.permute.xlu0 %907
        %909 = vrot.lane.b32.xlu0 %v906, 32
        %v910 = vpop.permute.xlu0 %909
        %v911 = vsel %vm590, %v908, %v899
        %v912 = vsel %vm590, %v910, %v900
        %915 = vrot.lane.b32.xlu0 %v911, 126
        %v916 = vpop.permute.xlu0 %915
        %917 = vrot.lane.b32.xlu0 %v912, 126
        %v918 = vpop.permute.xlu0 %917
        %921 = vrot.lane.b32.xlu0 %v911, 98
        %v922 = vpop.permute.xlu0 %921
        %923 = vrot.lane.b32.xlu0 %v912, 98
        %v924 = vpop.permute.xlu0 %923
        %v927 = vsel %vm640, %v916, %v922
        %v928 = vsel %vm640, %v918, %v924
        %v929 = vadd.f32 %v899, %v927
        %v930 = vadd.f32 %v900, %v928
        %v931 = vmul.f32 %v929, %v517
        %v932 = vmul.f32 %v930, %v516
        %v933 = vadd.f32 %v864, %v931
        %v934 = vadd.f32 %v865, %v932
        %vm935 = vcmp.eq.s32.totalorder %v337, 2
        %v936 = vsel %vm935, 1, 0
        %vm937 = vcmp.eq.s32.totalorder %v936, 1
        %v938 = vsel %vm937, %v795, 0.0
        %v939 = vsel %vm937, %v796, 0.0
        %940 = vrot.lane.b32.xlu0 %v938, 32
        %v941 = vpop.permute.xlu0 %940
        %v942 = vsel %vm590, %v941, %v938
        %943 = vrot.lane.b32.xlu0 %v939, 32
        %v944 = vpop.permute.xlu0 %943
        %v945 = vsel %vm590, %v944, %v939
        %946 = vrot.lane.b32.xlu0 %v942, 32
        %v947 = vpop.permute.xlu0 %946
        %948 = vrot.lane.b32.xlu0 %v945, 32
        %v949 = vpop.permute.xlu0 %948
        %v950 = vsel %vm590, %v947, %v938
        %v951 = vsel %vm590, %v949, %v939
        %954 = vrot.lane.b32.xlu0 %v950, 127
        %v955 = vpop.permute.xlu0 %954
        %956 = vrot.lane.b32.xlu0 %v951, 127
        %v957 = vpop.permute.xlu0 %956
        %960 = vrot.lane.b32.xlu0 %v950, 97
        %v961 = vpop.permute.xlu0 %960
        %962 = vrot.lane.b32.xlu0 %v951, 97
        %v963 = vpop.permute.xlu0 %962
        %v966 = vsel %vm606, %v955, %v961
        %v967 = vsel %vm606, %v957, %v963
        %v968 = vadd.f32 %v938, %v966
        %v969 = vadd.f32 %v939, %v967
        %970 = vrot.lane.b32.xlu0 %v968, 32
        %v971 = vpop.permute.xlu0 %970
        %v972 = vsel %vm590, %v971, %v968
        %973 = vrot.lane.b32.xlu0 %v969, 32
        %v974 = vpop.permute.xlu0 %973
        %v975 = vsel %vm590, %v974, %v969
        %976 = vrot.lane.b32.xlu0 %v972, 32
        %v977 = vpop.permute.xlu0 %976
        %978 = vrot.lane.b32.xlu0 %v975, 32
        %v979 = vpop.permute.xlu0 %978
        %v980 = vsel %vm590, %v977, %v968
        %v981 = vsel %vm590, %v979, %v969
        %984 = vrot.lane.b32.xlu0 %v980, 126
        %v985 = vpop.permute.xlu0 %984
        %986 = vrot.lane.b32.xlu0 %v981, 126
        %v987 = vpop.permute.xlu0 %986
        %990 = vrot.lane.b32.xlu0 %v980, 98
        %v991 = vpop.permute.xlu0 %990
        %992 = vrot.lane.b32.xlu0 %v981, 98
        %v993 = vpop.permute.xlu0 %992
        %v996 = vsel %vm640, %v985, %v991
        %v997 = vsel %vm640, %v987, %v993
        %v998 = vadd.f32 %v968, %v996
        %v999 = vadd.f32 %v969, %v997
        %v1000 = vmul.f32 %v998, %v504
        %v1001 = vmul.f32 %v999, %v503
        %v1002 = vadd.f32 %v933, %v1000
        %v1003 = vadd.f32 %v934, %v1001
        %vm1004 = vcmp.eq.s32.totalorder %v337, 3
        %v1005 = vsel %vm1004, 1, 0
        %vm1006 = vcmp.eq.s32.totalorder %v1005, 1
        %v1007 = vsel %vm1006, %v795, 0.0
        %v1008 = vsel %vm1006, %v796, 0.0
        %1009 = vrot.lane.b32.xlu0 %v1007, 32
        %v1010 = vpop.permute.xlu0 %1009
        %v1011 = vsel %vm590, %v1010, %v1007
        %1012 = vrot.lane.b32.xlu0 %v1008, 32
        %v1013 = vpop.permute.xlu0 %1012
        %v1014 = vsel %vm590, %v1013, %v1008
        %1015 = vrot.lane.b32.xlu0 %v1011, 32
        %v1016 = vpop.permute.xlu0 %1015
        %1017 = vrot.lane.b32.xlu0 %v1014, 32
        %v1018 = vpop.permute.xlu0 %1017
        %v1019 = vsel %vm590, %v1016, %v1007
        %v1020 = vsel %vm590, %v1018, %v1008
        %1023 = vrot.lane.b32.xlu0 %v1019, 127
        %v1024 = vpop.permute.xlu0 %1023
        %1025 = vrot.lane.b32.xlu0 %v1020, 127
        %v1026 = vpop.permute.xlu0 %1025
        %1029 = vrot.lane.b32.xlu0 %v1019, 97
        %v1030 = vpop.permute.xlu0 %1029
        %1031 = vrot.lane.b32.xlu0 %v1020, 97
        %v1032 = vpop.permute.xlu0 %1031
        %v1035 = vsel %vm606, %v1024, %v1030
        %v1036 = vsel %vm606, %v1026, %v1032
        %v1037 = vadd.f32 %v1007, %v1035
        %v1038 = vadd.f32 %v1008, %v1036
        %1039 = vrot.lane.b32.xlu0 %v1037, 32
        %v1040 = vpop.permute.xlu0 %1039
        %v1041 = vsel %vm590, %v1040, %v1037
        %1042 = vrot.lane.b32.xlu0 %v1038, 32
        %v1043 = vpop.permute.xlu0 %1042
        %v1044 = vsel %vm590, %v1043, %v1038
        %1045 = vrot.lane.b32.xlu0 %v1041, 32
        %v1046 = vpop.permute.xlu0 %1045
        %1047 = vrot.lane.b32.xlu0 %v1044, 32
        %v1048 = vpop.permute.xlu0 %1047
        %v1049 = vsel %vm590, %v1046, %v1037
        %v1050 = vsel %vm590, %v1048, %v1038
        %1053 = vrot.lane.b32.xlu0 %v1049, 126
        %v1054 = vpop.permute.xlu0 %1053
        %1055 = vrot.lane.b32.xlu0 %v1050, 126
        %v1056 = vpop.permute.xlu0 %1055
        %1059 = vrot.lane.b32.xlu0 %v1049, 98
        %v1060 = vpop.permute.xlu0 %1059
        %1061 = vrot.lane.b32.xlu0 %v1050, 98
        %v1062 = vpop.permute.xlu0 %1061
        %v1065 = vsel %vm640, %v1054, %v1060
        %v1066 = vsel %vm640, %v1056, %v1062
        %v1067 = vadd.f32 %v1037, %v1065
        %v1068 = vadd.f32 %v1038, %v1066
        %v1069 = vmul.f32 %v1067, %v491
        %v1070 = vmul.f32 %v1068, %v490
        %v1071 = vadd.f32 %v1002, %v1069
        %v1072 = vadd.f32 %v1003, %v1070
        %v1073 = vadd.f32 %v425, %v1071
        %v1074 = vadd.f32 %v426, %v1072
        %vm1075 = vcmask 261120
        %v1076 = vsel %vm1075, %v1073, 0.0
        %1077 = vadd.xlane.f32.xlu0 %v1076
        %v1078 = vpop.xlane.xlu0 %1077
        %v1079 = vsel %vm1075, %v1074, 0.0
        %1080 = vadd.xlane.f32.xlu0 %v1079
        %v1081 = vpop.xlane.xlu0 %1080
        %v1082 = vrcp.pop 32.0
        %v1083 = vmul.f32 %v1078, %v1082
        %v1084 = vmul.f32 %v1081, %v1082
        %v1085 = vsub.f32 %v1073, %v1083
        %v1086 = vsub.f32 %v1074, %v1084
        %v1087 = vmul.f32 %v1085, %v1085
        %v1088 = vmul.f32 %v1086, %v1086
        %v1089 = vsel %vm1075, %v1087, 0.0
        %1090 = vadd.xlane.f32.xlu0 %v1089
        %v1091 = vpop.xlane.xlu0 %1090
        %v1092 = vsel %vm1075, %v1088, 0.0
        %1093 = vadd.xlane.f32.xlu0 %v1092
        %v1094 = vpop.xlane.xlu0 %1093
        %v1095 = vmul.f32 %v1091, %v1082
        %v1096 = vmul.f32 %v1094, %v1082
        %v1097 = vadd.f32 %v1095, 1e-05
        %v1098 = vadd.f32 %v1096, 1e-05
        %v1099 = vrsqrt.pop %v1097
        %v1100 = vrsqrt.pop %v1098
        %v1101 = vmul.f32 %v1085, %v1099
        %v1102 = vmul.f32 %v1086, %v1100
        %v1103 = vlaneseq
        %v1104 = vshrl.u32 %v1103, 7
        %v1105 = vsub.s32 0, %v1104
        %v1106 = vrot.slane %v338, %v1105
        %v1107 = vmul.f32 %v1101, %v1106
        %v1108 = vmul.f32 %v1102, %v1106
        %v1109 = vlaneseq
        %v1110 = vshrl.u32 %v1109, 7
        %v1111 = vsub.s32 1, %v1110
        %v1112 = vrot.slane %v338, %v1111
        %v1113 = vadd.f32 %v1107, %v1112
        %v1114 = vadd.f32 %v1108, %v1112
        %v1115 = vld [vmem:[%s323] sm:$0xff]
        %v1116 = vld [vmem:[%s323 + $0x8] sm:$0xff]
        %v1117 = vlaneseq
        %v1118 = vshrl.u32 %v1117, 7
        %v1119 = vsub.s32 0, %v1118
        %v1120 = vrot.slane %v1115, %v1119
        %v1121 = vmul.f32 %v1120, %v1113
        %v1122 = vmul.f32 %v1120, %v1114
        %v1123 = vrot.slane %v1113, 1
        %v1124 = vrot.slane %v1114, 1
        %v1125 = vsel %vm437, %v1123, %v1124
        %v1126 = vsel %vm437, %v1124, %v1123
        %v1127 = vlaneseq
        %v1128 = vshrl.u32 %v1127, 7
        %v1129 = vsub.s32 1, %v1128
        %v1130 = vrot.slane %v1115, %v1129
        %v1131 = vmul.f32 %v1130, %v1125
        %v1132 = vmul.f32 %v1130, %v1126
        %v1133 = vadd.f32 %v1121, %v1131
        %v1134 = vadd.f32 %v1122, %v1132
        %v1135 = vrot.slane %v1113, 2
        %v1136 = vrot.slane %v1114, 2
        %v1137 = vsel %vm450, %v1135, %v1136
        %v1138 = vsel %vm450, %v1136, %v1135
        %v1139 = vlaneseq
        %v1140 = vshrl.u32 %v1139, 7
        %v1141 = vsub.s32 2, %v1140
        %v1142 = vrot.slane %v1115, %v1141
        %v1143 = vmul.f32 %v1142, %v1137
        %v1144 = vmul.f32 %v1142, %v1138
        %v1145 = vadd.f32 %v1133, %v1143
        %v1146 = vadd.f32 %v1134, %v1144
        %v1147 = vrot.slane %v1113, 3
        %v1148 = vrot.slane %v1114, 3
        %v1149 = vsel %vm463, %v1147, %v1148
        %v1150 = vsel %vm463, %v1148, %v1147
        %v1151 = vlaneseq
        %v1152 = vshrl.u32 %v1151, 7
        %v1153 = vsub.s32 3, %v1152
        %v1154 = vrot.slane %v1115, %v1153
        %v1155 = vmul.f32 %v1154, %v1149
        %v1156 = vmul.f32 %v1154, %v1150
        %v1157 = vadd.f32 %v1145, %v1155
        %v1158 = vadd.f32 %v1146, %v1156
        %v1159 = vrot.slane %v1113, 4
        %v1160 = vrot.slane %v1114, 4
        %v1161 = vsel %vm476, %v1159, %v1160
        %v1162 = vsel %vm476, %v1160, %v1159
        %v1163 = vlaneseq
        %v1164 = vshrl.u32 %v1163, 7
        %v1165 = vsub.s32 4, %v1164
        %v1166 = vrot.slane %v1115, %v1165
        %v1167 = vmul.f32 %v1166, %v1161
        %v1168 = vmul.f32 %v1166, %v1162
        %v1169 = vadd.f32 %v1157, %v1167
        %v1170 = vadd.f32 %v1158, %v1168
        %v1171 = vrot.slane %v1113, 5
        %v1172 = vrot.slane %v1114, 5
        %v1173 = vsel %vm489, %v1171, %v1172
        %v1174 = vsel %vm489, %v1172, %v1171
        %v1175 = vlaneseq
        %v1176 = vshrl.u32 %v1175, 7
        %v1177 = vsub.s32 5, %v1176
        %v1178 = vrot.slane %v1115, %v1177
        %v1179 = vmul.f32 %v1178, %v1173
        %v1180 = vmul.f32 %v1178, %v1174
        %v1181 = vadd.f32 %v1169, %v1179
        %v1182 = vadd.f32 %v1170, %v1180
        %v1183 = vrot.slane %v1113, 6
        %v1184 = vrot.slane %v1114, 6
        %v1185 = vsel %vm502, %v1183, %v1184
        %v1186 = vsel %vm502, %v1184, %v1183
        %v1187 = vlaneseq
        %v1188 = vshrl.u32 %v1187, 7
        %v1189 = vsub.s32 6, %v1188
        %v1190 = vrot.slane %v1115, %v1189
        %v1191 = vmul.f32 %v1190, %v1185
        %v1192 = vmul.f32 %v1190, %v1186
        %v1193 = vadd.f32 %v1181, %v1191
        %v1194 = vadd.f32 %v1182, %v1192
        %v1195 = vrot.slane %v1113, 7
        %v1196 = vrot.slane %v1114, 7
        %v1197 = vsel %vm515, %v1195, %v1196
        %v1198 = vsel %vm515, %v1196, %v1195
        %v1199 = vlaneseq
        %v1200 = vshrl.u32 %v1199, 7
        %v1201 = vsub.s32 7, %v1200
        %v1202 = vrot.slane %v1115, %v1201
        %v1203 = vmul.f32 %v1202, %v1197
        %v1204 = vmul.f32 %v1202, %v1198
        %v1205 = vadd.f32 %v1193, %v1203
        %v1206 = vadd.f32 %v1194, %v1204
        %v1207 = vlaneseq
        %v1208 = vshrl.u32 %v1207, 7
        %v1209 = vsub.s32 0, %v1208
        %v1210 = vrot.slane %v1116, %v1209
        %v1211 = vmul.f32 %v1210, %v1114
        %v1212 = vmul.f32 %v1210, %v1113
        %v1213 = vadd.f32 %v1205, %v1211
        %v1214 = vadd.f32 %v1206, %v1212
        %v1215 = vlaneseq
        %v1216 = vshrl.u32 %v1215, 7
        %v1217 = vsub.s32 1, %v1216
        %v1218 = vrot.slane %v1116, %v1217
        %v1219 = vmul.f32 %v1218, %v1126
        %v1220 = vmul.f32 %v1218, %v1125
        %v1221 = vadd.f32 %v1213, %v1219
        %v1222 = vadd.f32 %v1214, %v1220
        %v1223 = vlaneseq
        %v1224 = vshrl.u32 %v1223, 7
        %v1225 = vsub.s32 2, %v1224
        %v1226 = vrot.slane %v1116, %v1225
        %v1227 = vmul.f32 %v1226, %v1138
        %v1228 = vmul.f32 %v1226, %v1137
        %v1229 = vadd.f32 %v1221, %v1227
        %v1230 = vadd.f32 %v1222, %v1228
        %v1231 = vlaneseq
        %v1232 = vshrl.u32 %v1231, 7
        %v1233 = vsub.s32 3, %v1232
        %v1234 = vrot.slane %v1116, %v1233
        %v1235 = vmul.f32 %v1234, %v1150
        %v1236 = vmul.f32 %v1234, %v1149
        %v1237 = vadd.f32 %v1229, %v1235
        %v1238 = vadd.f32 %v1230, %v1236
        %v1239 = vlaneseq
        %v1240 = vshrl.u32 %v1239, 7
        %v1241 = vsub.s32 4, %v1240
        %v1242 = vrot.slane %v1116, %v1241
        %v1243 = vmul.f32 %v1242, %v1162
        %v1244 = vmul.f32 %v1242, %v1161
        %v1245 = vadd.f32 %v1237, %v1243
        %v1246 = vadd.f32 %v1238, %v1244
        %v1247 = vlaneseq
        %v1248 = vshrl.u32 %v1247, 7
        %v1249 = vsub.s32 5, %v1248
        %v1250 = vrot.slane %v1116, %v1249
        %v1251 = vmul.f32 %v1250, %v1174
        %v1252 = vmul.f32 %v1250, %v1173
        %v1253 = vadd.f32 %v1245, %v1251
        %v1254 = vadd.f32 %v1246, %v1252
        %v1255 = vlaneseq
        %v1256 = vshrl.u32 %v1255, 7
        %v1257 = vsub.s32 6, %v1256
        %v1258 = vrot.slane %v1116, %v1257
        %v1259 = vmul.f32 %v1258, %v1186
        %v1260 = vmul.f32 %v1258, %v1185
        %v1261 = vadd.f32 %v1253, %v1259
        %v1262 = vadd.f32 %v1254, %v1260
        %v1263 = vlaneseq
        %v1264 = vshrl.u32 %v1263, 7
        %v1265 = vsub.s32 7, %v1264
        %v1266 = vrot.slane %v1116, %v1265
        %v1267 = vmul.f32 %v1266, %v1198
        %v1268 = vmul.f32 %v1266, %v1197
        %v1269 = vadd.f32 %v1261, %v1267
        %v1270 = vadd.f32 %v1262, %v1268
        %1271 = vrot.lane.b32.xlu0 %v1269, 32
        %v1272 = vpop.permute.xlu0 %1271
        %v1273 = vsel %vm590, %v1272, %v1269
        %1274 = vrot.lane.b32.xlu0 %v1270, 32
        %v1275 = vpop.permute.xlu0 %1274
        %v1276 = vsel %vm590, %v1275, %v1270
        %1277 = vrot.lane.b32.xlu0 %v1273, 32
        %v1278 = vpop.permute.xlu0 %1277
        %1279 = vrot.lane.b32.xlu0 %v1276, 32
        %v1280 = vpop.permute.xlu0 %1279
        %v1281 = vsel %vm590, %v1278, %v1269
        %v1282 = vsel %vm590, %v1280, %v1270
        %1285 = vrot.lane.b32.xlu0 %v1281, 127
        %v1286 = vpop.permute.xlu0 %1285
        %1287 = vrot.lane.b32.xlu0 %v1282, 127
        %v1288 = vpop.permute.xlu0 %1287
        %1291 = vrot.lane.b32.xlu0 %v1281, 97
        %v1292 = vpop.permute.xlu0 %1291
        %1293 = vrot.lane.b32.xlu0 %v1282, 97
        %v1294 = vpop.permute.xlu0 %1293
        %v1297 = vsel %vm606, %v1286, %v1292
        %v1298 = vsel %vm606, %v1288, %v1294
        %v1299 = vmax.f32 %v1269, %v1297
        %v1300 = vmax.f32 %v1270, %v1298
        %1301 = vrot.lane.b32.xlu0 %v1299, 32
        %v1302 = vpop.permute.xlu0 %1301
        %v1303 = vsel %vm590, %v1302, %v1299
        %1304 = vrot.lane.b32.xlu0 %v1300, 32
        %v1305 = vpop.permute.xlu0 %1304
        %v1306 = vsel %vm590, %v1305, %v1300
        %1307 = vrot.lane.b32.xlu0 %v1303, 32
        %v1308 = vpop.permute.xlu0 %1307
        %1309 = vrot.lane.b32.xlu0 %v1306, 32
        %v1310 = vpop.permute.xlu0 %1309
        %v1311 = vsel %vm590, %v1308, %v1299
        %v1312 = vsel %vm590, %v1310, %v1300
        %1315 = vrot.lane.b32.xlu0 %v1311, 126
        %v1316 = vpop.permute.xlu0 %1315
        %1317 = vrot.lane.b32.xlu0 %v1312, 126
        %v1318 = vpop.permute.xlu0 %1317
        %1321 = vrot.lane.b32.xlu0 %v1311, 98
        %v1322 = vpop.permute.xlu0 %1321
        %1323 = vrot.lane.b32.xlu0 %v1312, 98
        %v1324 = vpop.permute.xlu0 %1323
        %v1327 = vsel %vm640, %v1316, %v1322
        %v1328 = vsel %vm640, %v1318, %v1324
        %v1329 = vmax.f32 %v1299, %v1327
        %v1330 = vmax.f32 %v1300, %v1328
        %vm1331 = vcmp.ge.f32.partialorder %v1269, %v1329
        %vm1332 = vcmp.ge.f32.partialorder %v1270, %v1330
        %v1333 = vsel %vm1331, -inf, %v1269
        %v1334 = vsel %vm1332, -inf, %v1270
        %1335 = vrot.lane.b32.xlu0 %v1333, 32
        %v1336 = vpop.permute.xlu0 %1335
        %v1337 = vsel %vm590, %v1336, %v1333
        %1338 = vrot.lane.b32.xlu0 %v1334, 32
        %v1339 = vpop.permute.xlu0 %1338
        %v1340 = vsel %vm590, %v1339, %v1334
        %1341 = vrot.lane.b32.xlu0 %v1337, 32
        %v1342 = vpop.permute.xlu0 %1341
        %1343 = vrot.lane.b32.xlu0 %v1340, 32
        %v1344 = vpop.permute.xlu0 %1343
        %v1345 = vsel %vm590, %v1342, %v1333
        %v1346 = vsel %vm590, %v1344, %v1334
        %1349 = vrot.lane.b32.xlu0 %v1345, 127
        %v1350 = vpop.permute.xlu0 %1349
        %1351 = vrot.lane.b32.xlu0 %v1346, 127
        %v1352 = vpop.permute.xlu0 %1351
        %1355 = vrot.lane.b32.xlu0 %v1345, 97
        %v1356 = vpop.permute.xlu0 %1355
        %1357 = vrot.lane.b32.xlu0 %v1346, 97
        %v1358 = vpop.permute.xlu0 %1357
        %v1361 = vsel %vm606, %v1350, %v1356
        %v1362 = vsel %vm606, %v1352, %v1358
        %v1363 = vmax.f32 %v1333, %v1361
        %v1364 = vmax.f32 %v1334, %v1362
        %1365 = vrot.lane.b32.xlu0 %v1363, 32
        %v1366 = vpop.permute.xlu0 %1365
        %v1367 = vsel %vm590, %v1366, %v1363
        %1368 = vrot.lane.b32.xlu0 %v1364, 32
        %v1369 = vpop.permute.xlu0 %1368
        %v1370 = vsel %vm590, %v1369, %v1364
        %1371 = vrot.lane.b32.xlu0 %v1367, 32
        %v1372 = vpop.permute.xlu0 %1371
        %1373 = vrot.lane.b32.xlu0 %v1370, 32
        %v1374 = vpop.permute.xlu0 %1373
        %v1375 = vsel %vm590, %v1372, %v1363
        %v1376 = vsel %vm590, %v1374, %v1364
        %1379 = vrot.lane.b32.xlu0 %v1375, 126
        %v1380 = vpop.permute.xlu0 %1379
        %1381 = vrot.lane.b32.xlu0 %v1376, 126
        %v1382 = vpop.permute.xlu0 %1381
        %1385 = vrot.lane.b32.xlu0 %v1375, 98
        %v1386 = vpop.permute.xlu0 %1385
        %1387 = vrot.lane.b32.xlu0 %v1376, 98
        %v1388 = vpop.permute.xlu0 %1387
        %v1391 = vsel %vm640, %v1380, %v1386
        %v1392 = vsel %vm640, %v1382, %v1388
        %v1393 = vmax.f32 %v1363, %v1391
        %v1394 = vmax.f32 %v1364, %v1392
        %vm1395 = vcmp.ge.f32.partialorder %v1269, %v1393
        %vm1396 = vcmp.ge.f32.partialorder %v1270, %v1394
        %v1397 = vsub.f32 %v1269, %v1329
        %v1398 = vsub.f32 %v1270, %v1330
        %v1399 = vmul.f32 %v1397, 1.442695
        %v1400 = vpow.pop %v1399
        %v1401 = vmul.f32 %v1398, 1.442695
        %v1402 = vpow.pop %v1401
        %v1403 = vsel %vm1395, %v1400, 0.0
        %v1404 = vsel %vm1396, %v1402, 0.0
        %1405 = vrot.lane.b32.xlu0 %v1403, 32
        %v1406 = vpop.permute.xlu0 %1405
        %v1407 = vsel %vm590, %v1406, %v1403
        %1408 = vrot.lane.b32.xlu0 %v1404, 32
        %v1409 = vpop.permute.xlu0 %1408
        %v1410 = vsel %vm590, %v1409, %v1404
        %1411 = vrot.lane.b32.xlu0 %v1407, 32
        %v1412 = vpop.permute.xlu0 %1411
        %1413 = vrot.lane.b32.xlu0 %v1410, 32
        %v1414 = vpop.permute.xlu0 %1413
        %v1415 = vsel %vm590, %v1412, %v1403
        %v1416 = vsel %vm590, %v1414, %v1404
        %1419 = vrot.lane.b32.xlu0 %v1415, 127
        %v1420 = vpop.permute.xlu0 %1419
        %1421 = vrot.lane.b32.xlu0 %v1416, 127
        %v1422 = vpop.permute.xlu0 %1421
        %1425 = vrot.lane.b32.xlu0 %v1415, 97
        %v1426 = vpop.permute.xlu0 %1425
        %1427 = vrot.lane.b32.xlu0 %v1416, 97
        %v1428 = vpop.permute.xlu0 %1427
        %v1431 = vsel %vm606, %v1420, %v1426
        %v1432 = vsel %vm606, %v1422, %v1428
        %v1433 = vadd.f32 %v1403, %v1431
        %v1434 = vadd.f32 %v1404, %v1432
        %1435 = vrot.lane.b32.xlu0 %v1433, 32
        %v1436 = vpop.permute.xlu0 %1435
        %v1437 = vsel %vm590, %v1436, %v1433
        %1438 = vrot.lane.b32.xlu0 %v1434, 32
        %v1439 = vpop.permute.xlu0 %1438
        %v1440 = vsel %vm590, %v1439, %v1434
        %1441 = vrot.lane.b32.xlu0 %v1437, 32
        %v1442 = vpop.permute.xlu0 %1441
        %1443 = vrot.lane.b32.xlu0 %v1440, 32
        %v1444 = vpop.permute.xlu0 %1443
        %v1445 = vsel %vm590, %v1442, %v1433
        %v1446 = vsel %vm590, %v1444, %v1434
        %1449 = vrot.lane.b32.xlu0 %v1445, 126
        %v1450 = vpop.permute.xlu0 %1449
        %1451 = vrot.lane.b32.xlu0 %v1446, 126
        %v1452 = vpop.permute.xlu0 %1451
        %1455 = vrot.lane.b32.xlu0 %v1445, 98
        %v1456 = vpop.permute.xlu0 %1455
        %1457 = vrot.lane.b32.xlu0 %v1446, 98
        %v1458 = vpop.permute.xlu0 %1457
        %v1461 = vsel %vm640, %v1450, %v1456
        %v1462 = vsel %vm640, %v1452, %v1458
        %v1463 = vadd.f32 %v1433, %v1461
        %v1464 = vadd.f32 %v1434, %v1462
        %v1465 = vrcp.pop %v1463
        %v1466 = vrcp.pop %v1464
        %v1467 = vmul.f32 %v1403, %v1465
        %v1468 = vmul.f32 %v1404, %v1466
        %v1469 = vsel %vm799, %v1467, 0.0
        %v1470 = vsel %vm799, %v1468, 0.0
        %1471 = vrot.lane.b32.xlu0 %v1469, 32
        %v1472 = vpop.permute.xlu0 %1471
        %v1473 = vsel %vm590, %v1472, %v1469
        %1474 = vrot.lane.b32.xlu0 %v1470, 32
        %v1475 = vpop.permute.xlu0 %1474
        %v1476 = vsel %vm590, %v1475, %v1470
        %1477 = vrot.lane.b32.xlu0 %v1473, 32
        %v1478 = vpop.permute.xlu0 %1477
        %1479 = vrot.lane.b32.xlu0 %v1476, 32
        %v1480 = vpop.permute.xlu0 %1479
        %v1481 = vsel %vm590, %v1478, %v1469
        %v1482 = vsel %vm590, %v1480, %v1470
        %1485 = vrot.lane.b32.xlu0 %v1481, 127
        %v1486 = vpop.permute.xlu0 %1485
        %1487 = vrot.lane.b32.xlu0 %v1482, 127
        %v1488 = vpop.permute.xlu0 %1487
        %1491 = vrot.lane.b32.xlu0 %v1481, 97
        %v1492 = vpop.permute.xlu0 %1491
        %1493 = vrot.lane.b32.xlu0 %v1482, 97
        %v1494 = vpop.permute.xlu0 %1493
        %v1497 = vsel %vm606, %v1486, %v1492
        %v1498 = vsel %vm606, %v1488, %v1494
        %v1499 = vadd.f32 %v1469, %v1497
        %v1500 = vadd.f32 %v1470, %v1498
        %1501 = vrot.lane.b32.xlu0 %v1499, 32
        %v1502 = vpop.permute.xlu0 %1501
        %v1503 = vsel %vm590, %v1502, %v1499
        %1504 = vrot.lane.b32.xlu0 %v1500, 32
        %v1505 = vpop.permute.xlu0 %1504
        %v1506 = vsel %vm590, %v1505, %v1500
        %1507 = vrot.lane.b32.xlu0 %v1503, 32
        %v1508 = vpop.permute.xlu0 %1507
        %1509 = vrot.lane.b32.xlu0 %v1506, 32
        %v1510 = vpop.permute.xlu0 %1509
        %v1511 = vsel %vm590, %v1508, %v1499
        %v1512 = vsel %vm590, %v1510, %v1500
        %1515 = vrot.lane.b32.xlu0 %v1511, 126
        %v1516 = vpop.permute.xlu0 %1515
        %1517 = vrot.lane.b32.xlu0 %v1512, 126
        %v1518 = vpop.permute.xlu0 %1517
        %1521 = vrot.lane.b32.xlu0 %v1511, 98
        %v1522 = vpop.permute.xlu0 %1521
        %1523 = vrot.lane.b32.xlu0 %v1512, 98
        %v1524 = vpop.permute.xlu0 %1523
        %v1527 = vsel %vm640, %v1516, %v1522
        %v1528 = vsel %vm640, %v1518, %v1524
        %v1529 = vadd.f32 %v1499, %v1527
        %v1530 = vadd.f32 %v1500, %v1528
        %v1531 = vmul.f32 %v1529, %v1115
        %v1532 = vmul.f32 %v1530, %v1116
        %v1533 = vadd.f32 %v1531, 0.0
        %v1534 = vadd.f32 %v1532, 0.0
        %v1535 = vsel %vm868, %v1467, 0.0
        %v1536 = vsel %vm868, %v1468, 0.0
        %1537 = vrot.lane.b32.xlu0 %v1535, 32
        %v1538 = vpop.permute.xlu0 %1537
        %v1539 = vsel %vm590, %v1538, %v1535
        %1540 = vrot.lane.b32.xlu0 %v1536, 32
        %v1541 = vpop.permute.xlu0 %1540
        %v1542 = vsel %vm590, %v1541, %v1536
        %1543 = vrot.lane.b32.xlu0 %v1539, 32
        %v1544 = vpop.permute.xlu0 %1543
        %1545 = vrot.lane.b32.xlu0 %v1542, 32
        %v1546 = vpop.permute.xlu0 %1545
        %v1547 = vsel %vm590, %v1544, %v1535
        %v1548 = vsel %vm590, %v1546, %v1536
        %1551 = vrot.lane.b32.xlu0 %v1547, 127
        %v1552 = vpop.permute.xlu0 %1551
        %1553 = vrot.lane.b32.xlu0 %v1548, 127
        %v1554 = vpop.permute.xlu0 %1553
        %1557 = vrot.lane.b32.xlu0 %v1547, 97
        %v1558 = vpop.permute.xlu0 %1557
        %1559 = vrot.lane.b32.xlu0 %v1548, 97
        %v1560 = vpop.permute.xlu0 %1559
        %v1563 = vsel %vm606, %v1552, %v1558
        %v1564 = vsel %vm606, %v1554, %v1560
        %v1565 = vadd.f32 %v1535, %v1563
        %v1566 = vadd.f32 %v1536, %v1564
        %1567 = vrot.lane.b32.xlu0 %v1565, 32
        %v1568 = vpop.permute.xlu0 %1567
        %v1569 = vsel %vm590, %v1568, %v1565
        %1570 = vrot.lane.b32.xlu0 %v1566, 32
        %v1571 = vpop.permute.xlu0 %1570
        %v1572 = vsel %vm590, %v1571, %v1566
        %1573 = vrot.lane.b32.xlu0 %v1569, 32
        %v1574 = vpop.permute.xlu0 %1573
        %1575 = vrot.lane.b32.xlu0 %v1572, 32
        %v1576 = vpop.permute.xlu0 %1575
        %v1577 = vsel %vm590, %v1574, %v1565
        %v1578 = vsel %vm590, %v1576, %v1566
        %1581 = vrot.lane.b32.xlu0 %v1577, 126
        %v1582 = vpop.permute.xlu0 %1581
        %1583 = vrot.lane.b32.xlu0 %v1578, 126
        %v1584 = vpop.permute.xlu0 %1583
        %1587 = vrot.lane.b32.xlu0 %v1577, 98
        %v1588 = vpop.permute.xlu0 %1587
        %1589 = vrot.lane.b32.xlu0 %v1578, 98
        %v1590 = vpop.permute.xlu0 %1589
        %v1593 = vsel %vm640, %v1582, %v1588
        %v1594 = vsel %vm640, %v1584, %v1590
        %v1595 = vadd.f32 %v1565, %v1593
        %v1596 = vadd.f32 %v1566, %v1594
        %v1597 = vrot.slane %v1115, 7
        %v1598 = vrot.slane %v1116, 7
        %v1599 = vsel %vm515, %v1597, %v1598
        %v1600 = vsel %vm515, %v1598, %v1597
        %v1601 = vmul.f32 %v1595, %v1600
        %v1602 = vmul.f32 %v1596, %v1599
        %v1603 = vadd.f32 %v1533, %v1601
        %v1604 = vadd.f32 %v1534, %v1602
        %v1605 = vsel %vm937, %v1467, 0.0
        %v1606 = vsel %vm937, %v1468, 0.0
        %1607 = vrot.lane.b32.xlu0 %v1605, 32
        %v1608 = vpop.permute.xlu0 %1607
        %v1609 = vsel %vm590, %v1608, %v1605
        %1610 = vrot.lane.b32.xlu0 %v1606, 32
        %v1611 = vpop.permute.xlu0 %1610
        %v1612 = vsel %vm590, %v1611, %v1606
        %1613 = vrot.lane.b32.xlu0 %v1609, 32
        %v1614 = vpop.permute.xlu0 %1613
        %1615 = vrot.lane.b32.xlu0 %v1612, 32
        %v1616 = vpop.permute.xlu0 %1615
        %v1617 = vsel %vm590, %v1614, %v1605
        %v1618 = vsel %vm590, %v1616, %v1606
        %1621 = vrot.lane.b32.xlu0 %v1617, 127
        %v1622 = vpop.permute.xlu0 %1621
        %1623 = vrot.lane.b32.xlu0 %v1618, 127
        %v1624 = vpop.permute.xlu0 %1623
        %1627 = vrot.lane.b32.xlu0 %v1617, 97
        %v1628 = vpop.permute.xlu0 %1627
        %1629 = vrot.lane.b32.xlu0 %v1618, 97
        %v1630 = vpop.permute.xlu0 %1629
        %v1633 = vsel %vm606, %v1622, %v1628
        %v1634 = vsel %vm606, %v1624, %v1630
        %v1635 = vadd.f32 %v1605, %v1633
        %v1636 = vadd.f32 %v1606, %v1634
        %1637 = vrot.lane.b32.xlu0 %v1635, 32
        %v1638 = vpop.permute.xlu0 %1637
        %v1639 = vsel %vm590, %v1638, %v1635
        %1640 = vrot.lane.b32.xlu0 %v1636, 32
        %v1641 = vpop.permute.xlu0 %1640
        %v1642 = vsel %vm590, %v1641, %v1636
        %1643 = vrot.lane.b32.xlu0 %v1639, 32
        %v1644 = vpop.permute.xlu0 %1643
        %1645 = vrot.lane.b32.xlu0 %v1642, 32
        %v1646 = vpop.permute.xlu0 %1645
        %v1647 = vsel %vm590, %v1644, %v1635
        %v1648 = vsel %vm590, %v1646, %v1636
        %1651 = vrot.lane.b32.xlu0 %v1647, 126
        %v1652 = vpop.permute.xlu0 %1651
        %1653 = vrot.lane.b32.xlu0 %v1648, 126
        %v1654 = vpop.permute.xlu0 %1653
        %1657 = vrot.lane.b32.xlu0 %v1647, 98
        %v1658 = vpop.permute.xlu0 %1657
        %1659 = vrot.lane.b32.xlu0 %v1648, 98
        %v1660 = vpop.permute.xlu0 %1659
        %v1663 = vsel %vm640, %v1652, %v1658
        %v1664 = vsel %vm640, %v1654, %v1660
        %v1665 = vadd.f32 %v1635, %v1663
        %v1666 = vadd.f32 %v1636, %v1664
        %v1667 = vrot.slane %v1115, 6
        %v1668 = vrot.slane %v1116, 6
        %v1669 = vsel %vm502, %v1667, %v1668
        %v1670 = vsel %vm502, %v1668, %v1667
        %v1671 = vmul.f32 %v1665, %v1670
        %v1672 = vmul.f32 %v1666, %v1669
        %v1673 = vadd.f32 %v1603, %v1671
        %v1674 = vadd.f32 %v1604, %v1672
        %v1675 = vsel %vm1006, %v1467, 0.0
        %v1676 = vsel %vm1006, %v1468, 0.0
        %1677 = vrot.lane.b32.xlu0 %v1675, 32
        %v1678 = vpop.permute.xlu0 %1677
        %v1679 = vsel %vm590, %v1678, %v1675
        %1680 = vrot.lane.b32.xlu0 %v1676, 32
        %v1681 = vpop.permute.xlu0 %1680
        %v1682 = vsel %vm590, %v1681, %v1676
        %1683 = vrot.lane.b32.xlu0 %v1679, 32
        %v1684 = vpop.permute.xlu0 %1683
        %1685 = vrot.lane.b32.xlu0 %v1682, 32
        %v1686 = vpop.permute.xlu0 %1685
        %v1687 = vsel %vm590, %v1684, %v1675
        %v1688 = vsel %vm590, %v1686, %v1676
        %1691 = vrot.lane.b32.xlu0 %v1687, 127
        %v1692 = vpop.permute.xlu0 %1691
        %1693 = vrot.lane.b32.xlu0 %v1688, 127
        %v1694 = vpop.permute.xlu0 %1693
        %1697 = vrot.lane.b32.xlu0 %v1687, 97
        %v1698 = vpop.permute.xlu0 %1697
        %1699 = vrot.lane.b32.xlu0 %v1688, 97
        %v1700 = vpop.permute.xlu0 %1699
        %v1703 = vsel %vm606, %v1692, %v1698
        %v1704 = vsel %vm606, %v1694, %v1700
        %v1705 = vadd.f32 %v1675, %v1703
        %v1706 = vadd.f32 %v1676, %v1704
        %1707 = vrot.lane.b32.xlu0 %v1705, 32
        %v1708 = vpop.permute.xlu0 %1707
        %v1709 = vsel %vm590, %v1708, %v1705
        %1710 = vrot.lane.b32.xlu0 %v1706, 32
        %v1711 = vpop.permute.xlu0 %1710
        %v1712 = vsel %vm590, %v1711, %v1706
        %1713 = vrot.lane.b32.xlu0 %v1709, 32
        %v1714 = vpop.permute.xlu0 %1713
        %1715 = vrot.lane.b32.xlu0 %v1712, 32
        %v1716 = vpop.permute.xlu0 %1715
        %v1717 = vsel %vm590, %v1714, %v1705
        %v1718 = vsel %vm590, %v1716, %v1706
        %1721 = vrot.lane.b32.xlu0 %v1717, 126
        %v1722 = vpop.permute.xlu0 %1721
        %1723 = vrot.lane.b32.xlu0 %v1718, 126
        %v1724 = vpop.permute.xlu0 %1723
        %1727 = vrot.lane.b32.xlu0 %v1717, 98
        %v1728 = vpop.permute.xlu0 %1727
        %1729 = vrot.lane.b32.xlu0 %v1718, 98
        %v1730 = vpop.permute.xlu0 %1729
        %v1733 = vsel %vm640, %v1722, %v1728
        %v1734 = vsel %vm640, %v1724, %v1730
        %v1735 = vadd.f32 %v1705, %v1733
        %v1736 = vadd.f32 %v1706, %v1734
        %v1737 = vrot.slane %v1115, 5
        %v1738 = vrot.slane %v1116, 5
        %v1739 = vsel %vm489, %v1737, %v1738
        %v1740 = vsel %vm489, %v1738, %v1737
        %v1741 = vmul.f32 %v1735, %v1740
        %v1742 = vmul.f32 %v1736, %v1739
        %v1743 = vadd.f32 %v1673, %v1741
        %v1744 = vadd.f32 %v1674, %v1742
        %v1745 = vadd.f32 %v1113, %v1743
        %v1746 = vadd.f32 %v1114, %v1744
        %v1747 = vsel %vm1075, %v1745, 0.0
        %1748 = vadd.xlane.f32.xlu0 %v1747
        %v1749 = vpop.xlane.xlu0 %1748
        %v1750 = vsel %vm1075, %v1746, 0.0
        %1751 = vadd.xlane.f32.xlu0 %v1750
        %v1752 = vpop.xlane.xlu0 %1751
        %v1753 = vmul.f32 %v1749, %v1082
        %v1754 = vmul.f32 %v1752, %v1082
        %v1755 = vsub.f32 %v1745, %v1753
        %v1756 = vsub.f32 %v1746, %v1754
        %v1757 = vmul.f32 %v1755, %v1755
        %v1758 = vmul.f32 %v1756, %v1756
        %v1759 = vsel %vm1075, %v1757, 0.0
        %1760 = vadd.xlane.f32.xlu0 %v1759
        %v1761 = vpop.xlane.xlu0 %1760
        %v1762 = vsel %vm1075, %v1758, 0.0
        %1763 = vadd.xlane.f32.xlu0 %v1762
        %v1764 = vpop.xlane.xlu0 %1763
        %v1765 = vmul.f32 %v1761, %v1082
        %v1766 = vmul.f32 %v1764, %v1082
        %v1767 = vadd.f32 %v1765, 1e-05
        %v1768 = vadd.f32 %v1766, 1e-05
        %v1769 = vrsqrt.pop %v1767
        %v1770 = vrsqrt.pop %v1768
        %v1771 = vmul.f32 %v1755, %v1769
        %v1772 = vmul.f32 %v1756, %v1770
        %v1773 = vlaneseq
        %v1774 = vshrl.u32 %v1773, 7
        %v1775 = vsub.s32 2, %v1774
        %v1776 = vrot.slane %v338, %v1775
        %v1777 = vmul.f32 %v1771, %v1776
        %v1778 = vmul.f32 %v1772, %v1776
        %v1779 = vlaneseq
        %v1780 = vshrl.u32 %v1779, 7
        %v1781 = vsub.s32 3, %v1780
        %v1782 = vrot.slane %v338, %v1781
        %v1783 = vadd.f32 %v1777, %v1782
        %v1784 = vadd.f32 %v1778, %v1782
        %v1785 = vld [vmem:[%s3] sm:$0xff]
        %v1786 = vld [vmem:[%s3 + $0x8] sm:$0xff]
        %v1787 = vld [vmem:[%s3 + $0x10] sm:$0xff]
        %v1788 = vld [vmem:[%s3 + $0x18] sm:$0xff]
        %v1789 = vld [vmem:[%s4] sm:$0x1]
        %v1791 = vlaneseq
        %v1792 = vshrl.u32 %v1791, 7
        %v1793 = vsub.s32 0, %v1792
        %v1794 = vrot.slane %v1789, %v1793
        %v1797 = vsel %vm1075, %v1783, 0
        %v1800 = vsel %vm1075, %v1784, 0
        %1802 = vmatprep.subr.mxu0 0.0
        %1803 = vmatpush1.msra.mxu0 %v1785
        %1804 = vmatprep.subr.mxu0 0.0
        %1805 = vmatpush1.msra.mxu0 %v1786
        %1806 = vmatprep.subr.mxu0 0.0
        %1807 = vmatpush1.msra.mxu0 %v1787
        %1808 = vmatprep.subr.mxu0 0.0
        %1809 = vmatpush1.msra.mxu0 %v1788
        %1810 = vmatprep.subr.mxu0 0.0
        %1811 = vmatpush1.msra.mxu0 0.0
        %1812 = vmatprep.subr.mxu0 0.0
        %1813 = vmatpush1.msra.mxu0 0.0
        %1814 = vmatprep.subr.mxu0 0.0
        %1815 = vmatpush1.msra.mxu0 0.0
        %1816 = vmatprep.subr.mxu0 0.0
        %1817 = vmatpush1.msra.mxu0 0.0
        %1818 = vmatprep.subr.mxu0 0.0
        %1819 = vmatpush1.msra.mxu0 0.0
        %1820 = vmatprep.subr.mxu0 0.0
        %1821 = vmatpush1.msra.mxu0 0.0
        %1822 = vmatprep.subr.mxu0 0.0
        %1823 = vmatpush1.msra.mxu0 0.0
        %1824 = vmatprep.subr.mxu0 0.0
        %1825 = vmatpush1.msra.mxu0 0.0
        %1826 = vmatprep.subr.mxu0 0.0
        %1827 = vmatpush1.msra.mxu0 0.0
        %1828 = vmatprep.subr.mxu0 0.0
        %1829 = vmatpush1.msra.mxu0 0.0
        %1830 = vmatprep.subr.mxu0 0.0
        %1831 = vmatpush1.msra.mxu0 0.0
        %1832 = vmatprep.subr.mxu0 0.0
        %1833 = vmatpush1.msra.mxu0 0.0
        %1834 = vmatprep.subr.mxu0 0.0
        %1835 = vmatpush1.msra.mxu0 0.0
        %1836 = vmatprep.subr.mxu0 0.0
        %1837 = vmatpush1.msra.mxu0 0.0
        %1838 = vmatprep.subr.mxu0 0.0
        %1839 = vmatpush1.msra.mxu0 0.0
        %1840 = vmatprep.subr.mxu0 0.0
        %1841 = vmatpush1.msra.mxu0 0.0
        %1842 = vmatprep.subr.mxu0 0.0
        %1843 = vmatpush1.msra.mxu0 0.0
        %1844 = vmatprep.subr.mxu0 0.0
        %1845 = vmatpush1.msra.mxu0 0.0
        %1846 = vmatprep.subr.mxu0 0.0
        %1847 = vmatpush1.msra.mxu0 0.0
        %1848 = vmatprep.subr.mxu0 0.0
        %1849 = vmatpush1.msra.mxu0 0.0
        %1850 = vmatprep.subr.mxu0 0.0
        %1851 = vmatpush1.msra.mxu0 0.0
        %1852 = vmatprep.subr.mxu0 0.0
        %1853 = vmatpush1.msra.mxu0 0.0
        %1854 = vmatprep.subr.mxu0 0.0
        %1855 = vmatpush1.msra.mxu0 0.0
        %1856 = vmatprep.subr.mxu0 0.0
        %1857 = vmatpush1.msra.mxu0 0.0
        %1858 = vmatprep.subr.mxu0 0.0
        %1859 = vmatpush1.msra.mxu0 0.0
        %1860 = vmatprep.subr.mxu0 0.0
        %1861 = vmatpush1.msra.mxu0 0.0
        %1862 = vmatprep.subr.mxu0 0.0
        %1863 = vmatpush1.msra.mxu0 0.0
        %1864 = vmatprep.subr.mxu0 0.0
        %1865 = vmatpush1.msra.mxu0 0.0
        %1866 = vmatprep.mubr.f32.mxu0 0.0
        %1867 = vmatmul.mubr.f32.gmra.mrb[0].mxu0 %v1797
        %v1868 = vpop.f32.mrb[0].mxu0
        %v1869 = vadd.f32 %v1794, %v1868
        %v1870 = vpop.f32.mrb[0].mxu0
        %1871 = vmatprep.mubr.f32.mxu0 0.0
        %1872 = vmatmul.mubr.f32.gmra.mrb[0].mxu0 %v1800
        %v1873 = vpop.f32.mrb[0].mxu0
        %v1874 = vadd.f32 %v1794, %v1873
        %v1875 = vpop.f32.mrb[0].mxu0
        %1876 = vdwg.mxu0
        %v1877 = vmax.f32 %v1869, 0.0
        %v1878 = vmax.f32 %v1874, 0.0
        %v1879 = vld [vmem:[%s5] sm:$0xff]
        %v1880 = vld [vmem:[%s5 + $0x8] sm:$0xff]
        %v1881 = vld [vmem:[%s5 + $0x10] sm:$0xff]
        %v1882 = vld [vmem:[%s5 + $0x18] sm:$0xff]
        %v1883 = vld [vmem:[%s5 + $0x20] sm:$0xff]
        %v1884 = vld [vmem:[%s5 + $0x28] sm:$0xff]
        %v1885 = vld [vmem:[%s5 + $0x30] sm:$0xff]
        %v1886 = vld [vmem:[%s5 + $0x38] sm:$0xff]
        %v1887 = vld [vmem:[%s5 + $0x40] sm:$0xff]
        %v1888 = vld [vmem:[%s5 + $0x48] sm:$0xff]
        %v1889 = vld [vmem:[%s5 + $0x50] sm:$0xff]
        %v1890 = vld [vmem:[%s5 + $0x58] sm:$0xff]
        %v1891 = vld [vmem:[%s5 + $0x60] sm:$0xff]
        %v1892 = vld [vmem:[%s5 + $0x68] sm:$0xff]
        %v1893 = vld [vmem:[%s5 + $0x70] sm:$0xff]
        %v1894 = vld [vmem:[%s5 + $0x78] sm:$0xff]
        %v1895 = vld [vmem:[%s6] sm:$0x1]
        %v1897 = vlaneseq
        %v1898 = vshrl.u32 %v1897, 7
        %v1899 = vsub.s32 0, %v1898
        %v1900 = vrot.slane %v1895, %v1899
        %1902 = vmatprep.subr.mxu0 0.0
        %1903 = vmatpush1.msra.mxu0 %v1879
        %1904 = vmatprep.subr.mxu0 0.0
        %1905 = vmatpush1.msra.mxu0 %v1880
        %1906 = vmatprep.subr.mxu0 0.0
        %1907 = vmatpush1.msra.mxu0 %v1881
        %1908 = vmatprep.subr.mxu0 0.0
        %1909 = vmatpush1.msra.mxu0 %v1882
        %1910 = vmatprep.subr.mxu0 0.0
        %1911 = vmatpush1.msra.mxu0 %v1883
        %1912 = vmatprep.subr.mxu0 0.0
        %1913 = vmatpush1.msra.mxu0 %v1884
        %1914 = vmatprep.subr.mxu0 0.0
        %1915 = vmatpush1.msra.mxu0 %v1885
        %1916 = vmatprep.subr.mxu0 0.0
        %1917 = vmatpush1.msra.mxu0 %v1886
        %1918 = vmatprep.subr.mxu0 0.0
        %1919 = vmatpush1.msra.mxu0 %v1887
        %1920 = vmatprep.subr.mxu0 0.0
        %1921 = vmatpush1.msra.mxu0 %v1888
        %1922 = vmatprep.subr.mxu0 0.0
        %1923 = vmatpush1.msra.mxu0 %v1889
        %1924 = vmatprep.subr.mxu0 0.0
        %1925 = vmatpush1.msra.mxu0 %v1890
        %1926 = vmatprep.subr.mxu0 0.0
        %1927 = vmatpush1.msra.mxu0 %v1891
        %1928 = vmatprep.subr.mxu0 0.0
        %1929 = vmatpush1.msra.mxu0 %v1892
        %1930 = vmatprep.subr.mxu0 0.0
        %1931 = vmatpush1.msra.mxu0 %v1893
        %1932 = vmatprep.subr.mxu0 0.0
        %1933 = vmatpush1.msra.mxu0 %v1894
        %1934 = vmatprep.subr.mxu0 0.0
        %1935 = vmatpush1.msra.mxu0 0.0
        %1936 = vmatprep.subr.mxu0 0.0
        %1937 = vmatpush1.msra.mxu0 0.0
        %1938 = vmatprep.subr.mxu0 0.0
        %1939 = vmatpush1.msra.mxu0 0.0
        %1940 = vmatprep.subr.mxu0 0.0
        %1941 = vmatpush1.msra.mxu0 0.0
        %1942 = vmatprep.subr.mxu0 0.0
        %1943 = vmatpush1.msra.mxu0 0.0
        %1944 = vmatprep.subr.mxu0 0.0
        %1945 = vmatpush1.msra.mxu0 0.0
        %1946 = vmatprep.subr.mxu0 0.0
        %1947 = vmatpush1.msra.mxu0 0.0
        %1948 = vmatprep.subr.mxu0 0.0
        %1949 = vmatpush1.msra.mxu0 0.0
        %1950 = vmatprep.subr.mxu0 0.0
        %1951 = vmatpush1.msra.mxu0 0.0
        %1952 = vmatprep.subr.mxu0 0.0
        %1953 = vmatpush1.msra.mxu0 0.0
        %1954 = vmatprep.subr.mxu0 0.0
        %1955 = vmatpush1.msra.mxu0 0.0
        %1956 = vmatprep.subr.mxu0 0.0
        %1957 = vmatpush1.msra.mxu0 0.0
        %1958 = vmatprep.subr.mxu0 0.0
        %1959 = vmatpush1.msra.mxu0 0.0
        %1960 = vmatprep.subr.mxu0 0.0
        %1961 = vmatpush1.msra.mxu0 0.0
        %1962 = vmatprep.subr.mxu0 0.0
        %1963 = vmatpush1.msra.mxu0 0.0
        %1964 = vmatprep.subr.mxu0 0.0
        %1965 = vmatpush1.msra.mxu0 0.0
        %1966 = vmatprep.mubr.f32.mxu0 0.0
        %1967 = vmatmul.mubr.f32.gmra.mrb[0].mxu0 %v1877
        %v1968 = vpop.f32.mrb[0].mxu0
        %v1969 = vadd.f32 %v1900, %v1968
        %v1970 = vpop.f32.mrb[0].mxu0
        %1971 = vmatprep.mubr.f32.mxu0 0.0
        %1972 = vmatmul.mubr.f32.gmra.mrb[0].mxu0 %v1878
        %v1973 = vpop.f32.mrb[0].mxu0
        %v1974 = vadd.f32 %v1900, %v1973
        %v1975 = vpop.f32.mrb[0].mxu0
        %1976 = vdwg.mxu0
        %v1977 = vadd.f32 %v1783, %v1969
        %v1978 = vadd.f32 %v1784, %v1974
        %v1979 = vsel %vm1075, %v1977, 0.0
        %1980 = vadd.xlane.f32.xlu0 %v1979
        %v1981 = vpop.xlane.xlu0 %1980
        %v1982 = vsel %vm1075, %v1978, 0.0
        %1983 = vadd.xlane.f32.xlu0 %v1982
        %v1984 = vpop.xlane.xlu0 %1983
        %v1985 = vmul.f32 %v1981, %v1082
        %v1986 = vmul.f32 %v1984, %v1082
        %v1987 = vsub.f32 %v1977, %v1985
        %v1988 = vsub.f32 %v1978, %v1986
        %v1989 = vmul.f32 %v1987, %v1987
        %v1990 = vmul.f32 %v1988, %v1988
        %v1991 = vsel %vm1075, %v1989, 0.0
        %1992 = vadd.xlane.f32.xlu0 %v1991
        %v1993 = vpop.xlane.xlu0 %1992
        %v1994 = vsel %vm1075, %v1990, 0.0
        %1995 = vadd.xlane.f32.xlu0 %v1994
        %v1996 = vpop.xlane.xlu0 %1995
        %v1997 = vmul.f32 %v1993, %v1082
        %v1998 = vmul.f32 %v1996, %v1082
        %v1999 = vadd.f32 %v1997, 1e-05
        %v2000 = vadd.f32 %v1998, 1e-05
        %v2001 = vrsqrt.pop %v1999
        %v2002 = vrsqrt.pop %v2000
        %v2003 = vmul.f32 %v1987, %v2001
        %v2004 = vmul.f32 %v1988, %v2002
        %v2005 = vlaneseq
        %v2006 = vshrl.u32 %v2005, 7
        %v2007 = vsub.s32 4, %v2006
        %v2008 = vrot.slane %v338, %v2007
        %v2009 = vmul.f32 %v2003, %v2008
        %v2010 = vmul.f32 %v2004, %v2008
        %v2011 = vlaneseq
        %v2012 = vshrl.u32 %v2011, 7
        %v2013 = vsub.s32 5, %v2012
        %v2014 = vrot.slane %v338, %v2013
        %v2015 = vadd.f32 %v2009, %v2014
        %v2016 = vadd.f32 %v2010, %v2014
        %v2017 = vadd.f32 %v417, %v2015
        %v2018 = vadd.f32 %v422, %v2016
        %2019 = vmatprep.subr.mxu0 0.0
        %2020 = vmatpush1.msra.mxu0 %v2017
        %2021 = vmatprep.subr.mxu0 0.0
        %2022 = vmatpush1.msra.mxu0 %v2018
        %2023 = vmatprep.subr.mxu0 0.0
        %2024 = vmatpush1.msra.mxu0 0.0
        %2025 = vmatprep.subr.mxu0 0.0
        %2026 = vmatpush1.msra.mxu0 0.0
        %2027 = vmatprep.subr.mxu0 0.0
        %2028 = vmatpush1.msra.mxu0 0.0
        %2029 = vmatprep.subr.mxu0 0.0
        %2030 = vmatpush1.msra.mxu0 0.0
        %2031 = vmatprep.subr.mxu0 0.0
        %2032 = vmatpush1.msra.mxu0 0.0
        %2033 = vmatprep.subr.mxu0 0.0
        %2034 = vmatpush1.msra.mxu0 0.0
        %2035 = vmatprep.subr.mxu0 0.0
        %2036 = vmatpush1.msra.mxu0 0.0
        %2037 = vmatprep.subr.mxu0 0.0
        %2038 = vmatpush1.msra.mxu0 0.0
        %2039 = vmatprep.subr.mxu0 0.0
        %2040 = vmatpush1.msra.mxu0 0.0
        %2041 = vmatprep.subr.mxu0 0.0
        %2042 = vmatpush1.msra.mxu0 0.0
        %2043 = vmatprep.subr.mxu0 0.0
        %2044 = vmatpush1.msra.mxu0 0.0
        %2045 = vmatprep.subr.mxu0 0.0
        %2046 = vmatpush1.msra.mxu0 0.0
        %2047 = vmatprep.subr.mxu0 0.0
        %2048 = vmatpush1.msra.mxu0 0.0
        %2049 = vmatprep.subr.mxu0 0.0
        %2050 = vmatpush1.msra.mxu0 0.0
        %2051 = vmatprep.subr.mxu0 0.0
        %2052 = vmatpush1.msra.mxu0 0.0
        %2053 = vmatprep.subr.mxu0 0.0
        %2054 = vmatpush1.msra.mxu0 0.0
        %2055 = vmatprep.subr.mxu0 0.0
        %2056 = vmatpush1.msra.mxu0 0.0
        %2057 = vmatprep.subr.mxu0 0.0
        %2058 = vmatpush1.msra.mxu0 0.0
        %2059 = vmatprep.subr.mxu0 0.0
        %2060 = vmatpush1.msra.mxu0 0.0
        %2061 = vmatprep.subr.mxu0 0.0
        %2062 = vmatpush1.msra.mxu0 0.0
        %2063 = vmatprep.subr.mxu0 0.0
        %2064 = vmatpush1.msra.mxu0 0.0
        %2065 = vmatprep.subr.mxu0 0.0
        %2066 = vmatpush1.msra.mxu0 0.0
        %2067 = vmatprep.subr.mxu0 0.0
        %2068 = vmatpush1.msra.mxu0 0.0
        %2069 = vmatprep.subr.mxu0 0.0
        %2070 = vmatpush1.msra.mxu0 0.0
        %2071 = vmatprep.subr.mxu0 0.0
        %2072 = vmatpush1.msra.mxu0 0.0
        %2073 = vmatprep.subr.mxu0 0.0
        %2074 = vmatpush1.msra.mxu0 0.0
        %2075 = vmatprep.subr.mxu0 0.0
        %2076 = vmatpush1.msra.mxu0 0.0
        %2077 = vmatprep.subr.mxu0 0.0
        %2078 = vmatpush1.msra.mxu0 0.0
        %2079 = vmatprep.subr.mxu0 0.0
        %2080 = vmatpush1.msra.mxu0 0.0
        %2081 = vmatprep.subr.mxu0 0.0
        %2082 = vmatpush1.msra.mxu0 0.0
        %2083 = vmatprep.mubr.f32.mxu0 0.0
        %2084 = vmatmul.mubr.f32.gmra.mrb[0].mxu0 %v345
        %v2085 = vpop.f32.mrb[0].mxu0
        %v2086 = vadd.f32 0.0, %v2085
        %v2087 = vpop.f32.mrb[0].mxu0
        %2088 = vmatprep.mubr.f32.mxu0 0.0
        %2089 = vmatmul.mubr.f32.gmra.mrb[0].mxu0 %v348
        %v2090 = vpop.f32.mrb[0].mxu0
        %v2091 = vadd.f32 0.0, %v2090
        %v2092 = vpop.f32.mrb[0].mxu0
        %2093 = vdwg.mxu0
        %v2094 = vadd.f32 %v2015, %v2086
        %v2095 = vadd.f32 %v2016, %v2091
        %v2096 = vsel %vm1075, %v2094, 0.0
        %2097 = vadd.xlane.f32.xlu0 %v2096
        %v2098 = vpop.xlane.xlu0 %2097
        %v2099 = vsel %vm1075, %v2095, 0.0
        %2100 = vadd.xlane.f32.xlu0 %v2099
        %v2101 = vpop.xlane.xlu0 %2100
        %v2102 = vmul.f32 %v2098, %v1082
        %v2103 = vmul.f32 %v2101, %v1082
        %v2104 = vsub.f32 %v2094, %v2102
        %v2105 = vsub.f32 %v2095, %v2103
        %v2106 = vmul.f32 %v2104, %v2104
        %v2107 = vmul.f32 %v2105, %v2105
        %v2108 = vsel %vm1075, %v2106, 0.0
        %2109 = vadd.xlane.f32.xlu0 %v2108
        %v2110 = vpop.xlane.xlu0 %2109
        %v2111 = vsel %vm1075, %v2107, 0.0
        %2112 = vadd.xlane.f32.xlu0 %v2111
        %v2113 = vpop.xlane.xlu0 %2112
        %v2114 = vmul.f32 %v2110, %v1082
        %v2115 = vmul.f32 %v2113, %v1082
        %v2116 = vadd.f32 %v2114, 1e-05
        %v2117 = vadd.f32 %v2115, 1e-05
        %v2118 = vrsqrt.pop %v2116
        %v2119 = vrsqrt.pop %v2117
        %v2120 = vmul.f32 %v2104, %v2118
        %v2121 = vmul.f32 %v2105, %v2119
        %v2122 = vlaneseq
        %v2123 = vshrl.u32 %v2122, 7
        %v2124 = vsub.s32 6, %v2123
        %v2125 = vrot.slane %v338, %v2124
        %v2126 = vmul.f32 %v2120, %v2125
        %v2127 = vmul.f32 %v2121, %v2125
        %v2128 = vlaneseq
        %v2129 = vshrl.u32 %v2128, 7
        %v2130 = vsub.s32 7, %v2129
        %v2131 = vrot.slane %v338, %v2130
        %v2132 = vadd.f32 %v2126, %v2131
        %v2133 = vadd.f32 %v2127, %v2131
        %2134 = vst.msk [vmem:[%s313] sm:$0xff] %vm1075, %v2132
        %2135 = vst.msk [vmem:[%s313 + $0x8] sm:$0xff] %vm1075, %v2133
        %s2136 = sand.u32 %s208, 1
        %s2137 = scalar_lea.sflag [#allocation3], %s2136
        %s2138 = sand.u32 %s208, 1
        %s2139 = smul.addr %s2138, 16
        %s2140 = scalar_lea.vmem [#allocation2], %s2139
        // Predicated region
        $region53: #{tpu_custom_call.1} parent=51 // pred_check
          %p2141 = pneg %p218
        $region54: #{tpu_custom_call.1} parent=51 // pred_check_branch
          %2143 = sbr.rel (%p2141) target = $region56
        $region55: #{tpu_custom_call.1} parent=51 // pred_region
          %s2145 = ssub.s32 256, 256
          %2146 = vsyncadd %s2137, %s2145
          %s2147 = smul.addr %s22, 2
          %s2148 = smul.addr %s2147, 128
          %s2149 = scalar_lea.hbm %s8, %s2148
          %s2150 = sshll.u32 %s2140, 4
          %s2151 = int_to_ptr.vmem [resolvable:$true] %s2150
          %2156 = dma.vmem_to_hbm [thread:$0]  %s2151, 256, %s2149, %s2137, 128, 128, 8
        $region56: #{tpu_custom_call.1} parent=51 // pred_fallthru
          _
      $region52: #{tpu_custom_call.1} parent=5 // pred_fallthru
        _
      %p2157 = scmp.le.s32.totalorder 2, %s17
      // Predicated region
      $region57: #{tpu_custom_call.1} parent=5 // pred_check
        %p2158 = pneg %p2157
      $region58: #{tpu_custom_call.1} parent=5 // pred_check_branch
        %2160 = sbr.rel (%p2158) target = $region60
      $region59: #{tpu_custom_call.1} parent=5 // pred_region
        %s2161 = ssub.s32 %s17, 2
        // Predicated region
        $region61: #{tpu_custom_call.1} parent=59 // pred_check
          %p2162 = pneg %p224
        $region62: #{tpu_custom_call.1} parent=59 // pred_check_branch
          %2164 = sbr.rel (%p2162) target = $region64
        $region63: #{tpu_custom_call.1} parent=59 // pred_region
          %s2165 = sand.u32 %s209, 1
          %s2166 = scalar_lea.sflag [#allocation3], %s2165
          %s2167 = sand.u32 %s209, 1
          %s2168 = smul.addr %s2167, 16
          %s2169 = scalar_lea.vmem [#allocation2], %s2168
          %2170 = dma.done %s2166, 256
        $region64: #{tpu_custom_call.1} parent=59 // pred_fallthru
          _
      $region60: #{tpu_custom_call.1} parent=5 // pred_fallthru
        _
    $region6: #{tpu_custom_call.1} parent=1 // loop_footer
      %s21 = sadd.s32 1, %s17
    $region7: #{tpu_custom_call.1} parent=1 // loop_footer_branch
      %16 = sbr.rel target = $region3
    $region8: #{tpu_custom_call.1} parent=1 // loop_exit
      _
    %2171 = vsyncpa [#allocation3], 1
    %s2172 = scalar_lea.sflag [#allocation3], 1
    %2173 = vsyncpa %s2172, 1

</llo_original>
